<compile_context>
chip_gen: v6e
topology: v6e:2x2x1
jax: 0.10.0
libtpu: 0.0.40
codegen_flags: <defaults>
</compile_context>

<pallas_src>
import math
import functools

import jax
import jax.numpy as jnp
from jax.experimental import pallas as pl
from jax.experimental.pallas import tpu as pltpu

NEG_SLOPE = 0.2
ACT_SCALE = math.sqrt(2.0)


def _round_up(x, m):
    return (x + m - 1) // m * m


def styled_conv_kernel(smod_ref, demod_ref, x_ref, wtap_ref, bact_ref, out_ref,
                       acc_ref, *, TH, W, Wpad, K, c_in, c_out):
    """One grid step = one sample (b) x one row tile (t) of TH output rows.

    x_ref   : [1, Hp*Wpad, Cin]  bf16, zero-padded, flattened rows (revisited across t)
    wtap_ref: [K*K, Cin, Cout]   bf16, pre-scaled by 1/sqrt(Cin*K*K), grid-invariant
    smod_ref: [1, Cin, 1]  f32   per-sample style modulation
    demod_ref:[1, 1, Cout] f32   per-sample demodulation
    bact_ref: [1, 1, Cout] f32   FusedLeakyReLU bias
    acc_ref : [TH*Wpad, Cout] f32 VMEM scratch accumulator
    """
    t = pl.program_id(1)
    row0 = t * TH
    NROW = TH * Wpad

    smod = smod_ref[0]                                            # [Cin, 1] f32

    for dy in range(K):
        # dy shift = aligned dynamic slice on the sublane axis (start is a multiple of Wpad).
        start = pl.multiple_of((row0 + dy) * Wpad, Wpad)
        x_dy = x_ref[0, pl.ds(start, NROW), :]                    # [NROW, Cin] bf16
        for dx in range(K):
            kk = dy * K + dx
            # Per-sample modulation folded into the resident weight tap (KK*Cin*Cout mults).
            w_kk = (wtap_ref[kk] * smod).astype(jnp.bfloat16)     # [Cin, Cout]
            y = jnp.dot(x_dy, w_kk, preferred_element_type=jnp.float32)   # [NROW, Cout] f32
            if dx:
                # dx shift realized on the f32 result via XLU roll: y'[p] = y[p + dx].
                # (Wrapped rows land only in the padding columns, which are discarded below.)
                y = pltpu.roll(y, NROW - dx, axis=0)
            if kk == 0:
                acc_ref[...] = y
            else:
                acc_ref[...] += y

    # Demod + FusedLeakyReLU (bias, leaky-relu, sqrt(2)) fused on the f32 accumulator.
    yv = acc_ref[...].reshape(TH, Wpad, c_out)[:, :W, :]          # drop padding columns
    yv = yv * demod_ref[0] + bact_ref[0]
    yv = jnp.maximum(yv, NEG_SLOPE * yv) * ACT_SCALE              # leaky_relu(.,0.2)*sqrt(2)
    out_ref[...] = yv.reshape(1, TH, W, c_out)


def prepare_params(params):
    """One-time weight prep (hoisted out of the per-call path)."""
    weight = params["weight"]                               # [1, Cout, Cin, K, K] f32
    _, c_out, c_in, K, _ = weight.shape
    assert K % 2 == 1, "only odd kernel sizes (pad = K//2) are supported"
    scale = 1.0 / math.sqrt(c_in * K * K)

    w = weight[0] * scale                                   # conv scale folded in (f32)
    w_tap = jnp.transpose(w, (2, 3, 1, 0)).reshape(K * K, c_in, c_out)   # [KK, Cin, Cout]
    w_sq = jnp.transpose(jnp.sum(w * w, axis=(2, 3)))                    # [Cin, Cout] (f32!)

    style_dim = params["w_mod"].shape[1]
    w_mod = jnp.transpose(params["w_mod"]) * (1.0 / math.sqrt(style_dim))  # [S, Cin]
    b_mod = params["b_mod"].reshape(1, c_in)
    b_act = params["b_act"].reshape(1, 1, c_out)
    return dict(
        w_tap=w_tap.astype(jnp.bfloat16),     # bf16 conv taps (MXU/HBM/VMEM savings)
        w_sq=w_sq.astype(jnp.float32),        # demod path stays f32
        w_mod=w_mod.astype(jnp.float32),
        b_mod=b_mod.astype(jnp.float32),
        b_act=b_act.astype(jnp.float32),
    )


@jax.jit
def styled_conv_forward(x, style, prepped):
    """x: [B, Cin, H, W] f32, style: [B, style_dim] f32 -> [B, Cout, H, W] f32."""
    B, c_in, H, W = x.shape
    KK, _, c_out = prepped["w_tap"].shape
    K = int(round(math.sqrt(KK)))
    pad = K // 2

    # Style modulation + demodulation in the wrapper (tiny f32 matmuls, off the kernel's
    # critical path).  Demod kept in f32: 1e-8 underflows in bf16.
    s_lin = style.astype(jnp.float32) @ prepped["w_mod"] + prepped["b_mod"]    # [B, Cin]
    demod = jax.lax.rsqrt((s_lin * s_lin) @ prepped["w_sq"] + 1e-8)            # [B, Cout]
    smod = s_lin.reshape(B, c_in, 1)
    demod = demod.reshape(B, 1, c_out)

    Hp = H + 2 * pad
    Wp = W + 2 * pad
    Wpad = _round_up(Wp, 16)            # multiple of bf16 sublane packing -> aligned slices
    # TODO(synk): in an NHWC network this transpose+pad (and the output transpose) disappear.
    x_nhwc = jnp.transpose(x, (0, 2, 3, 1))
    x_pad = jnp.pad(x_nhwc, ((0, 0), (pad, pad), (pad, pad + (Wpad - Wp)), (0, 0)))
    x_flat = x_pad.astype(jnp.bfloat16).reshape(B, Hp * Wpad, c_in)

    TH = 8 if H % 8 == 0 else H         # row tile: second parallel grid axis (v7x megacore)
    NT = H // TH
    assert TH * NT == H

    kernel = functools.partial(styled_conv_kernel, TH=TH, W=W, Wpad=Wpad, K=K,
                               c_in=c_in, c_out=c_out)

    out_nhwc = pl.pallas_call(
        kernel,
        out_shape=jax.ShapeDtypeStruct((B, H, W, c_out), jnp.float32),
        grid=(B, NT),
        in_specs=[
            pl.BlockSpec((1, c_in, 1), lambda b, t: (b, 0, 0)),          # s_mod (per sample)
            pl.BlockSpec((1, 1, c_out), lambda b, t: (b, 0, 0)),         # demod (per sample)
            pl.BlockSpec((1, Hp * Wpad, c_in), lambda b, t: (b, 0, 0)),  # padded x, revisited over t
            pl.BlockSpec((KK, c_in, c_out), lambda b, t: (0, 0, 0)),     # shared bf16 conv taps
            pl.BlockSpec((1, 1, c_out), lambda b, t: (0, 0, 0)),         # FusedLeakyReLU bias
        ],
        out_specs=pl.BlockSpec((1, TH, W, c_out), lambda b, t: (b, t, 0, 0)),
        scratch_shapes=[pltpu.VMEM((TH * Wpad, c_out), jnp.float32)],    # f32 accumulator
        compiler_params=pltpu.CompilerParams(
            dimension_semantics=("parallel", "parallel"),
            vmem_limit_bytes=32 * 1024 * 1024),
    )(smod, demod, x_flat, prepped["w_tap"], prepped["b_act"])

    return jnp.transpose(out_nhwc, (0, 3, 1, 2))


def styled_conv_ref(x, style, params):
    """Pure-JAX f32 mirror of the PyTorch StyledConv forward (validation only)."""
    B, c_in, H, W = x.shape
    weight = params["weight"]                               # [1, Cout, Cin, K, K]
    _, c_out, _, K, _ = weight.shape
    scale = 1.0 / math.sqrt(c_in * K * K)

    mod_scale = 1.0 / math.sqrt(style.shape[1])
    s = style @ (params["w_mod"] * mod_scale).T + params["b_mod"]        # [B, Cin]

    w = scale * weight * s.reshape(B, 1, c_in, 1, 1)                     # [B, Cout, Cin, K, K]
    demod = jax.lax.rsqrt(jnp.sum(w * w, axis=(2, 3, 4)) + 1e-8)         # [B, Cout]
    w = (w * demod.reshape(B, c_out, 1, 1, 1)).reshape(B * c_out, c_in, K, K)

    pad = K // 2
    out = jax.lax.conv_general_dilated(
        x.reshape(1, B * c_in, H, W), w,
        window_strides=(1, 1), padding=[(pad, pad), (pad, pad)],
        dimension_numbers=("NCHW", "OIHW", "NCHW"),
        feature_group_count=B,
        precision=jax.lax.Precision.HIGHEST).reshape(B, c_out, H, W)

    out = out + params["b_act"].reshape(1, c_out, 1, 1)
    return jnp.where(out >= 0, out, NEG_SLOPE * out) * ACT_SCALE


if __name__ == "__main__":
    B, C_IN, C_OUT, K, STYLE_DIM, H, W = 2, 4, 8, 3, 8, 16, 16

    key = jax.random.PRNGKey(0)
    kw, km, kb, kx, ks = jax.random.split(key, 5)
    params = dict(
        weight=jax.random.normal(kw, (1, C_OUT, C_IN, K, K), jnp.float32),
        w_mod=jax.random.normal(km, (C_IN, STYLE_DIM), jnp.float32),
        b_mod=jnp.ones((C_IN,), jnp.float32),                       # EqualLinear bias_init=1
        b_act=0.1 * jax.random.normal(kb, (C_OUT,), jnp.float32),   # FusedLeakyReLU bias
    )
    x = jax.random.normal(kx, (B, C_IN, H, W), jnp.float32)
    style = jax.random.normal(ks, (B, STYLE_DIM), jnp.float32)

    prepped = prepare_params(params)     # hoisted: runs once, not per forward call

    out = styled_conv_forward(x, style, prepped)
    out = jax.block_until_ready(out)

    ref = styled_conv_ref(x, style, params)
    assert out.shape == (B, C_OUT, H, W)
    max_err = float(jnp.max(jnp.abs(out - ref)))
    # bf16 activations/taps vs f32 reference -> loosened tolerance (review note).
    assert bool(jnp.allclose(out, ref, rtol=5e-2, atol=5e-2)), (
        f"Pallas StyledConv output mismatch vs reference, max abs diff = {max_err}")

    print("KERNEL_OK")
</pallas_src>

<mosaic_0001>
module attributes {stable_mosaic.version = 11 : i64} {
  func.func @styled_conv_kernel(%arg0: i32, %arg1: i32, %arg2: memref<1x4x1xf32, #tpu.memory_space<vmem>>, %arg3: memref<1x1x8xf32, #tpu.memory_space<vmem>>, %arg4: memref<1x576x4xbf16, #tpu.memory_space<vmem>>, %arg5: memref<9x4x8xbf16, #tpu.memory_space<vmem>>, %arg6: memref<1x1x8xf32, #tpu.memory_space<vmem>>, %arg7: memref<1x8x16x8xf32, #tpu.memory_space<vmem>>, %arg8: memref<256x8xf32, #tpu.memory_space<vmem>>) attributes {dimension_semantics = [#tpu.dimension_semantics<parallel>, #tpu.dimension_semantics<parallel>], iteration_bounds = array<i64: 2, 2>, scalar_prefetch = 0 : i64, scratch_operands = 1 : i64, tpu.core_type = #tpu.core_type<tc>, window_params = [{transform_indices = @transform_0, window_bounds = array<i64: 1, 4, 1>}, {transform_indices = @transform_1, window_bounds = array<i64: 1, 1, 8>}, {transform_indices = @transform_2, window_bounds = array<i64: 1, 576, 4>}, {pipeline_mode = #tpu.pipeline_mode<synchronous>, transform_indices = @transform_3, window_bounds = array<i64: 9, 4, 8>}, {pipeline_mode = #tpu.pipeline_mode<synchronous>, transform_indices = @transform_4, window_bounds = array<i64: 1, 1, 8>}, {transform_indices = @transform_5, window_bounds = array<i64: 1, 8, 16, 8>}]} {
    %c8_i32 = arith.constant 8 : i32
    %0 = arith.muli %arg1, %c8_i32 : i32
    %c0 = arith.constant 0 : index
    %c0_0 = arith.constant 0 : index
    %c0_1 = arith.constant 0 : index
    %1 = vector.load %arg2[%c0, %c0_0, %c0_1] : memref<1x4x1xf32, #tpu.memory_space<vmem>>, vector<1x4x1xf32>
    %2 = vector.shape_cast %1 : vector<1x4x1xf32> to vector<4x1xf32>
    %c0_i32 = arith.constant 0 : i32
    %3 = arith.addi %0, %c0_i32 : i32
    %c32_i32 = arith.constant 32 : i32
    %4 = arith.muli %3, %c32_i32 : i32
    %5 = tpu.assume_multiple %4, 32 : i32
    %c0_2 = arith.constant 0 : index
    %6 = arith.index_cast %5 : i32 to index
    %c0_3 = arith.constant 0 : index
    %7 = vector.load %arg4[%c0_2, %6, %c0_3] : memref<1x576x4xbf16, #tpu.memory_space<vmem>>, vector<1x256x4xbf16>
    %8 = vector.shape_cast %7 : vector<1x256x4xbf16> to vector<256x4xbf16>
    %c0_4 = arith.constant 0 : index
    %c0_5 = arith.constant 0 : index
    %c0_6 = arith.constant 0 : index
    %9 = vector.load %arg5[%c0_4, %c0_5, %c0_6] : memref<9x4x8xbf16, #tpu.memory_space<vmem>>, vector<1x4x8xbf16>
    %10 = vector.shape_cast %9 : vector<1x4x8xbf16> to vector<4x8xbf16>
    %11 = arith.extf %10 : vector<4x8xbf16> to vector<4x8xf32>
    %12 = vector.broadcast %2 : vector<4x1xf32> to vector<4x8xf32>
    %13 = arith.mulf %11, %12 : vector<4x8xf32>
    %14 = arith.truncf %13 : vector<4x8xf32> to vector<4x8xbf16>
    %cst = arith.constant dense<0.000000e+00> : vector<256x8xf32>
    %15 = tpu.matmul %8, %14, %cst {dimension_numbers = #tpu.dot_dimension_numbers<[1], [0], [0], [1], [0, 0, 1, 1], [], []>} : vector<256x4xbf16>, vector<4x8xbf16>, vector<256x8xf32> -> vector<256x8xf32>
    %c0_7 = arith.constant 0 : index
    %c0_8 = arith.constant 0 : index
    %16 = vector.load %arg8[%c0_7, %c0_8] : memref<256x8xf32, #tpu.memory_space<vmem>>, vector<256x8xf32>
    tpu.vector_store %arg8[%c0_7, %c0_8], %15 {strides = array<i32>} : memref<256x8xf32, #tpu.memory_space<vmem>>, vector<256x8xf32>,
    %c1 = arith.constant 1 : index
    %c0_9 = arith.constant 0 : index
    %c0_10 = arith.constant 0 : index
    %17 = vector.load %arg5[%c1, %c0_9, %c0_10] : memref<9x4x8xbf16, #tpu.memory_space<vmem>>, vector<1x4x8xbf16>
    %18 = vector.shape_cast %17 : vector<1x4x8xbf16> to vector<4x8xbf16>
    %19 = arith.extf %18 : vector<4x8xbf16> to vector<4x8xf32>
    %20 = vector.broadcast %2 : vector<4x1xf32> to vector<4x8xf32>
    %21 = arith.mulf %19, %20 : vector<4x8xf32>
    %22 = arith.truncf %21 : vector<4x8xf32> to vector<4x8xbf16>
    %cst_11 = arith.constant dense<0.000000e+00> : vector<256x8xf32>
    %23 = tpu.matmul %8, %22, %cst_11 {dimension_numbers = #tpu.dot_dimension_numbers<[1], [0], [0], [1], [0, 0, 1, 1], [], []>} : vector<256x4xbf16>, vector<4x8xbf16>, vector<256x8xf32> -> vector<256x8xf32>
    %c255_i32 = arith.constant 255 : i32
    %24 = tpu.dynamic_rotate %23 by %c255_i32 dim 0 : vector<256x8xf32>, i32 -> vector<256x8xf32>
    %c0_12 = arith.constant 0 : index
    %c0_13 = arith.constant 0 : index
    %25 = vector.load %arg8[%c0_12, %c0_13] : memref<256x8xf32, #tpu.memory_space<vmem>>, vector<256x8xf32>
    %26 = arith.addf %25, %24 : vector<256x8xf32>
    %c0_14 = arith.constant 0 : index
    %c0_15 = arith.constant 0 : index
    %27 = vector.load %arg8[%c0_14, %c0_15] : memref<256x8xf32, #tpu.memory_space<vmem>>, vector<256x8xf32>
    tpu.vector_store %arg8[%c0_14, %c0_15], %26 {strides = array<i32>} : memref<256x8xf32, #tpu.memory_space<vmem>>, vector<256x8xf32>,
    %c2 = arith.constant 2 : index
    %c0_16 = arith.constant 0 : index
    %c0_17 = arith.constant 0 : index
    %28 = vector.load %arg5[%c2, %c0_16, %c0_17] : memref<9x4x8xbf16, #tpu.memory_space<vmem>>, vector<1x4x8xbf16>
    %29 = vector.shape_cast %28 : vector<1x4x8xbf16> to vector<4x8xbf16>
    %30 = arith.extf %29 : vector<4x8xbf16> to vector<4x8xf32>
    %31 = vector.broadcast %2 : vector<4x1xf32> to vector<4x8xf32>
    %32 = arith.mulf %30, %31 : vector<4x8xf32>
    %33 = arith.truncf %32 : vector<4x8xf32> to vector<4x8xbf16>
    %cst_18 = arith.constant dense<0.000000e+00> : vector<256x8xf32>
    %34 = tpu.matmul %8, %33, %cst_18 {dimension_numbers = #tpu.dot_dimension_numbers<[1], [0], [0], [1], [0, 0, 1, 1], [], []>} : vector<256x4xbf16>, vector<4x8xbf16>, vector<256x8xf32> -> vector<256x8xf32>
    %c254_i32 = arith.constant 254 : i32
    %35 = tpu.dynamic_rotate %34 by %c254_i32 dim 0 : vector<256x8xf32>, i32 -> vector<256x8xf32>
    %c0_19 = arith.constant 0 : index
    %c0_20 = arith.constant 0 : index
    %36 = vector.load %arg8[%c0_19, %c0_20] : memref<256x8xf32, #tpu.memory_space<vmem>>, vector<256x8xf32>
    %37 = arith.addf %36, %35 : vector<256x8xf32>
    %c0_21 = arith.constant 0 : index
    %c0_22 = arith.constant 0 : index
    %38 = vector.load %arg8[%c0_21, %c0_22] : memref<256x8xf32, #tpu.memory_space<vmem>>, vector<256x8xf32>
    tpu.vector_store %arg8[%c0_21, %c0_22], %37 {strides = array<i32>} : memref<256x8xf32, #tpu.memory_space<vmem>>, vector<256x8xf32>,
    %c1_i32 = arith.constant 1 : i32
    %39 = arith.addi %0, %c1_i32 : i32
    %c32_i32_23 = arith.constant 32 : i32
    %40 = arith.muli %39, %c32_i32_23 : i32
    %41 = tpu.assume_multiple %40, 32 : i32
    %c0_24 = arith.constant 0 : index
    %42 = arith.index_cast %41 : i32 to index
    %c0_25 = arith.constant 0 : index
    %43 = vector.load %arg4[%c0_24, %42, %c0_25] : memref<1x576x4xbf16, #tpu.memory_space<vmem>>, vector<1x256x4xbf16>
    %44 = vector.shape_cast %43 : vector<1x256x4xbf16> to vector<256x4xbf16>
    %c3 = arith.constant 3 : index
    %c0_26 = arith.constant 0 : index
    %c0_27 = arith.constant 0 : index
    %45 = vector.load %arg5[%c3, %c0_26, %c0_27] : memref<9x4x8xbf16, #tpu.memory_space<vmem>>, vector<1x4x8xbf16>
    %46 = vector.shape_cast %45 : vector<1x4x8xbf16> to vector<4x8xbf16>
    %47 = arith.extf %46 : vector<4x8xbf16> to vector<4x8xf32>
    %48 = vector.broadcast %2 : vector<4x1xf32> to vector<4x8xf32>
    %49 = arith.mulf %47, %48 : vector<4x8xf32>
    %50 = arith.truncf %49 : vector<4x8xf32> to vector<4x8xbf16>
    %cst_28 = arith.constant dense<0.000000e+00> : vector<256x8xf32>
    %51 = tpu.matmul %44, %50, %cst_28 {dimension_numbers = #tpu.dot_dimension_numbers<[1], [0], [0], [1], [0, 0, 1, 1], [], []>} : vector<256x4xbf16>, vector<4x8xbf16>, vector<256x8xf32> -> vector<256x8xf32>
    %c0_29 = arith.constant 0 : index
    %c0_30 = arith.constant 0 : index
    %52 = vector.load %arg8[%c0_29, %c0_30] : memref<256x8xf32, #tpu.memory_space<vmem>>, vector<256x8xf32>
    %53 = arith.addf %52, %51 : vector<256x8xf32>
    %c0_31 = arith.constant 0 : index
    %c0_32 = arith.constant 0 : index
    %54 = vector.load %arg8[%c0_31, %c0_32] : memref<256x8xf32, #tpu.memory_space<vmem>>, vector<256x8xf32>
    tpu.vector_store %arg8[%c0_31, %c0_32], %53 {strides = array<i32>} : memref<256x8xf32, #tpu.memory_space<vmem>>, vector<256x8xf32>,
    %c4 = arith.constant 4 : index
    %c0_33 = arith.constant 0 : index
    %c0_34 = arith.constant 0 : index
    %55 = vector.load %arg5[%c4, %c0_33, %c0_34] : memref<9x4x8xbf16, #tpu.memory_space<vmem>>, vector<1x4x8xbf16>
    %56 = vector.shape_cast %55 : vector<1x4x8xbf16> to vector<4x8xbf16>
    %57 = arith.extf %56 : vector<4x8xbf16> to vector<4x8xf32>
    %58 = vector.broadcast %2 : vector<4x1xf32> to vector<4x8xf32>
    %59 = arith.mulf %57, %58 : vector<4x8xf32>
    %60 = arith.truncf %59 : vector<4x8xf32> to vector<4x8xbf16>
    %cst_35 = arith.constant dense<0.000000e+00> : vector<256x8xf32>
    %61 = tpu.matmul %44, %60, %cst_35 {dimension_numbers = #tpu.dot_dimension_numbers<[1], [0], [0], [1], [0, 0, 1, 1], [], []>} : vector<256x4xbf16>, vector<4x8xbf16>, vector<256x8xf32> -> vector<256x8xf32>
    %c255_i32_36 = arith.constant 255 : i32
    %62 = tpu.dynamic_rotate %61 by %c255_i32_36 dim 0 : vector<256x8xf32>, i32 -> vector<256x8xf32>
    %c0_37 = arith.constant 0 : index
    %c0_38 = arith.constant 0 : index
    %63 = vector.load %arg8[%c0_37, %c0_38] : memref<256x8xf32, #tpu.memory_space<vmem>>, vector<256x8xf32>
    %64 = arith.addf %63, %62 : vector<256x8xf32>
    %c0_39 = arith.constant 0 : index
    %c0_40 = arith.constant 0 : index
    %65 = vector.load %arg8[%c0_39, %c0_40] : memref<256x8xf32, #tpu.memory_space<vmem>>, vector<256x8xf32>
    tpu.vector_store %arg8[%c0_39, %c0_40], %64 {strides = array<i32>} : memref<256x8xf32, #tpu.memory_space<vmem>>, vector<256x8xf32>,
    %c5 = arith.constant 5 : index
    %c0_41 = arith.constant 0 : index
    %c0_42 = arith.constant 0 : index
    %66 = vector.load %arg5[%c5, %c0_41, %c0_42] : memref<9x4x8xbf16, #tpu.memory_space<vmem>>, vector<1x4x8xbf16>
    %67 = vector.shape_cast %66 : vector<1x4x8xbf16> to vector<4x8xbf16>
    %68 = arith.extf %67 : vector<4x8xbf16> to vector<4x8xf32>
    %69 = vector.broadcast %2 : vector<4x1xf32> to vector<4x8xf32>
    %70 = arith.mulf %68, %69 : vector<4x8xf32>
    %71 = arith.truncf %70 : vector<4x8xf32> to vector<4x8xbf16>
    %cst_43 = arith.constant dense<0.000000e+00> : vector<256x8xf32>
    %72 = tpu.matmul %44, %71, %cst_43 {dimension_numbers = #tpu.dot_dimension_numbers<[1], [0], [0], [1], [0, 0, 1, 1], [], []>} : vector<256x4xbf16>, vector<4x8xbf16>, vector<256x8xf32> -> vector<256x8xf32>
    %c254_i32_44 = arith.constant 254 : i32
    %73 = tpu.dynamic_rotate %72 by %c254_i32_44 dim 0 : vector<256x8xf32>, i32 -> vector<256x8xf32>
    %c0_45 = arith.constant 0 : index
    %c0_46 = arith.constant 0 : index
    %74 = vector.load %arg8[%c0_45, %c0_46] : memref<256x8xf32, #tpu.memory_space<vmem>>, vector<256x8xf32>
    %75 = arith.addf %74, %73 : vector<256x8xf32>
    %c0_47 = arith.constant 0 : index
    %c0_48 = arith.constant 0 : index
    %76 = vector.load %arg8[%c0_47, %c0_48] : memref<256x8xf32, #tpu.memory_space<vmem>>, vector<256x8xf32>
    tpu.vector_store %arg8[%c0_47, %c0_48], %75 {strides = array<i32>} : memref<256x8xf32, #tpu.memory_space<vmem>>, vector<256x8xf32>,
    %c2_i32 = arith.constant 2 : i32
    %77 = arith.addi %0, %c2_i32 : i32
    %c32_i32_49 = arith.constant 32 : i32
    %78 = arith.muli %77, %c32_i32_49 : i32
    %79 = tpu.assume_multiple %78, 32 : i32
    %c0_50 = arith.constant 0 : index
    %80 = arith.index_cast %79 : i32 to index
    %c0_51 = arith.constant 0 : index
    %81 = vector.load %arg4[%c0_50, %80, %c0_51] : memref<1x576x4xbf16, #tpu.memory_space<vmem>>, vector<1x256x4xbf16>
    %82 = vector.shape_cast %81 : vector<1x256x4xbf16> to vector<256x4xbf16>
    %c6 = arith.constant 6 : index
    %c0_52 = arith.constant 0 : index
    %c0_53 = arith.constant 0 : index
    %83 = vector.load %arg5[%c6, %c0_52, %c0_53] : memref<9x4x8xbf16, #tpu.memory_space<vmem>>, vector<1x4x8xbf16>
    %84 = vector.shape_cast %83 : vector<1x4x8xbf16> to vector<4x8xbf16>
    %85 = arith.extf %84 : vector<4x8xbf16> to vector<4x8xf32>
    %86 = vector.broadcast %2 : vector<4x1xf32> to vector<4x8xf32>
    %87 = arith.mulf %85, %86 : vector<4x8xf32>
    %88 = arith.truncf %87 : vector<4x8xf32> to vector<4x8xbf16>
    %cst_54 = arith.constant dense<0.000000e+00> : vector<256x8xf32>
    %89 = tpu.matmul %82, %88, %cst_54 {dimension_numbers = #tpu.dot_dimension_numbers<[1], [0], [0], [1], [0, 0, 1, 1], [], []>} : vector<256x4xbf16>, vector<4x8xbf16>, vector<256x8xf32> -> vector<256x8xf32>
    %c0_55 = arith.constant 0 : index
    %c0_56 = arith.constant 0 : index
    %90 = vector.load %arg8[%c0_55, %c0_56] : memref<256x8xf32, #tpu.memory_space<vmem>>, vector<256x8xf32>
    %91 = arith.addf %90, %89 : vector<256x8xf32>
    %c0_57 = arith.constant 0 : index
    %c0_58 = arith.constant 0 : index
    %92 = vector.load %arg8[%c0_57, %c0_58] : memref<256x8xf32, #tpu.memory_space<vmem>>, vector<256x8xf32>
    tpu.vector_store %arg8[%c0_57, %c0_58], %91 {strides = array<i32>} : memref<256x8xf32, #tpu.memory_space<vmem>>, vector<256x8xf32>,
    %c7 = arith.constant 7 : index
    %c0_59 = arith.constant 0 : index
    %c0_60 = arith.constant 0 : index
    %93 = vector.load %arg5[%c7, %c0_59, %c0_60] : memref<9x4x8xbf16, #tpu.memory_space<vmem>>, vector<1x4x8xbf16>
    %94 = vector.shape_cast %93 : vector<1x4x8xbf16> to vector<4x8xbf16>
    %95 = arith.extf %94 : vector<4x8xbf16> to vector<4x8xf32>
    %96 = vector.broadcast %2 : vector<4x1xf32> to vector<4x8xf32>
    %97 = arith.mulf %95, %96 : vector<4x8xf32>
    %98 = arith.truncf %97 : vector<4x8xf32> to vector<4x8xbf16>
    %cst_61 = arith.constant dense<0.000000e+00> : vector<256x8xf32>
    %99 = tpu.matmul %82, %98, %cst_61 {dimension_numbers = #tpu.dot_dimension_numbers<[1], [0], [0], [1], [0, 0, 1, 1], [], []>} : vector<256x4xbf16>, vector<4x8xbf16>, vector<256x8xf32> -> vector<256x8xf32>
    %c255_i32_62 = arith.constant 255 : i32
    %100 = tpu.dynamic_rotate %99 by %c255_i32_62 dim 0 : vector<256x8xf32>, i32 -> vector<256x8xf32>
    %c0_63 = arith.constant 0 : index
    %c0_64 = arith.constant 0 : index
    %101 = vector.load %arg8[%c0_63, %c0_64] : memref<256x8xf32, #tpu.memory_space<vmem>>, vector<256x8xf32>
    %102 = arith.addf %101, %100 : vector<256x8xf32>
    %c0_65 = arith.constant 0 : index
    %c0_66 = arith.constant 0 : index
    %103 = vector.load %arg8[%c0_65, %c0_66] : memref<256x8xf32, #tpu.memory_space<vmem>>, vector<256x8xf32>
    tpu.vector_store %arg8[%c0_65, %c0_66], %102 {strides = array<i32>} : memref<256x8xf32, #tpu.memory_space<vmem>>, vector<256x8xf32>,
    %c8 = arith.constant 8 : index
    %c0_67 = arith.constant 0 : index
    %c0_68 = arith.constant 0 : index
    %104 = vector.load %arg5[%c8, %c0_67, %c0_68] : memref<9x4x8xbf16, #tpu.memory_space<vmem>>, vector<1x4x8xbf16>
    %105 = vector.shape_cast %104 : vector<1x4x8xbf16> to vector<4x8xbf16>
    %106 = arith.extf %105 : vector<4x8xbf16> to vector<4x8xf32>
    %107 = vector.broadcast %2 : vector<4x1xf32> to vector<4x8xf32>
    %108 = arith.mulf %106, %107 : vector<4x8xf32>
    %109 = arith.truncf %108 : vector<4x8xf32> to vector<4x8xbf16>
    %cst_69 = arith.constant dense<0.000000e+00> : vector<256x8xf32>
    %110 = tpu.matmul %82, %109, %cst_69 {dimension_numbers = #tpu.dot_dimension_numbers<[1], [0], [0], [1], [0, 0, 1, 1], [], []>} : vector<256x4xbf16>, vector<4x8xbf16>, vector<256x8xf32> -> vector<256x8xf32>
    %c254_i32_70 = arith.constant 254 : i32
    %111 = tpu.dynamic_rotate %110 by %c254_i32_70 dim 0 : vector<256x8xf32>, i32 -> vector<256x8xf32>
    %c0_71 = arith.constant 0 : index
    %c0_72 = arith.constant 0 : index
    %112 = vector.load %arg8[%c0_71, %c0_72] : memref<256x8xf32, #tpu.memory_space<vmem>>, vector<256x8xf32>
    %113 = arith.addf %112, %111 : vector<256x8xf32>
    %c0_73 = arith.constant 0 : index
    %c0_74 = arith.constant 0 : index
    %114 = vector.load %arg8[%c0_73, %c0_74] : memref<256x8xf32, #tpu.memory_space<vmem>>, vector<256x8xf32>
    tpu.vector_store %arg8[%c0_73, %c0_74], %113 {strides = array<i32>} : memref<256x8xf32, #tpu.memory_space<vmem>>, vector<256x8xf32>,
    %c0_75 = arith.constant 0 : index
    %c0_76 = arith.constant 0 : index
    %115 = vector.load %arg8[%c0_75, %c0_76] : memref<256x8xf32, #tpu.memory_space<vmem>>, vector<256x8xf32>
    %116 = vector.shape_cast %115 : vector<256x8xf32> to vector<8x32x8xf32>
    %117 = vector.extract_strided_slice %116 {offsets = [0, 0, 0], sizes = [8, 16, 8], strides = [1, 1, 1]} : vector<8x32x8xf32> to vector<8x16x8xf32>
    %c0_77 = arith.constant 0 : index
    %c0_78 = arith.constant 0 : index
    %c0_79 = arith.constant 0 : index
    %118 = vector.load %arg3[%c0_77, %c0_78, %c0_79] : memref<1x1x8xf32, #tpu.memory_space<vmem>>, vector<1x1x8xf32>
    %119 = vector.shape_cast %118 : vector<1x1x8xf32> to vector<1x8xf32>
    %120 = vector.shape_cast %119 : vector<1x8xf32> to vector<1x1x8xf32>
    %121 = vector.broadcast %120 : vector<1x1x8xf32> to vector<8x16x8xf32>
    %122 = arith.mulf %117, %121 : vector<8x16x8xf32>
    %c0_80 = arith.constant 0 : index
    %c0_81 = arith.constant 0 : index
    %c0_82 = arith.constant 0 : index
    %123 = vector.load %arg6[%c0_80, %c0_81, %c0_82] : memref<1x1x8xf32, #tpu.memory_space<vmem>>, vector<1x1x8xf32>
    %124 = vector.shape_cast %123 : vector<1x1x8xf32> to vector<1x8xf32>
    %125 = vector.shape_cast %124 : vector<1x8xf32> to vector<1x1x8xf32>
    %126 = vector.broadcast %125 : vector<1x1x8xf32> to vector<8x16x8xf32>
    %127 = arith.addf %122, %126 : vector<8x16x8xf32>
    %cst_83 = arith.constant 2.000000e-01 : f32
    %128 = vector.broadcast %cst_83 : f32 to vector<8x16x8xf32>
    %129 = arith.mulf %128, %127 : vector<8x16x8xf32>
    %130 = arith.maximumf %127, %129 : vector<8x16x8xf32>
    %cst_84 = arith.constant 1.41421354 : f32
    %131 = vector.broadcast %cst_84 : f32 to vector<8x16x8xf32>
    %132 = arith.mulf %130, %131 : vector<8x16x8xf32>
    %133 = vector.shape_cast %132 : vector<8x16x8xf32> to vector<1x8x16x8xf32>
    %c0_85 = arith.constant 0 : index
    %c0_86 = arith.constant 0 : index
    %c0_87 = arith.constant 0 : index
    %c0_88 = arith.constant 0 : index
    %134 = vector.load %arg7[%c0_85, %c0_86, %c0_87, %c0_88] : memref<1x8x16x8xf32, #tpu.memory_space<vmem>>, vector<1x8x16x8xf32>
    tpu.vector_store %arg7[%c0_85, %c0_86, %c0_87, %c0_88], %133 {strides = array<i32>} : memref<1x8x16x8xf32, #tpu.memory_space<vmem>>, vector<1x8x16x8xf32>,
    return
  }
  func.func @transform_0(%arg0: i32, %arg1: i32) -> (i32, i32, i32) {
    %c0_i32 = arith.constant 0 : i32
    %c0_i32_0 = arith.constant 0 : i32
    %c0_i32_1 = arith.constant 0 : i32
    return %arg0, %c0_i32, %c0_i32_0 : i32, i32, i32
  }
  func.func @transform_1(%arg0: i32, %arg1: i32) -> (i32, i32, i32) {
    %c0_i32 = arith.constant 0 : i32
    %c0_i32_0 = arith.constant 0 : i32
    %c0_i32_1 = arith.constant 0 : i32
    return %arg0, %c0_i32, %c0_i32_0 : i32, i32, i32
  }
  func.func @transform_2(%arg0: i32, %arg1: i32) -> (i32, i32, i32) {
    %c0_i32 = arith.constant 0 : i32
    %c0_i32_0 = arith.constant 0 : i32
    %c0_i32_1 = arith.constant 0 : i32
    return %arg0, %c0_i32, %c0_i32_0 : i32, i32, i32
  }
  func.func @transform_3(%arg0: i32, %arg1: i32) -> (i32, i32, i32) {
    %c0_i32 = arith.constant 0 : i32
    %c0_i32_0 = arith.constant 0 : i32
    %c0_i32_1 = arith.constant 0 : i32
    %c0_i32_2 = arith.constant 0 : i32
    return %c0_i32, %c0_i32_0, %c0_i32_1 : i32, i32, i32
  }
  func.func @transform_4(%arg0: i32, %arg1: i32) -> (i32, i32, i32) {
    %c0_i32 = arith.constant 0 : i32
    %c0_i32_0 = arith.constant 0 : i32
    %c0_i32_1 = arith.constant 0 : i32
    %c0_i32_2 = arith.constant 0 : i32
    return %c0_i32, %c0_i32_0, %c0_i32_1 : i32, i32, i32
  }
  func.func @transform_5(%arg0: i32, %arg1: i32) -> (i32, i32, i32, i32) {
    %c0_i32 = arith.constant 0 : i32
    %c0_i32_0 = arith.constant 0 : i32
    %c0_i32_1 = arith.constant 0 : i32
    return %arg0, %arg1, %c0_i32, %c0_i32_0 : i32, i32, i32, i32
  }
}

</mosaic_0001>

<llo_original>
// kernel: styled_conv_forward.1
$region0: #{styled_conv_forward.1}
  #allocation0 [shape = 'u32[]', space=smem, size = 0x4, offset = 0x4, fixed_abs, tag = 'smem constant byte address 0x4 - core index']
  #allocation1 [shape = 'u32[144,128]{1,0:T(1,128)}', space=vmem, size = 0x12000, scoped, tag = 'internal scratch']
  #allocation2 [shape = 'f32[256,8]{1,0:T(8,128)}', space=vmem, size = 0x20000, scoped, tag = 'scratch operand']
  %s0 = inlined_call_operand.vmem [shape: f32[2,4,1], index: 0, kind: input, shape index: {}]
  %s1 = inlined_call_operand.vmem [shape: f32[2,1,8], index: 1, kind: input, shape index: {}]
  %s2 = inlined_call_operand.vmem [shape: bf16[2,576,4], index: 2, kind: input, shape index: {}]
  %s3 = inlined_call_operand.vmem [shape: bf16[9,4,8], index: 3, kind: input, shape index: {}]
  %s4 = inlined_call_operand.vmem [shape: f32[1,1,8], index: 4, kind: input, shape index: {}]
  %s5 = inlined_call_operand.vmem [shape: f32[2,16,16,8], index: 5, kind: output, shape index: {}]
  %s6 = sld [smem:[#allocation0]]
  $region53: #{styled_conv_forward.1} parent=0
    _
  %s8 = ssub.s32 1, %s6
  %s9 = scalar_select 0, %s8, %s6
  loop: start=0, step=1, limit=6
  $region2: #{styled_conv_forward.1} parent=0 // loop_pre_header
    _
  $region3: #{styled_conv_forward.1} parent=0 // loop_header
    %s11 = sphi 0, %s15
    %p12 = scmp.ge.s32.totalorder %s11, 6
    %s18 = sphi 0, %s30
    %s19 = sphi 0, %s26
    %s20 = sphi 0, %s18
    %s21 = sphi 0, %s19
    %s22 = sphi 0, %s20
    %s23 = sphi 0, %s21
    %s33 = sphi 0, %s35
    %s36 = sphi 0, %s33
    %s37 = sphi 0, %s36
    %s53 = sphi 0, %s37
    %s59 = sphi 0, %s61
    %s62 = sphi 0, %s59
    %s63 = sphi 0, %s62
    %s79 = sphi 0, %s63
    %s85 = sphi 0, %s87
    %s88 = sphi 0, %s85
    %s89 = sphi 0, %s88
    %s105 = sphi 0, %s89
    %s109 = sphi 0, %s109
    %s111 = sphi 0, %s109
    %s112 = sphi 0, %s111
    %s126 = sphi 0, %s112
    %s130 = sphi 0, %s130
    %s132 = sphi 0, %s130
    %s133 = sphi 0, %s132
    %s147 = sphi 0, %s133
    %s155 = sphi 0, %s157
    %s158 = sphi 0, %s155
    %s159 = sphi 0, %s158
    %s175 = sphi 0, %s159
  $region4: #{styled_conv_forward.1} parent=0 // loop_header_branch
    %14 = sbr.rel (%p12) target = $region8
  $region5: #{styled_conv_forward.1} parent=0 // loop_body
    %s16 = ssub.s32 %s11, 1
    %s17 = ssub.s32 %s11, 2
    %s24 = sadd.s32 1, %s19
    %p25 = scmp.ge.s32.totalorder %s24, 2
    %s26 = scalar_select %p25, 0, %s24
    %s27 = sadd.s32 1, %s18
    %s28 = scalar_select %p25, %s27, %s18
    %p29 = scmp.ge.s32.totalorder %s28, 2
    %s30 = scalar_select %p29, 0, %s28
    %s31 = ssub.s32 %s18, %s30
    %p32 = scmp.eq.s32.totalorder %s31, 0
    %s34 = sadd.s32 %s33, 1
    %s35 = scalar_select %p32, %s33, %s34
    %p38 = pneg %p32
    %p39 = scmp.eq.s32.totalorder %s11, 3
    %p40 = por %p38, %p39
    %p41 = scmp.ne.s32.totalorder %s33, %s36
    %p42 = scmp.eq.s32.totalorder %s11, 0
    %p43 = por %p41, %p42
    %p44 = scmp.ne.s32.totalorder %s33, %s36
    %p45 = scmp.eq.s32.totalorder %s16, 3
    %p46 = por %p44, %p45
    %p47 = scmp.ne.s32.totalorder %s36, %s37
    %p48 = scmp.eq.s32.totalorder %s16, 0
    %p49 = por %p47, %p48
    %p50 = scmp.ne.s32.totalorder %s36, %s37
    %p51 = scmp.eq.s32.totalorder %s17, 3
    %p52 = por %p50, %p51
    %p54 = scmp.ne.s32.totalorder %s37, %s53
    %p55 = scmp.eq.s32.totalorder %s17, 0
    %p56 = por %p54, %p55
    %s57 = ssub.s32 %s18, %s30
    %p58 = scmp.eq.s32.totalorder %s57, 0
    %s60 = sadd.s32 %s59, 1
    %s61 = scalar_select %p58, %s59, %s60
    %p64 = pneg %p58
    %p65 = scmp.eq.s32.totalorder %s11, 3
    %p66 = por %p64, %p65
    %p67 = scmp.ne.s32.totalorder %s59, %s62
    %p68 = scmp.eq.s32.totalorder %s11, 0
    %p69 = por %p67, %p68
    %p70 = scmp.ne.s32.totalorder %s59, %s62
    %p71 = scmp.eq.s32.totalorder %s16, 3
    %p72 = por %p70, %p71
    %p73 = scmp.ne.s32.totalorder %s62, %s63
    %p74 = scmp.eq.s32.totalorder %s16, 0
    %p75 = por %p73, %p74
    %p76 = scmp.ne.s32.totalorder %s62, %s63
    %p77 = scmp.eq.s32.totalorder %s17, 3
    %p78 = por %p76, %p77
    %p80 = scmp.ne.s32.totalorder %s63, %s79
    %p81 = scmp.eq.s32.totalorder %s17, 0
    %p82 = por %p80, %p81
    %s83 = ssub.s32 %s18, %s30
    %p84 = scmp.eq.s32.totalorder %s83, 0
    %s86 = sadd.s32 %s85, 1
    %s87 = scalar_select %p84, %s85, %s86
    %p90 = pneg %p84
    %p91 = scmp.eq.s32.totalorder %s11, 3
    %p92 = por %p90, %p91
    %p93 = scmp.ne.s32.totalorder %s85, %s88
    %p94 = scmp.eq.s32.totalorder %s11, 0
    %p95 = por %p93, %p94
    %p96 = scmp.ne.s32.totalorder %s85, %s88
    %p97 = scmp.eq.s32.totalorder %s16, 3
    %p98 = por %p96, %p97
    %p99 = scmp.ne.s32.totalorder %s88, %s89
    %p100 = scmp.eq.s32.totalorder %s16, 0
    %p101 = por %p99, %p100
    %p102 = scmp.ne.s32.totalorder %s88, %s89
    %p103 = scmp.eq.s32.totalorder %s17, 3
    %p104 = por %p102, %p103
    %p106 = scmp.ne.s32.totalorder %s89, %s105
    %p107 = scmp.eq.s32.totalorder %s17, 0
    %p108 = por %p106, %p107
    %s110 = sadd.s32 %s109, 1
    %p113 = scmp.eq.s32.totalorder %s11, 3
    %p114 = scmp.ne.s32.totalorder %s109, %s111
    %p115 = scmp.eq.s32.totalorder %s11, 0
    %p116 = por %p114, %p115
    %p117 = scmp.ne.s32.totalorder %s109, %s111
    %p118 = scmp.eq.s32.totalorder %s16, 3
    %p119 = por %p117, %p118
    %p120 = scmp.ne.s32.totalorder %s111, %s112
    %p121 = scmp.eq.s32.totalorder %s16, 0
    %p122 = por %p120, %p121
    %p123 = scmp.ne.s32.totalorder %s111, %s112
    %p124 = scmp.eq.s32.totalorder %s17, 3
    %p125 = por %p123, %p124
    %p127 = scmp.ne.s32.totalorder %s112, %s126
    %p128 = scmp.eq.s32.totalorder %s17, 0
    %p129 = por %p127, %p128
    %s131 = sadd.s32 %s130, 1
    %p134 = scmp.eq.s32.totalorder %s11, 3
    %p135 = scmp.ne.s32.totalorder %s130, %s132
    %p136 = scmp.eq.s32.totalorder %s11, 0
    %p137 = por %p135, %p136
    %p138 = scmp.ne.s32.totalorder %s130, %s132
    %p139 = scmp.eq.s32.totalorder %s16, 3
    %p140 = por %p138, %p139
    %p141 = scmp.ne.s32.totalorder %s132, %s133
    %p142 = scmp.eq.s32.totalorder %s16, 0
    %p143 = por %p141, %p142
    %p144 = scmp.ne.s32.totalorder %s132, %s133
    %p145 = scmp.eq.s32.totalorder %s17, 3
    %p146 = por %p144, %p145
    %p148 = scmp.ne.s32.totalorder %s133, %s147
    %p149 = scmp.eq.s32.totalorder %s17, 0
    %p150 = por %p148, %p149
    %s151 = ssub.s32 %s18, %s30
    %s152 = ssub.s32 %s19, %s26
    %s153 = sor.u32 %s151, %s152
    %p154 = scmp.eq.s32.totalorder %s153, 0
    %s156 = sadd.s32 %s155, 1
    %s157 = scalar_select %p154, %s155, %s156
    %p160 = pneg %p154
    %p161 = scmp.eq.s32.totalorder %s11, 3
    %p162 = por %p160, %p161
    %p163 = scmp.ne.s32.totalorder %s155, %s158
    %p164 = scmp.eq.s32.totalorder %s11, 0
    %p165 = por %p163, %p164
    %p166 = scmp.ne.s32.totalorder %s155, %s158
    %p167 = scmp.eq.s32.totalorder %s16, 3
    %p168 = por %p166, %p167
    %p169 = scmp.ne.s32.totalorder %s158, %s159
    %p170 = scmp.eq.s32.totalorder %s16, 0
    %p171 = por %p169, %p170
    %p172 = scmp.ne.s32.totalorder %s158, %s159
    %p173 = scmp.eq.s32.totalorder %s17, 3
    %p174 = por %p172, %p173
    %p176 = scmp.ne.s32.totalorder %s159, %s175
    %p177 = scmp.eq.s32.totalorder %s17, 0
    %p178 = por %p176, %p177
    %p179 = scmp.le.s32.totalorder 1, %s11
    %p180 = scmp.lt.s32.totalorder %s11, 5
    %p181 = pnand %p179, %p180
    %p182 = pneg %p181
    // Predicated region
    $region9: #{styled_conv_forward.1} parent=5 // pred_check
      _
    $region10: #{styled_conv_forward.1} parent=5 // pred_check_branch
      %184 = sbr.rel (%p181) target = $region12
    $region11: #{styled_conv_forward.1} parent=5 // pred_region
      %s185 = ssub.s32 %s11, 1
      // Predicated region
      $region13: #{styled_conv_forward.1} parent=11 // pred_check
        %p186 = pneg %p122
      $region14: #{styled_conv_forward.1} parent=11 // pred_check_branch
        %188 = sbr.rel (%p186) target = $region16
      $region15: #{styled_conv_forward.1} parent=11 // pred_region
        _
      $region16: #{styled_conv_forward.1} parent=11 // pred_fallthru
        _
      // Predicated region
      $region17: #{styled_conv_forward.1} parent=11 // pred_check
        %p189 = pneg %p143
      $region18: #{styled_conv_forward.1} parent=11 // pred_check_branch
        %191 = sbr.rel (%p189) target = $region20
      $region19: #{styled_conv_forward.1} parent=11 // pred_region
        _
      $region20: #{styled_conv_forward.1} parent=11 // pred_fallthru
        _
    $region12: #{styled_conv_forward.1} parent=5 // pred_fallthru
      _
    %p192 = scmp.lt.s32.totalorder %s11, 4
    // Predicated region
    $region21: #{styled_conv_forward.1} parent=5 // pred_check
      %p193 = pneg %p192
    $region22: #{styled_conv_forward.1} parent=5 // pred_check_branch
      %195 = sbr.rel (%p193) target = $region24
    $region23: #{styled_conv_forward.1} parent=5 // pred_region
      // Predicated region
      $region25: #{styled_conv_forward.1} parent=23 // pred_check
        %p196 = pneg %p43
      $region26: #{styled_conv_forward.1} parent=23 // pred_check_branch
        %198 = sbr.rel (%p196) target = $region28
      $region27: #{styled_conv_forward.1} parent=23 // pred_region
        %p199 = scmp.lt.s32.totalorder %s18, 1
        %s200 = scalar_select %p199, %s18, 1
        %s201 = smul.addr %s200, 4
        %s202 = scalar_lea.vmem %s0, %s201
      $region28: #{styled_conv_forward.1} parent=23 // pred_fallthru
        _
      // Predicated region
      $region29: #{styled_conv_forward.1} parent=23 // pred_check
        %p203 = pneg %p69
      $region30: #{styled_conv_forward.1} parent=23 // pred_check_branch
        %205 = sbr.rel (%p203) target = $region32
      $region31: #{styled_conv_forward.1} parent=23 // pred_region
        %p206 = scmp.lt.s32.totalorder %s18, 1
        %s207 = scalar_select %p206, %s18, 1
        %s208 = scalar_lea.vmem %s1, %s207
      $region32: #{styled_conv_forward.1} parent=23 // pred_fallthru
        _
      // Predicated region
      $region33: #{styled_conv_forward.1} parent=23 // pred_check
        %p209 = pneg %p95
      $region34: #{styled_conv_forward.1} parent=23 // pred_check_branch
        %211 = sbr.rel (%p209) target = $region36
      $region35: #{styled_conv_forward.1} parent=23 // pred_region
        %p212 = scmp.lt.s32.totalorder %s18, 1
        %s213 = scalar_select %p212, %s18, 1
        %s214 = smul.addr %s213, 72
        %s215 = smul.addr %s214, 4
        %s216 = scalar_lea.vmem %s2, %s215
      $region36: #{styled_conv_forward.1} parent=23 // pred_fallthru
        _
    $region24: #{styled_conv_forward.1} parent=5 // pred_fallthru
      _
    %p217 = scmp.le.s32.totalorder 1, %s11
    %p218 = scmp.lt.s32.totalorder %s11, 5
    %p219 = pnand %p217, %p218
    %p220 = pneg %p219
    // Predicated region
    $region37: #{styled_conv_forward.1} parent=5 // pred_check
      _
    $region38: #{styled_conv_forward.1} parent=5 // pred_check_branch
      %222 = sbr.rel (%p219) target = $region40
    $region39: #{styled_conv_forward.1} parent=5 // pred_region
      %s223 = ssub.s32 %s11, 1
      %p224 = scmp.lt.s32.totalorder %s20, 1
      %s225 = scalar_select %p224, %s20, 1
      %s226 = smul.addr %s225, 4
      %s227 = scalar_lea.vmem %s0, %s226
      %p228 = pneg %p49
      %p229 = pneg %p46
      %p230 = scmp.lt.s32.totalorder %s20, 1
      %s231 = scalar_select %p230, %s20, 1
      %s232 = scalar_lea.vmem %s1, %s231
      %p233 = pneg %p75
      %p234 = pneg %p72
      %p235 = scmp.lt.s32.totalorder %s20, 1
      %s236 = scalar_select %p235, %s20, 1
      %s237 = smul.addr %s236, 72
      %s238 = smul.addr %s237, 4
      %s239 = scalar_lea.vmem %s2, %s238
      %p240 = pneg %p101
      %p241 = pneg %p98
      %p242 = pneg %p122
      %p243 = pneg %p119
      %p244 = pneg %p143
      %p245 = pneg %p140
      %p246 = pneg %p171
      %p247 = pneg %p168
      %s248 = smul.u32 8, %s21
      %p249 = scmp.lt.s32.totalorder %s20, 1
      %s250 = scalar_select %p249, %s20, 1
      %p251 = scmp.lt.s32.totalorder %s248, 15
      %s252 = scalar_select %p251, %s248, 15
      %s253 = smul.addr %s252, 2
      %s254 = smul.addr %s250, 32
      %s255 = sadd.s32 %s253, %s254
      %s256 = smul.addr %s255, 8
      %s257 = scalar_lea.vmem %s5, %s256
      %p258 = scmp.lt.s32.totalorder %s20, 1
      %s259 = scalar_select %p258, %s20, 1
      %s260 = smul.addr %s259, 4
      %s261 = scalar_lea.vmem %s0, %s260
      %p262 = scmp.lt.s32.totalorder %s20, 1
      %s263 = scalar_select %p262, %s20, 1
      %s264 = scalar_lea.vmem %s1, %s263
      %p265 = scmp.lt.s32.totalorder %s20, 1
      %s266 = scalar_select %p265, %s20, 1
      %s267 = smul.addr %s266, 72
      %s268 = smul.addr %s267, 4
      %s269 = scalar_lea.vmem %s2, %s268
      %s270 = smul.u32 8, %s21
      %p271 = scmp.lt.s32.totalorder %s20, 1
      %s272 = scalar_select %p271, %s20, 1
      %p273 = scmp.lt.s32.totalorder %s270, 15
      %s274 = scalar_select %p273, %s270, 15
      %s275 = smul.addr %s274, 2
      %s276 = smul.addr %s272, 32
      %s277 = sadd.s32 %s275, %s276
      %s278 = smul.addr %s277, 8
      %s279 = scalar_lea.vmem %s5, %s278
      %s280 = smul.u32 8, %s21
      %s282 = smul.u32 %s21, 8
      %v283 = vld [vmem:[%s261] sm:$0xf]
      %s284 = smul.u32 %s21, 256
      %s285 = sshra.s32 %s284, 3
      %s286 = sand.u32 %s284, 7
      %s287 = smul.addr %s285, 4
      %s288 = scalar_lea.vmem %s269, %s287
      %v289 = vld [vmem:[%s288] sm:$0xf]
      %v290 = vld [vmem:[%s288 + $0x4] sm:$0xf]
      %v291 = vld [vmem:[%s288 + $0x8] sm:$0xf]
      %v292 = vld [vmem:[%s288 + $0xc] sm:$0xf]
      %v293 = vld [vmem:[%s288 + $0x10] sm:$0xf]
      %v294 = vld [vmem:[%s288 + $0x14] sm:$0xf]
      %v295 = vld [vmem:[%s288 + $0x18] sm:$0xf]
      %v296 = vld [vmem:[%s288 + $0x1c] sm:$0xf]
      %v297 = vld [vmem:[%s288 + $0x20] sm:$0xf]
      %v298 = vld [vmem:[%s288 + $0x24] sm:$0xf]
      %v299 = vld [vmem:[%s288 + $0x28] sm:$0xf]
      %v300 = vld [vmem:[%s288 + $0x2c] sm:$0xf]
      %v301 = vld [vmem:[%s288 + $0x30] sm:$0xf]
      %v302 = vld [vmem:[%s288 + $0x34] sm:$0xf]
      %v303 = vld [vmem:[%s288 + $0x38] sm:$0xf]
      %v304 = vld [vmem:[%s288 + $0x3c] sm:$0xf]
      %v305 = vld [vmem:[%s288 + $0x40] sm:$0xf]
      %v306 = vld [vmem:[%s288 + $0x44] sm:$0xf]
      %v307 = vld [vmem:[%s288 + $0x48] sm:$0xf]
      %v308 = vld [vmem:[%s288 + $0x4c] sm:$0xf]
      %v309 = vld [vmem:[%s288 + $0x50] sm:$0xf]
      %v310 = vld [vmem:[%s288 + $0x54] sm:$0xf]
      %v311 = vld [vmem:[%s288 + $0x58] sm:$0xf]
      %v312 = vld [vmem:[%s288 + $0x5c] sm:$0xf]
      %v313 = vld [vmem:[%s288 + $0x60] sm:$0xf]
      %v314 = vld [vmem:[%s288 + $0x64] sm:$0xf]
      %v315 = vld [vmem:[%s288 + $0x68] sm:$0xf]
      %v316 = vld [vmem:[%s288 + $0x6c] sm:$0xf]
      %v317 = vld [vmem:[%s288 + $0x70] sm:$0xf]
      %v318 = vld [vmem:[%s288 + $0x74] sm:$0xf]
      %v319 = vld [vmem:[%s288 + $0x78] sm:$0xf]
      %v320 = vld [vmem:[%s288 + $0x7c] sm:$0xf]
      %v321 = vld [vmem:[%s3] sm:$0x3]
      %v322 = vunpack.c.l.bf16 %v321
      %324 = vset.pattern.permute.xlu0 0
      %325 = vperm.xlu0 %324, %v283
      %v326 = vpop.permute.xlu0 %325
      %v328 = vmul.f32 %v322, %v326
      %v329 = vpack.c.bf16 %v328, %v328
      %v362 = vunpack.c.l.b16 %v289
      %v363 = vunpack.c.l.b16 %v290
      %v364 = vunpack.c.l.b16 %v291
      %v365 = vunpack.c.l.b16 %v292
      %v366 = vunpack.c.l.b16 %v293
      %v367 = vunpack.c.l.b16 %v294
      %v368 = vunpack.c.l.b16 %v295
      %v369 = vunpack.c.l.b16 %v296
      %v370 = vunpack.c.l.b16 %v297
      %v371 = vunpack.c.l.b16 %v298
      %v372 = vunpack.c.l.b16 %v299
      %v373 = vunpack.c.l.b16 %v300
      %v374 = vunpack.c.l.b16 %v301
      %v375 = vunpack.c.l.b16 %v302
      %v376 = vunpack.c.l.b16 %v303
      %v377 = vunpack.c.l.b16 %v304
      %v378 = vunpack.c.l.b16 %v305
      %v379 = vunpack.c.l.b16 %v306
      %v380 = vunpack.c.l.b16 %v307
      %v381 = vunpack.c.l.b16 %v308
      %v382 = vunpack.c.l.b16 %v309
      %v383 = vunpack.c.l.b16 %v310
      %v384 = vunpack.c.l.b16 %v311
      %v385 = vunpack.c.l.b16 %v312
      %v386 = vunpack.c.l.b16 %v313
      %v387 = vunpack.c.l.b16 %v314
      %v388 = vunpack.c.l.b16 %v315
      %v389 = vunpack.c.l.b16 %v316
      %v390 = vunpack.c.l.b16 %v317
      %v391 = vunpack.c.l.b16 %v318
      %v392 = vunpack.c.l.b16 %v319
      %v393 = vunpack.c.l.b16 %v320
      %v394 = vpack.c.b16 %v363, %v362
      %v395 = vpack.c.b16 %v365, %v364
      %v396 = vpack.c.b16 %v367, %v366
      %v397 = vpack.c.b16 %v369, %v368
      %v398 = vpack.c.b16 %v371, %v370
      %v399 = vpack.c.b16 %v373, %v372
      %v400 = vpack.c.b16 %v375, %v374
      %v401 = vpack.c.b16 %v377, %v376
      %v402 = vpack.c.b16 %v379, %v378
      %v403 = vpack.c.b16 %v381, %v380
      %v404 = vpack.c.b16 %v383, %v382
      %v405 = vpack.c.b16 %v385, %v384
      %v406 = vpack.c.b16 %v387, %v386
      %v407 = vpack.c.b16 %v389, %v388
      %v408 = vpack.c.b16 %v391, %v390
      %v409 = vpack.c.b16 %v393, %v392
      %vm410 = vcmask 31744
      %v412 = vsel %vm410, %v394, 0
      %v415 = vsel %vm410, %v395, 0
      %v418 = vsel %vm410, %v396, 0
      %v421 = vsel %vm410, %v397, 0
      %v424 = vsel %vm410, %v398, 0
      %v427 = vsel %vm410, %v399, 0
      %v430 = vsel %vm410, %v400, 0
      %v433 = vsel %vm410, %v401, 0
      %v436 = vsel %vm410, %v402, 0
      %v439 = vsel %vm410, %v403, 0
      %v442 = vsel %vm410, %v404, 0
      %v445 = vsel %vm410, %v405, 0
      %v448 = vsel %vm410, %v406, 0
      %v451 = vsel %vm410, %v407, 0
      %v454 = vsel %vm410, %v408, 0
      %v457 = vsel %vm410, %v409, 0
      %vm459 = vcmask 1041408
      %v461 = vsel %vm459, %v329, 0
      %463 = vmatprep.subr.bf16.mxu0 0
      %464 = vmatpush1.bf16.msra.mxu0 0
      %465 = vmatprep.subr.bf16.mxu0 0
      %466 = vmatpush1.bf16.msra.mxu0 0
      %467 = vmatprep.subr.bf16.mxu0 0
      %468 = vmatpush1.bf16.msra.mxu0 0
      %469 = vmatprep.subr.bf16.mxu0 0
      %470 = vmatpush1.bf16.msra.mxu0 0
      %471 = vmatprep.subr.bf16.mxu0 0
      %472 = vmatpush1.bf16.msra.mxu0 0
      %473 = vmatprep.subr.bf16.mxu0 0
      %474 = vmatpush1.bf16.msra.mxu0 0
      %475 = vmatprep.subr.bf16.mxu0 0
      %476 = vmatpush1.bf16.msra.mxu0 0
      %477 = vmatprep.subr.bf16.mxu0 0
      %478 = vmatpush1.bf16.msra.mxu0 %v461
      %479 = vmatprep.subr.bf16.mxu0 0
      %480 = vmatpush2.bf16.msra.mxu0 0
      %481 = vmatprep.subr.bf16.mxu0 0
      %482 = vmatpush2.bf16.msra.mxu0 0
      %483 = vmatprep.subr.bf16.mxu0 0
      %484 = vmatpush2.bf16.msra.mxu0 0
      %485 = vmatprep.subr.bf16.mxu0 0
      %486 = vmatpush2.bf16.msra.mxu0 0
      %487 = vmatprep.subr.bf16.mxu0 0
      %488 = vmatpush2.bf16.msra.mxu0 0
      %489 = vmatprep.subr.bf16.mxu0 0
      %490 = vmatpush2.bf16.msra.mxu0 0
      %491 = vmatprep.subr.bf16.mxu0 0
      %492 = vmatpush2.bf16.msra.mxu0 0
      %493 = vmatprep.subr.bf16.mxu0 0
      %494 = vmatpush2.bf16.msra.mxu0 0
      %495 = vmatprep.mubr.bf16.mxu0 0
      %496 = vmatmul.mubr.bf16.gmra.mxu0 %v412
      %v497 = vpop.f32.mrf.mxu0
      %v498 = vadd.f32 0.0, %v497
      %v499 = vpop.f32.mrf.mxu0
      %v500 = vpop.f32.mrf.mxu0
      %v501 = vadd.f32 0.0, %v500
      %v502 = vpop.f32.mrf.mxu0
      %503 = vmatprep.mubr.bf16.mxu0 0
      %504 = vmatmul.mubr.bf16.gmra.mxu0 %v415
      %v505 = vpop.f32.mrf.mxu0
      %v506 = vadd.f32 0.0, %v505
      %v507 = vpop.f32.mrf.mxu0
      %v508 = vpop.f32.mrf.mxu0
      %v509 = vadd.f32 0.0, %v508
      %v510 = vpop.f32.mrf.mxu0
      %511 = vmatprep.mubr.bf16.mxu0 0
      %512 = vmatmul.mubr.bf16.gmra.mxu0 %v418
      %v513 = vpop.f32.mrf.mxu0
      %v514 = vadd.f32 0.0, %v513
      %v515 = vpop.f32.mrf.mxu0
      %v516 = vpop.f32.mrf.mxu0
      %v517 = vadd.f32 0.0, %v516
      %v518 = vpop.f32.mrf.mxu0
      %519 = vmatprep.mubr.bf16.mxu0 0
      %520 = vmatmul.mubr.bf16.gmra.mxu0 %v421
      %v521 = vpop.f32.mrf.mxu0
      %v522 = vadd.f32 0.0, %v521
      %v523 = vpop.f32.mrf.mxu0
      %v524 = vpop.f32.mrf.mxu0
      %v525 = vadd.f32 0.0, %v524
      %v526 = vpop.f32.mrf.mxu0
      %527 = vmatprep.mubr.bf16.mxu0 0
      %528 = vmatmul.mubr.bf16.gmra.mxu0 %v424
      %v529 = vpop.f32.mrf.mxu0
      %v530 = vadd.f32 0.0, %v529
      %v531 = vpop.f32.mrf.mxu0
      %v532 = vpop.f32.mrf.mxu0
      %v533 = vadd.f32 0.0, %v532
      %v534 = vpop.f32.mrf.mxu0
      %535 = vmatprep.mubr.bf16.mxu0 0
      %536 = vmatmul.mubr.bf16.gmra.mxu0 %v427
      %v537 = vpop.f32.mrf.mxu0
      %v538 = vadd.f32 0.0, %v537
      %v539 = vpop.f32.mrf.mxu0
      %v540 = vpop.f32.mrf.mxu0
      %v541 = vadd.f32 0.0, %v540
      %v542 = vpop.f32.mrf.mxu0
      %543 = vmatprep.mubr.bf16.mxu0 0
      %544 = vmatmul.mubr.bf16.gmra.mxu0 %v430
      %v545 = vpop.f32.mrf.mxu0
      %v546 = vadd.f32 0.0, %v545
      %v547 = vpop.f32.mrf.mxu0
      %v548 = vpop.f32.mrf.mxu0
      %v549 = vadd.f32 0.0, %v548
      %v550 = vpop.f32.mrf.mxu0
      %551 = vmatprep.mubr.bf16.mxu0 0
      %552 = vmatmul.mubr.bf16.gmra.mxu0 %v433
      %v553 = vpop.f32.mrf.mxu0
      %v554 = vadd.f32 0.0, %v553
      %v555 = vpop.f32.mrf.mxu0
      %v556 = vpop.f32.mrf.mxu0
      %v557 = vadd.f32 0.0, %v556
      %v558 = vpop.f32.mrf.mxu0
      %559 = vmatprep.mubr.bf16.mxu0 0
      %560 = vmatmul.mubr.bf16.gmra.mxu0 %v436
      %v561 = vpop.f32.mrf.mxu0
      %v562 = vadd.f32 0.0, %v561
      %v563 = vpop.f32.mrf.mxu0
      %v564 = vpop.f32.mrf.mxu0
      %v565 = vadd.f32 0.0, %v564
      %v566 = vpop.f32.mrf.mxu0
      %567 = vmatprep.mubr.bf16.mxu0 0
      %568 = vmatmul.mubr.bf16.gmra.mxu0 %v439
      %v569 = vpop.f32.mrf.mxu0
      %v570 = vadd.f32 0.0, %v569
      %v571 = vpop.f32.mrf.mxu0
      %v572 = vpop.f32.mrf.mxu0
      %v573 = vadd.f32 0.0, %v572
      %v574 = vpop.f32.mrf.mxu0
      %575 = vmatprep.mubr.bf16.mxu0 0
      %576 = vmatmul.mubr.bf16.gmra.mxu0 %v442
      %v577 = vpop.f32.mrf.mxu0
      %v578 = vadd.f32 0.0, %v577
      %v579 = vpop.f32.mrf.mxu0
      %v580 = vpop.f32.mrf.mxu0
      %v581 = vadd.f32 0.0, %v580
      %v582 = vpop.f32.mrf.mxu0
      %583 = vmatprep.mubr.bf16.mxu0 0
      %584 = vmatmul.mubr.bf16.gmra.mxu0 %v445
      %v585 = vpop.f32.mrf.mxu0
      %v586 = vadd.f32 0.0, %v585
      %v587 = vpop.f32.mrf.mxu0
      %v588 = vpop.f32.mrf.mxu0
      %v589 = vadd.f32 0.0, %v588
      %v590 = vpop.f32.mrf.mxu0
      %591 = vmatprep.mubr.bf16.mxu0 0
      %592 = vmatmul.mubr.bf16.gmra.mxu0 %v448
      %v593 = vpop.f32.mrf.mxu0
      %v594 = vadd.f32 0.0, %v593
      %v595 = vpop.f32.mrf.mxu0
      %v596 = vpop.f32.mrf.mxu0
      %v597 = vadd.f32 0.0, %v596
      %v598 = vpop.f32.mrf.mxu0
      %599 = vmatprep.mubr.bf16.mxu0 0
      %600 = vmatmul.mubr.bf16.gmra.mxu0 %v451
      %v601 = vpop.f32.mrf.mxu0
      %v602 = vadd.f32 0.0, %v601
      %v603 = vpop.f32.mrf.mxu0
      %v604 = vpop.f32.mrf.mxu0
      %v605 = vadd.f32 0.0, %v604
      %v606 = vpop.f32.mrf.mxu0
      %607 = vmatprep.mubr.bf16.mxu0 0
      %608 = vmatmul.mubr.bf16.gmra.mxu0 %v454
      %v609 = vpop.f32.mrf.mxu0
      %v610 = vadd.f32 0.0, %v609
      %v611 = vpop.f32.mrf.mxu0
      %v612 = vpop.f32.mrf.mxu0
      %v613 = vadd.f32 0.0, %v612
      %v614 = vpop.f32.mrf.mxu0
      %615 = vmatprep.mubr.bf16.mxu0 0
      %616 = vmatmul.mubr.bf16.gmra.mxu0 %v457
      %v617 = vpop.f32.mrf.mxu0
      %v618 = vadd.f32 0.0, %v617
      %v619 = vpop.f32.mrf.mxu0
      %v620 = vpop.f32.mrf.mxu0
      %v621 = vadd.f32 0.0, %v620
      %v622 = vpop.f32.mrf.mxu0
      %623 = vdwg.mxu0
      %vm624 = vcmask 64512
      %625 = vst.msk [vmem:[#allocation2] sm:$0xff] %vm624, %v498
      %626 = vst.msk [vmem:[#allocation2 + $0x8] sm:$0xff] %vm624, %v501
      %627 = vst.msk [vmem:[#allocation2 + $0x10] sm:$0xff] %vm624, %v506
      %628 = vst.msk [vmem:[#allocation2 + $0x18] sm:$0xff] %vm624, %v509
      %629 = vst.msk [vmem:[#allocation2 + $0x20] sm:$0xff] %vm624, %v514
      %630 = vst.msk [vmem:[#allocation2 + $0x28] sm:$0xff] %vm624, %v517
      %631 = vst.msk [vmem:[#allocation2 + $0x30] sm:$0xff] %vm624, %v522
      %632 = vst.msk [vmem:[#allocation2 + $0x38] sm:$0xff] %vm624, %v525
      %633 = vst.msk [vmem:[#allocation2 + $0x40] sm:$0xff] %vm624, %v530
      %634 = vst.msk [vmem:[#allocation2 + $0x48] sm:$0xff] %vm624, %v533
      %635 = vst.msk [vmem:[#allocation2 + $0x50] sm:$0xff] %vm624, %v538
      %636 = vst.msk [vmem:[#allocation2 + $0x58] sm:$0xff] %vm624, %v541
      %637 = vst.msk [vmem:[#allocation2 + $0x60] sm:$0xff] %vm624, %v546
      %638 = vst.msk [vmem:[#allocation2 + $0x68] sm:$0xff] %vm624, %v549
      %639 = vst.msk [vmem:[#allocation2 + $0x70] sm:$0xff] %vm624, %v554
      %640 = vst.msk [vmem:[#allocation2 + $0x78] sm:$0xff] %vm624, %v557
      %641 = vst.msk [vmem:[#allocation2 + $0x80] sm:$0xff] %vm624, %v562
      %642 = vst.msk [vmem:[#allocation2 + $0x88] sm:$0xff] %vm624, %v565
      %643 = vst.msk [vmem:[#allocation2 + $0x90] sm:$0xff] %vm624, %v570
      %644 = vst.msk [vmem:[#allocation2 + $0x98] sm:$0xff] %vm624, %v573
      %645 = vst.msk [vmem:[#allocation2 + $0xa0] sm:$0xff] %vm624, %v578
      %646 = vst.msk [vmem:[#allocation2 + $0xa8] sm:$0xff] %vm624, %v581
      %647 = vst.msk [vmem:[#allocation2 + $0xb0] sm:$0xff] %vm624, %v586
      %648 = vst.msk [vmem:[#allocation2 + $0xb8] sm:$0xff] %vm624, %v589
      %649 = vst.msk [vmem:[#allocation2 + $0xc0] sm:$0xff] %vm624, %v594
      %650 = vst.msk [vmem:[#allocation2 + $0xc8] sm:$0xff] %vm624, %v597
      %651 = vst.msk [vmem:[#allocation2 + $0xd0] sm:$0xff] %vm624, %v602
      %652 = vst.msk [vmem:[#allocation2 + $0xd8] sm:$0xff] %vm624, %v605
      %653 = vst.msk [vmem:[#allocation2 + $0xe0] sm:$0xff] %vm624, %v610
      %654 = vst.msk [vmem:[#allocation2 + $0xe8] sm:$0xff] %vm624, %v613
      %655 = vst.msk [vmem:[#allocation2 + $0xf0] sm:$0xff] %vm624, %v618
      %656 = vst.msk [vmem:[#allocation2 + $0xf8] sm:$0xff] %vm624, %v621
      %s657 = scalar_lea.vmem %s3, 2
      %v658 = vld [vmem:[%s657] sm:$0x3]
      %v659 = vunpack.c.l.bf16 %v658
      %v660 = vmul.f32 %v659, %v326
      %v661 = vpack.c.bf16 %v660, %v660
      %v663 = vsel %vm459, %v661, 0
      %665 = vmatprep.subr.bf16.mxu0 0
      %666 = vmatpush1.bf16.msra.mxu0 0
      %667 = vmatprep.subr.bf16.mxu0 0
      %668 = vmatpush1.bf16.msra.mxu0 0
      %669 = vmatprep.subr.bf16.mxu0 0
      %670 = vmatpush1.bf16.msra.mxu0 0
      %671 = vmatprep.subr.bf16.mxu0 0
      %672 = vmatpush1.bf16.msra.mxu0 0
      %673 = vmatprep.subr.bf16.mxu0 0
      %674 = vmatpush1.bf16.msra.mxu0 0
      %675 = vmatprep.subr.bf16.mxu0 0
      %676 = vmatpush1.bf16.msra.mxu0 0
      %677 = vmatprep.subr.bf16.mxu0 0
      %678 = vmatpush1.bf16.msra.mxu0 0
      %679 = vmatprep.subr.bf16.mxu0 0
      %680 = vmatpush1.bf16.msra.mxu0 %v663
      %681 = vmatprep.subr.bf16.mxu0 0
      %682 = vmatpush2.bf16.msra.mxu0 0
      %683 = vmatprep.subr.bf16.mxu0 0
      %684 = vmatpush2.bf16.msra.mxu0 0
      %685 = vmatprep.subr.bf16.mxu0 0
      %686 = vmatpush2.bf16.msra.mxu0 0
      %687 = vmatprep.subr.bf16.mxu0 0
      %688 = vmatpush2.bf16.msra.mxu0 0
      %689 = vmatprep.subr.bf16.mxu0 0
      %690 = vmatpush2.bf16.msra.mxu0 0
      %691 = vmatprep.subr.bf16.mxu0 0
      %692 = vmatpush2.bf16.msra.mxu0 0
      %693 = vmatprep.subr.bf16.mxu0 0
      %694 = vmatpush2.bf16.msra.mxu0 0
      %695 = vmatprep.subr.bf16.mxu0 0
      %696 = vmatpush2.bf16.msra.mxu0 0
      %697 = vmatprep.mubr.bf16.mxu0 0
      %698 = vmatmul.mubr.bf16.gmra.mxu0 %v412
      %v699 = vpop.f32.mrf.mxu0
      %v700 = vadd.f32 0.0, %v699
      %v701 = vpop.f32.mrf.mxu0
      %v702 = vpop.f32.mrf.mxu0
      %v703 = vadd.f32 0.0, %v702
      %v704 = vpop.f32.mrf.mxu0
      %705 = vmatprep.mubr.bf16.mxu0 0
      %706 = vmatmul.mubr.bf16.gmra.mxu0 %v415
      %v707 = vpop.f32.mrf.mxu0
      %v708 = vadd.f32 0.0, %v707
      %v709 = vpop.f32.mrf.mxu0
      %v710 = vpop.f32.mrf.mxu0
      %v711 = vadd.f32 0.0, %v710
      %v712 = vpop.f32.mrf.mxu0
      %713 = vmatprep.mubr.bf16.mxu0 0
      %714 = vmatmul.mubr.bf16.gmra.mxu0 %v418
      %v715 = vpop.f32.mrf.mxu0
      %v716 = vadd.f32 0.0, %v715
      %v717 = vpop.f32.mrf.mxu0
      %v718 = vpop.f32.mrf.mxu0
      %v719 = vadd.f32 0.0, %v718
      %v720 = vpop.f32.mrf.mxu0
      %721 = vmatprep.mubr.bf16.mxu0 0
      %722 = vmatmul.mubr.bf16.gmra.mxu0 %v421
      %v723 = vpop.f32.mrf.mxu0
      %v724 = vadd.f32 0.0, %v723
      %v725 = vpop.f32.mrf.mxu0
      %v726 = vpop.f32.mrf.mxu0
      %v727 = vadd.f32 0.0, %v726
      %v728 = vpop.f32.mrf.mxu0
      %729 = vmatprep.mubr.bf16.mxu0 0
      %730 = vmatmul.mubr.bf16.gmra.mxu0 %v424
      %v731 = vpop.f32.mrf.mxu0
      %v732 = vadd.f32 0.0, %v731
      %v733 = vpop.f32.mrf.mxu0
      %v734 = vpop.f32.mrf.mxu0
      %v735 = vadd.f32 0.0, %v734
      %v736 = vpop.f32.mrf.mxu0
      %737 = vmatprep.mubr.bf16.mxu0 0
      %738 = vmatmul.mubr.bf16.gmra.mxu0 %v427
      %v739 = vpop.f32.mrf.mxu0
      %v740 = vadd.f32 0.0, %v739
      %v741 = vpop.f32.mrf.mxu0
      %v742 = vpop.f32.mrf.mxu0
      %v743 = vadd.f32 0.0, %v742
      %v744 = vpop.f32.mrf.mxu0
      %745 = vmatprep.mubr.bf16.mxu0 0
      %746 = vmatmul.mubr.bf16.gmra.mxu0 %v430
      %v747 = vpop.f32.mrf.mxu0
      %v748 = vadd.f32 0.0, %v747
      %v749 = vpop.f32.mrf.mxu0
      %v750 = vpop.f32.mrf.mxu0
      %v751 = vadd.f32 0.0, %v750
      %v752 = vpop.f32.mrf.mxu0
      %753 = vmatprep.mubr.bf16.mxu0 0
      %754 = vmatmul.mubr.bf16.gmra.mxu0 %v433
      %v755 = vpop.f32.mrf.mxu0
      %v756 = vadd.f32 0.0, %v755
      %v757 = vpop.f32.mrf.mxu0
      %v758 = vpop.f32.mrf.mxu0
      %v759 = vadd.f32 0.0, %v758
      %v760 = vpop.f32.mrf.mxu0
      %761 = vmatprep.mubr.bf16.mxu0 0
      %762 = vmatmul.mubr.bf16.gmra.mxu0 %v436
      %v763 = vpop.f32.mrf.mxu0
      %v764 = vadd.f32 0.0, %v763
      %v765 = vpop.f32.mrf.mxu0
      %v766 = vpop.f32.mrf.mxu0
      %v767 = vadd.f32 0.0, %v766
      %v768 = vpop.f32.mrf.mxu0
      %769 = vmatprep.mubr.bf16.mxu0 0
      %770 = vmatmul.mubr.bf16.gmra.mxu0 %v439
      %v771 = vpop.f32.mrf.mxu0
      %v772 = vadd.f32 0.0, %v771
      %v773 = vpop.f32.mrf.mxu0
      %v774 = vpop.f32.mrf.mxu0
      %v775 = vadd.f32 0.0, %v774
      %v776 = vpop.f32.mrf.mxu0
      %777 = vmatprep.mubr.bf16.mxu0 0
      %778 = vmatmul.mubr.bf16.gmra.mxu0 %v442
      %v779 = vpop.f32.mrf.mxu0
      %v780 = vadd.f32 0.0, %v779
      %v781 = vpop.f32.mrf.mxu0
      %v782 = vpop.f32.mrf.mxu0
      %v783 = vadd.f32 0.0, %v782
      %v784 = vpop.f32.mrf.mxu0
      %785 = vmatprep.mubr.bf16.mxu0 0
      %786 = vmatmul.mubr.bf16.gmra.mxu0 %v445
      %v787 = vpop.f32.mrf.mxu0
      %v788 = vadd.f32 0.0, %v787
      %v789 = vpop.f32.mrf.mxu0
      %v790 = vpop.f32.mrf.mxu0
      %v791 = vadd.f32 0.0, %v790
      %v792 = vpop.f32.mrf.mxu0
      %793 = vmatprep.mubr.bf16.mxu0 0
      %794 = vmatmul.mubr.bf16.gmra.mxu0 %v448
      %v795 = vpop.f32.mrf.mxu0
      %v796 = vadd.f32 0.0, %v795
      %v797 = vpop.f32.mrf.mxu0
      %v798 = vpop.f32.mrf.mxu0
      %v799 = vadd.f32 0.0, %v798
      %v800 = vpop.f32.mrf.mxu0
      %801 = vmatprep.mubr.bf16.mxu0 0
      %802 = vmatmul.mubr.bf16.gmra.mxu0 %v451
      %v803 = vpop.f32.mrf.mxu0
      %v804 = vadd.f32 0.0, %v803
      %v805 = vpop.f32.mrf.mxu0
      %v806 = vpop.f32.mrf.mxu0
      %v807 = vadd.f32 0.0, %v806
      %v808 = vpop.f32.mrf.mxu0
      %809 = vmatprep.mubr.bf16.mxu0 0
      %810 = vmatmul.mubr.bf16.gmra.mxu0 %v454
      %v811 = vpop.f32.mrf.mxu0
      %v812 = vadd.f32 0.0, %v811
      %v813 = vpop.f32.mrf.mxu0
      %v814 = vpop.f32.mrf.mxu0
      %v815 = vadd.f32 0.0, %v814
      %v816 = vpop.f32.mrf.mxu0
      %817 = vmatprep.mubr.bf16.mxu0 0
      %818 = vmatmul.mubr.bf16.gmra.mxu0 %v457
      %v819 = vpop.f32.mrf.mxu0
      %v820 = vadd.f32 0.0, %v819
      %v821 = vpop.f32.mrf.mxu0
      %v822 = vpop.f32.mrf.mxu0
      %v823 = vadd.f32 0.0, %v822
      %v824 = vpop.f32.mrf.mxu0
      %825 = vdwg.mxu0
      %v826 = vrot.slane %v700, 1
      %v827 = vrot.slane %v703, 1
      %v828 = vrot.slane %v708, 1
      %v829 = vrot.slane %v711, 1
      %v830 = vrot.slane %v716, 1
      %v831 = vrot.slane %v719, 1
      %v832 = vrot.slane %v724, 1
      %v833 = vrot.slane %v727, 1
      %v834 = vrot.slane %v732, 1
      %v835 = vrot.slane %v735, 1
      %v836 = vrot.slane %v740, 1
      %v837 = vrot.slane %v743, 1
      %v838 = vrot.slane %v748, 1
      %v839 = vrot.slane %v751, 1
      %v840 = vrot.slane %v756, 1
      %v841 = vrot.slane %v759, 1
      %v842 = vrot.slane %v764, 1
      %v843 = vrot.slane %v767, 1
      %v844 = vrot.slane %v772, 1
      %v845 = vrot.slane %v775, 1
      %v846 = vrot.slane %v780, 1
      %v847 = vrot.slane %v783, 1
      %v848 = vrot.slane %v788, 1
      %v849 = vrot.slane %v791, 1
      %v850 = vrot.slane %v796, 1
      %v851 = vrot.slane %v799, 1
      %v852 = vrot.slane %v804, 1
      %v853 = vrot.slane %v807, 1
      %v854 = vrot.slane %v812, 1
      %v855 = vrot.slane %v815, 1
      %v856 = vrot.slane %v820, 1
      %v857 = vrot.slane %v823, 1
      %v858 = vlaneseq
      %v859 = vshrl.u32 %v858, 7
      %vm860 = vcmp.lt.s32.totalorder %v859, 7
      %v861 = vsel %vm860, %v856, %v857
      %v862 = vsel %vm860, %v855, %v856
      %v863 = vsel %vm860, %v854, %v855
      %v864 = vsel %vm860, %v853, %v854
      %v865 = vsel %vm860, %v852, %v853
      %v866 = vsel %vm860, %v851, %v852
      %v867 = vsel %vm860, %v850, %v851
      %v868 = vsel %vm860, %v849, %v850
      %v869 = vsel %vm860, %v848, %v849
      %v870 = vsel %vm860, %v847, %v848
      %v871 = vsel %vm860, %v846, %v847
      %v872 = vsel %vm860, %v845, %v846
      %v873 = vsel %vm860, %v844, %v845
      %v874 = vsel %vm860, %v843, %v844
      %v875 = vsel %vm860, %v842, %v843
      %v876 = vsel %vm860, %v841, %v842
      %v877 = vsel %vm860, %v840, %v841
      %v878 = vsel %vm860, %v839, %v840
      %v879 = vsel %vm860, %v838, %v839
      %v880 = vsel %vm860, %v837, %v838
      %v881 = vsel %vm860, %v836, %v837
      %v882 = vsel %vm860, %v835, %v836
      %v883 = vsel %vm860, %v834, %v835
      %v884 = vsel %vm860, %v833, %v834
      %v885 = vsel %vm860, %v832, %v833
      %v886 = vsel %vm860, %v831, %v832
      %v887 = vsel %vm860, %v830, %v831
      %v888 = vsel %vm860, %v829, %v830
      %v889 = vsel %vm860, %v828, %v829
      %v890 = vsel %vm860, %v827, %v828
      %v891 = vsel %vm860, %v826, %v827
      %v892 = vsel %vm860, %v857, %v826
      %v893 = vld [vmem:[#allocation2] sm:$0xff]
      %v894 = vld [vmem:[#allocation2 + $0x8] sm:$0xff]
      %v895 = vld [vmem:[#allocation2 + $0x10] sm:$0xff]
      %v896 = vld [vmem:[#allocation2 + $0x18] sm:$0xff]
      %v897 = vld [vmem:[#allocation2 + $0x20] sm:$0xff]
      %v898 = vld [vmem:[#allocation2 + $0x28] sm:$0xff]
      %v899 = vld [vmem:[#allocation2 + $0x30] sm:$0xff]
      %v900 = vld [vmem:[#allocation2 + $0x38] sm:$0xff]
      %v901 = vld [vmem:[#allocation2 + $0x40] sm:$0xff]
      %v902 = vld [vmem:[#allocation2 + $0x48] sm:$0xff]
      %v903 = vld [vmem:[#allocation2 + $0x50] sm:$0xff]
      %v904 = vld [vmem:[#allocation2 + $0x58] sm:$0xff]
      %v905 = vld [vmem:[#allocation2 + $0x60] sm:$0xff]
      %v906 = vld [vmem:[#allocation2 + $0x68] sm:$0xff]
      %v907 = vld [vmem:[#allocation2 + $0x70] sm:$0xff]
      %v908 = vld [vmem:[#allocation2 + $0x78] sm:$0xff]
      %v909 = vld [vmem:[#allocation2 + $0x80] sm:$0xff]
      %v910 = vld [vmem:[#allocation2 + $0x88] sm:$0xff]
      %v911 = vld [vmem:[#allocation2 + $0x90] sm:$0xff]
      %v912 = vld [vmem:[#allocation2 + $0x98] sm:$0xff]
      %v913 = vld [vmem:[#allocation2 + $0xa0] sm:$0xff]
      %v914 = vld [vmem:[#allocation2 + $0xa8] sm:$0xff]
      %v915 = vld [vmem:[#allocation2 + $0xb0] sm:$0xff]
      %v916 = vld [vmem:[#allocation2 + $0xb8] sm:$0xff]
      %v917 = vld [vmem:[#allocation2 + $0xc0] sm:$0xff]
      %v918 = vld [vmem:[#allocation2 + $0xc8] sm:$0xff]
      %v919 = vld [vmem:[#allocation2 + $0xd0] sm:$0xff]
      %v920 = vld [vmem:[#allocation2 + $0xd8] sm:$0xff]
      %v921 = vld [vmem:[#allocation2 + $0xe0] sm:$0xff]
      %v922 = vld [vmem:[#allocation2 + $0xe8] sm:$0xff]
      %v923 = vld [vmem:[#allocation2 + $0xf0] sm:$0xff]
      %v924 = vld [vmem:[#allocation2 + $0xf8] sm:$0xff]
      %v925 = vadd.f32 %v893, %v891
      %v926 = vadd.f32 %v894, %v890
      %v927 = vadd.f32 %v895, %v889
      %v928 = vadd.f32 %v896, %v888
      %v929 = vadd.f32 %v897, %v887
      %v930 = vadd.f32 %v898, %v886
      %v931 = vadd.f32 %v899, %v885
      %v932 = vadd.f32 %v900, %v884
      %v933 = vadd.f32 %v901, %v883
      %v934 = vadd.f32 %v902, %v882
      %v935 = vadd.f32 %v903, %v881
      %v936 = vadd.f32 %v904, %v880
      %v937 = vadd.f32 %v905, %v879
      %v938 = vadd.f32 %v906, %v878
      %v939 = vadd.f32 %v907, %v877
      %v940 = vadd.f32 %v908, %v876
      %v941 = vadd.f32 %v909, %v875
      %v942 = vadd.f32 %v910, %v874
      %v943 = vadd.f32 %v911, %v873
      %v944 = vadd.f32 %v912, %v872
      %v945 = vadd.f32 %v913, %v871
      %v946 = vadd.f32 %v914, %v870
      %v947 = vadd.f32 %v915, %v869
      %v948 = vadd.f32 %v916, %v868
      %v949 = vadd.f32 %v917, %v867
      %v950 = vadd.f32 %v918, %v866
      %v951 = vadd.f32 %v919, %v865
      %v952 = vadd.f32 %v920, %v864
      %v953 = vadd.f32 %v921, %v863
      %v954 = vadd.f32 %v922, %v862
      %v955 = vadd.f32 %v923, %v861
      %v956 = vadd.f32 %v924, %v892
      %957 = vst.msk [vmem:[#allocation2] sm:$0xff] %vm624, %v925
      %958 = vst.msk [vmem:[#allocation2 + $0x8] sm:$0xff] %vm624, %v926
      %959 = vst.msk [vmem:[#allocation2 + $0x10] sm:$0xff] %vm624, %v927
      %960 = vst.msk [vmem:[#allocation2 + $0x18] sm:$0xff] %vm624, %v928
      %961 = vst.msk [vmem:[#allocation2 + $0x20] sm:$0xff] %vm624, %v929
      %962 = vst.msk [vmem:[#allocation2 + $0x28] sm:$0xff] %vm624, %v930
      %963 = vst.msk [vmem:[#allocation2 + $0x30] sm:$0xff] %vm624, %v931
      %964 = vst.msk [vmem:[#allocation2 + $0x38] sm:$0xff] %vm624, %v932
      %965 = vst.msk [vmem:[#allocation2 + $0x40] sm:$0xff] %vm624, %v933
      %966 = vst.msk [vmem:[#allocation2 + $0x48] sm:$0xff] %vm624, %v934
      %967 = vst.msk [vmem:[#allocation2 + $0x50] sm:$0xff] %vm624, %v935
      %968 = vst.msk [vmem:[#allocation2 + $0x58] sm:$0xff] %vm624, %v936
      %969 = vst.msk [vmem:[#allocation2 + $0x60] sm:$0xff] %vm624, %v937
      %970 = vst.msk [vmem:[#allocation2 + $0x68] sm:$0xff] %vm624, %v938
      %971 = vst.msk [vmem:[#allocation2 + $0x70] sm:$0xff] %vm624, %v939
      %972 = vst.msk [vmem:[#allocation2 + $0x78] sm:$0xff] %vm624, %v940
      %973 = vst.msk [vmem:[#allocation2 + $0x80] sm:$0xff] %vm624, %v941
      %974 = vst.msk [vmem:[#allocation2 + $0x88] sm:$0xff] %vm624, %v942
      %975 = vst.msk [vmem:[#allocation2 + $0x90] sm:$0xff] %vm624, %v943
      %976 = vst.msk [vmem:[#allocation2 + $0x98] sm:$0xff] %vm624, %v944
      %977 = vst.msk [vmem:[#allocation2 + $0xa0] sm:$0xff] %vm624, %v945
      %978 = vst.msk [vmem:[#allocation2 + $0xa8] sm:$0xff] %vm624, %v946
      %979 = vst.msk [vmem:[#allocation2 + $0xb0] sm:$0xff] %vm624, %v947
      %980 = vst.msk [vmem:[#allocation2 + $0xb8] sm:$0xff] %vm624, %v948
      %981 = vst.msk [vmem:[#allocation2 + $0xc0] sm:$0xff] %vm624, %v949
      %982 = vst.msk [vmem:[#allocation2 + $0xc8] sm:$0xff] %vm624, %v950
      %983 = vst.msk [vmem:[#allocation2 + $0xd0] sm:$0xff] %vm624, %v951
      %984 = vst.msk [vmem:[#allocation2 + $0xd8] sm:$0xff] %vm624, %v952
      %985 = vst.msk [vmem:[#allocation2 + $0xe0] sm:$0xff] %vm624, %v953
      %986 = vst.msk [vmem:[#allocation2 + $0xe8] sm:$0xff] %vm624, %v954
      %987 = vst.msk [vmem:[#allocation2 + $0xf0] sm:$0xff] %vm624, %v955
      %988 = vst.msk [vmem:[#allocation2 + $0xf8] sm:$0xff] %vm624, %v956
      %s989 = scalar_lea.vmem %s3, 4
      %v990 = vld [vmem:[%s989] sm:$0x3]
      %v991 = vunpack.c.l.bf16 %v990
      %v992 = vmul.f32 %v991, %v326
      %v993 = vpack.c.bf16 %v992, %v992
      %v995 = vsel %vm459, %v993, 0
      %997 = vmatprep.subr.bf16.mxu0 0
      %998 = vmatpush1.bf16.msra.mxu0 0
      %999 = vmatprep.subr.bf16.mxu0 0
      %1000 = vmatpush1.bf16.msra.mxu0 0
      %1001 = vmatprep.subr.bf16.mxu0 0
      %1002 = vmatpush1.bf16.msra.mxu0 0
      %1003 = vmatprep.subr.bf16.mxu0 0
      %1004 = vmatpush1.bf16.msra.mxu0 0
      %1005 = vmatprep.subr.bf16.mxu0 0
      %1006 = vmatpush1.bf16.msra.mxu0 0
      %1007 = vmatprep.subr.bf16.mxu0 0
      %1008 = vmatpush1.bf16.msra.mxu0 0
      %1009 = vmatprep.subr.bf16.mxu0 0
      %1010 = vmatpush1.bf16.msra.mxu0 0
      %1011 = vmatprep.subr.bf16.mxu0 0
      %1012 = vmatpush1.bf16.msra.mxu0 %v995
      %1013 = vmatprep.subr.bf16.mxu0 0
      %1014 = vmatpush2.bf16.msra.mxu0 0
      %1015 = vmatprep.subr.bf16.mxu0 0
      %1016 = vmatpush2.bf16.msra.mxu0 0
      %1017 = vmatprep.subr.bf16.mxu0 0
      %1018 = vmatpush2.bf16.msra.mxu0 0
      %1019 = vmatprep.subr.bf16.mxu0 0
      %1020 = vmatpush2.bf16.msra.mxu0 0
      %1021 = vmatprep.subr.bf16.mxu0 0
      %1022 = vmatpush2.bf16.msra.mxu0 0
      %1023 = vmatprep.subr.bf16.mxu0 0
      %1024 = vmatpush2.bf16.msra.mxu0 0
      %1025 = vmatprep.subr.bf16.mxu0 0
      %1026 = vmatpush2.bf16.msra.mxu0 0
      %1027 = vmatprep.subr.bf16.mxu0 0
      %1028 = vmatpush2.bf16.msra.mxu0 0
      %1029 = vmatprep.mubr.bf16.mxu0 0
      %1030 = vmatmul.mubr.bf16.gmra.mxu0 %v412
      %v1031 = vpop.f32.mrf.mxu0
      %v1032 = vadd.f32 0.0, %v1031
      %v1033 = vpop.f32.mrf.mxu0
      %v1034 = vpop.f32.mrf.mxu0
      %v1035 = vadd.f32 0.0, %v1034
      %v1036 = vpop.f32.mrf.mxu0
      %1037 = vmatprep.mubr.bf16.mxu0 0
      %1038 = vmatmul.mubr.bf16.gmra.mxu0 %v415
      %v1039 = vpop.f32.mrf.mxu0
      %v1040 = vadd.f32 0.0, %v1039
      %v1041 = vpop.f32.mrf.mxu0
      %v1042 = vpop.f32.mrf.mxu0
      %v1043 = vadd.f32 0.0, %v1042
      %v1044 = vpop.f32.mrf.mxu0
      %1045 = vmatprep.mubr.bf16.mxu0 0
      %1046 = vmatmul.mubr.bf16.gmra.mxu0 %v418
      %v1047 = vpop.f32.mrf.mxu0
      %v1048 = vadd.f32 0.0, %v1047
      %v1049 = vpop.f32.mrf.mxu0
      %v1050 = vpop.f32.mrf.mxu0
      %v1051 = vadd.f32 0.0, %v1050
      %v1052 = vpop.f32.mrf.mxu0
      %1053 = vmatprep.mubr.bf16.mxu0 0
      %1054 = vmatmul.mubr.bf16.gmra.mxu0 %v421
      %v1055 = vpop.f32.mrf.mxu0
      %v1056 = vadd.f32 0.0, %v1055
      %v1057 = vpop.f32.mrf.mxu0
      %v1058 = vpop.f32.mrf.mxu0
      %v1059 = vadd.f32 0.0, %v1058
      %v1060 = vpop.f32.mrf.mxu0
      %1061 = vmatprep.mubr.bf16.mxu0 0
      %1062 = vmatmul.mubr.bf16.gmra.mxu0 %v424
      %v1063 = vpop.f32.mrf.mxu0
      %v1064 = vadd.f32 0.0, %v1063
      %v1065 = vpop.f32.mrf.mxu0
      %v1066 = vpop.f32.mrf.mxu0
      %v1067 = vadd.f32 0.0, %v1066
      %v1068 = vpop.f32.mrf.mxu0
      %1069 = vmatprep.mubr.bf16.mxu0 0
      %1070 = vmatmul.mubr.bf16.gmra.mxu0 %v427
      %v1071 = vpop.f32.mrf.mxu0
      %v1072 = vadd.f32 0.0, %v1071
      %v1073 = vpop.f32.mrf.mxu0
      %v1074 = vpop.f32.mrf.mxu0
      %v1075 = vadd.f32 0.0, %v1074
      %v1076 = vpop.f32.mrf.mxu0
      %1077 = vmatprep.mubr.bf16.mxu0 0
      %1078 = vmatmul.mubr.bf16.gmra.mxu0 %v430
      %v1079 = vpop.f32.mrf.mxu0
      %v1080 = vadd.f32 0.0, %v1079
      %v1081 = vpop.f32.mrf.mxu0
      %v1082 = vpop.f32.mrf.mxu0
      %v1083 = vadd.f32 0.0, %v1082
      %v1084 = vpop.f32.mrf.mxu0
      %1085 = vmatprep.mubr.bf16.mxu0 0
      %1086 = vmatmul.mubr.bf16.gmra.mxu0 %v433
      %v1087 = vpop.f32.mrf.mxu0
      %v1088 = vadd.f32 0.0, %v1087
      %v1089 = vpop.f32.mrf.mxu0
      %v1090 = vpop.f32.mrf.mxu0
      %v1091 = vadd.f32 0.0, %v1090
      %v1092 = vpop.f32.mrf.mxu0
      %1093 = vmatprep.mubr.bf16.mxu0 0
      %1094 = vmatmul.mubr.bf16.gmra.mxu0 %v436
      %v1095 = vpop.f32.mrf.mxu0
      %v1096 = vadd.f32 0.0, %v1095
      %v1097 = vpop.f32.mrf.mxu0
      %v1098 = vpop.f32.mrf.mxu0
      %v1099 = vadd.f32 0.0, %v1098
      %v1100 = vpop.f32.mrf.mxu0
      %1101 = vmatprep.mubr.bf16.mxu0 0
      %1102 = vmatmul.mubr.bf16.gmra.mxu0 %v439
      %v1103 = vpop.f32.mrf.mxu0
      %v1104 = vadd.f32 0.0, %v1103
      %v1105 = vpop.f32.mrf.mxu0
      %v1106 = vpop.f32.mrf.mxu0
      %v1107 = vadd.f32 0.0, %v1106
      %v1108 = vpop.f32.mrf.mxu0
      %1109 = vmatprep.mubr.bf16.mxu0 0
      %1110 = vmatmul.mubr.bf16.gmra.mxu0 %v442
      %v1111 = vpop.f32.mrf.mxu0
      %v1112 = vadd.f32 0.0, %v1111
      %v1113 = vpop.f32.mrf.mxu0
      %v1114 = vpop.f32.mrf.mxu0
      %v1115 = vadd.f32 0.0, %v1114
      %v1116 = vpop.f32.mrf.mxu0
      %1117 = vmatprep.mubr.bf16.mxu0 0
      %1118 = vmatmul.mubr.bf16.gmra.mxu0 %v445
      %v1119 = vpop.f32.mrf.mxu0
      %v1120 = vadd.f32 0.0, %v1119
      %v1121 = vpop.f32.mrf.mxu0
      %v1122 = vpop.f32.mrf.mxu0
      %v1123 = vadd.f32 0.0, %v1122
      %v1124 = vpop.f32.mrf.mxu0
      %1125 = vmatprep.mubr.bf16.mxu0 0
      %1126 = vmatmul.mubr.bf16.gmra.mxu0 %v448
      %v1127 = vpop.f32.mrf.mxu0
      %v1128 = vadd.f32 0.0, %v1127
      %v1129 = vpop.f32.mrf.mxu0
      %v1130 = vpop.f32.mrf.mxu0
      %v1131 = vadd.f32 0.0, %v1130
      %v1132 = vpop.f32.mrf.mxu0
      %1133 = vmatprep.mubr.bf16.mxu0 0
      %1134 = vmatmul.mubr.bf16.gmra.mxu0 %v451
      %v1135 = vpop.f32.mrf.mxu0
      %v1136 = vadd.f32 0.0, %v1135
      %v1137 = vpop.f32.mrf.mxu0
      %v1138 = vpop.f32.mrf.mxu0
      %v1139 = vadd.f32 0.0, %v1138
      %v1140 = vpop.f32.mrf.mxu0
      %1141 = vmatprep.mubr.bf16.mxu0 0
      %1142 = vmatmul.mubr.bf16.gmra.mxu0 %v454
      %v1143 = vpop.f32.mrf.mxu0
      %v1144 = vadd.f32 0.0, %v1143
      %v1145 = vpop.f32.mrf.mxu0
      %v1146 = vpop.f32.mrf.mxu0
      %v1147 = vadd.f32 0.0, %v1146
      %v1148 = vpop.f32.mrf.mxu0
      %1149 = vmatprep.mubr.bf16.mxu0 0
      %1150 = vmatmul.mubr.bf16.gmra.mxu0 %v457
      %v1151 = vpop.f32.mrf.mxu0
      %v1152 = vadd.f32 0.0, %v1151
      %v1153 = vpop.f32.mrf.mxu0
      %v1154 = vpop.f32.mrf.mxu0
      %v1155 = vadd.f32 0.0, %v1154
      %v1156 = vpop.f32.mrf.mxu0
      %1157 = vdwg.mxu0
      %v1158 = vrot.slane %v1032, 2
      %v1159 = vrot.slane %v1035, 2
      %v1160 = vrot.slane %v1040, 2
      %v1161 = vrot.slane %v1043, 2
      %v1162 = vrot.slane %v1048, 2
      %v1163 = vrot.slane %v1051, 2
      %v1164 = vrot.slane %v1056, 2
      %v1165 = vrot.slane %v1059, 2
      %v1166 = vrot.slane %v1064, 2
      %v1167 = vrot.slane %v1067, 2
      %v1168 = vrot.slane %v1072, 2
      %v1169 = vrot.slane %v1075, 2
      %v1170 = vrot.slane %v1080, 2
      %v1171 = vrot.slane %v1083, 2
      %v1172 = vrot.slane %v1088, 2
      %v1173 = vrot.slane %v1091, 2
      %v1174 = vrot.slane %v1096, 2
      %v1175 = vrot.slane %v1099, 2
      %v1176 = vrot.slane %v1104, 2
      %v1177 = vrot.slane %v1107, 2
      %v1178 = vrot.slane %v1112, 2
      %v1179 = vrot.slane %v1115, 2
      %v1180 = vrot.slane %v1120, 2
      %v1181 = vrot.slane %v1123, 2
      %v1182 = vrot.slane %v1128, 2
      %v1183 = vrot.slane %v1131, 2
      %v1184 = vrot.slane %v1136, 2
      %v1185 = vrot.slane %v1139, 2
      %v1186 = vrot.slane %v1144, 2
      %v1187 = vrot.slane %v1147, 2
      %v1188 = vrot.slane %v1152, 2
      %v1189 = vrot.slane %v1155, 2
      %vm1190 = vcmp.lt.s32.totalorder %v859, 6
      %v1191 = vsel %vm1190, %v1188, %v1189
      %v1192 = vsel %vm1190, %v1187, %v1188
      %v1193 = vsel %vm1190, %v1186, %v1187
      %v1194 = vsel %vm1190, %v1185, %v1186
      %v1195 = vsel %vm1190, %v1184, %v1185
      %v1196 = vsel %vm1190, %v1183, %v1184
      %v1197 = vsel %vm1190, %v1182, %v1183
      %v1198 = vsel %vm1190, %v1181, %v1182
      %v1199 = vsel %vm1190, %v1180, %v1181
      %v1200 = vsel %vm1190, %v1179, %v1180
      %v1201 = vsel %vm1190, %v1178, %v1179
      %v1202 = vsel %vm1190, %v1177, %v1178
      %v1203 = vsel %vm1190, %v1176, %v1177
      %v1204 = vsel %vm1190, %v1175, %v1176
      %v1205 = vsel %vm1190, %v1174, %v1175
      %v1206 = vsel %vm1190, %v1173, %v1174
      %v1207 = vsel %vm1190, %v1172, %v1173
      %v1208 = vsel %vm1190, %v1171, %v1172
      %v1209 = vsel %vm1190, %v1170, %v1171
      %v1210 = vsel %vm1190, %v1169, %v1170
      %v1211 = vsel %vm1190, %v1168, %v1169
      %v1212 = vsel %vm1190, %v1167, %v1168
      %v1213 = vsel %vm1190, %v1166, %v1167
      %v1214 = vsel %vm1190, %v1165, %v1166
      %v1215 = vsel %vm1190, %v1164, %v1165
      %v1216 = vsel %vm1190, %v1163, %v1164
      %v1217 = vsel %vm1190, %v1162, %v1163
      %v1218 = vsel %vm1190, %v1161, %v1162
      %v1219 = vsel %vm1190, %v1160, %v1161
      %v1220 = vsel %vm1190, %v1159, %v1160
      %v1221 = vsel %vm1190, %v1158, %v1159
      %v1222 = vsel %vm1190, %v1189, %v1158
      %v1223 = vld [vmem:[#allocation2] sm:$0xff]
      %v1224 = vld [vmem:[#allocation2 + $0x8] sm:$0xff]
      %v1225 = vld [vmem:[#allocation2 + $0x10] sm:$0xff]
      %v1226 = vld [vmem:[#allocation2 + $0x18] sm:$0xff]
      %v1227 = vld [vmem:[#allocation2 + $0x20] sm:$0xff]
      %v1228 = vld [vmem:[#allocation2 + $0x28] sm:$0xff]
      %v1229 = vld [vmem:[#allocation2 + $0x30] sm:$0xff]
      %v1230 = vld [vmem:[#allocation2 + $0x38] sm:$0xff]
      %v1231 = vld [vmem:[#allocation2 + $0x40] sm:$0xff]
      %v1232 = vld [vmem:[#allocation2 + $0x48] sm:$0xff]
      %v1233 = vld [vmem:[#allocation2 + $0x50] sm:$0xff]
      %v1234 = vld [vmem:[#allocation2 + $0x58] sm:$0xff]
      %v1235 = vld [vmem:[#allocation2 + $0x60] sm:$0xff]
      %v1236 = vld [vmem:[#allocation2 + $0x68] sm:$0xff]
      %v1237 = vld [vmem:[#allocation2 + $0x70] sm:$0xff]
      %v1238 = vld [vmem:[#allocation2 + $0x78] sm:$0xff]
      %v1239 = vld [vmem:[#allocation2 + $0x80] sm:$0xff]
      %v1240 = vld [vmem:[#allocation2 + $0x88] sm:$0xff]
      %v1241 = vld [vmem:[#allocation2 + $0x90] sm:$0xff]
      %v1242 = vld [vmem:[#allocation2 + $0x98] sm:$0xff]
      %v1243 = vld [vmem:[#allocation2 + $0xa0] sm:$0xff]
      %v1244 = vld [vmem:[#allocation2 + $0xa8] sm:$0xff]
      %v1245 = vld [vmem:[#allocation2 + $0xb0] sm:$0xff]
      %v1246 = vld [vmem:[#allocation2 + $0xb8] sm:$0xff]
      %v1247 = vld [vmem:[#allocation2 + $0xc0] sm:$0xff]
      %v1248 = vld [vmem:[#allocation2 + $0xc8] sm:$0xff]
      %v1249 = vld [vmem:[#allocation2 + $0xd0] sm:$0xff]
      %v1250 = vld [vmem:[#allocation2 + $0xd8] sm:$0xff]
      %v1251 = vld [vmem:[#allocation2 + $0xe0] sm:$0xff]
      %v1252 = vld [vmem:[#allocation2 + $0xe8] sm:$0xff]
      %v1253 = vld [vmem:[#allocation2 + $0xf0] sm:$0xff]
      %v1254 = vld [vmem:[#allocation2 + $0xf8] sm:$0xff]
      %v1255 = vadd.f32 %v1223, %v1221
      %v1256 = vadd.f32 %v1224, %v1220
      %v1257 = vadd.f32 %v1225, %v1219
      %v1258 = vadd.f32 %v1226, %v1218
      %v1259 = vadd.f32 %v1227, %v1217
      %v1260 = vadd.f32 %v1228, %v1216
      %v1261 = vadd.f32 %v1229, %v1215
      %v1262 = vadd.f32 %v1230, %v1214
      %v1263 = vadd.f32 %v1231, %v1213
      %v1264 = vadd.f32 %v1232, %v1212
      %v1265 = vadd.f32 %v1233, %v1211
      %v1266 = vadd.f32 %v1234, %v1210
      %v1267 = vadd.f32 %v1235, %v1209
      %v1268 = vadd.f32 %v1236, %v1208
      %v1269 = vadd.f32 %v1237, %v1207
      %v1270 = vadd.f32 %v1238, %v1206
      %v1271 = vadd.f32 %v1239, %v1205
      %v1272 = vadd.f32 %v1240, %v1204
      %v1273 = vadd.f32 %v1241, %v1203
      %v1274 = vadd.f32 %v1242, %v1202
      %v1275 = vadd.f32 %v1243, %v1201
      %v1276 = vadd.f32 %v1244, %v1200
      %v1277 = vadd.f32 %v1245, %v1199
      %v1278 = vadd.f32 %v1246, %v1198
      %v1279 = vadd.f32 %v1247, %v1197
      %v1280 = vadd.f32 %v1248, %v1196
      %v1281 = vadd.f32 %v1249, %v1195
      %v1282 = vadd.f32 %v1250, %v1194
      %v1283 = vadd.f32 %v1251, %v1193
      %v1284 = vadd.f32 %v1252, %v1192
      %v1285 = vadd.f32 %v1253, %v1191
      %v1286 = vadd.f32 %v1254, %v1222
      %1287 = vst.msk [vmem:[#allocation2] sm:$0xff] %vm624, %v1255
      %1288 = vst.msk [vmem:[#allocation2 + $0x8] sm:$0xff] %vm624, %v1256
      %1289 = vst.msk [vmem:[#allocation2 + $0x10] sm:$0xff] %vm624, %v1257
      %1290 = vst.msk [vmem:[#allocation2 + $0x18] sm:$0xff] %vm624, %v1258
      %1291 = vst.msk [vmem:[#allocation2 + $0x20] sm:$0xff] %vm624, %v1259
      %1292 = vst.msk [vmem:[#allocation2 + $0x28] sm:$0xff] %vm624, %v1260
      %1293 = vst.msk [vmem:[#allocation2 + $0x30] sm:$0xff] %vm624, %v1261
      %1294 = vst.msk [vmem:[#allocation2 + $0x38] sm:$0xff] %vm624, %v1262
      %1295 = vst.msk [vmem:[#allocation2 + $0x40] sm:$0xff] %vm624, %v1263
      %1296 = vst.msk [vmem:[#allocation2 + $0x48] sm:$0xff] %vm624, %v1264
      %1297 = vst.msk [vmem:[#allocation2 + $0x50] sm:$0xff] %vm624, %v1265
      %1298 = vst.msk [vmem:[#allocation2 + $0x58] sm:$0xff] %vm624, %v1266
      %1299 = vst.msk [vmem:[#allocation2 + $0x60] sm:$0xff] %vm624, %v1267
      %1300 = vst.msk [vmem:[#allocation2 + $0x68] sm:$0xff] %vm624, %v1268
      %1301 = vst.msk [vmem:[#allocation2 + $0x70] sm:$0xff] %vm624, %v1269
      %1302 = vst.msk [vmem:[#allocation2 + $0x78] sm:$0xff] %vm624, %v1270
      %1303 = vst.msk [vmem:[#allocation2 + $0x80] sm:$0xff] %vm624, %v1271
      %1304 = vst.msk [vmem:[#allocation2 + $0x88] sm:$0xff] %vm624, %v1272
      %1305 = vst.msk [vmem:[#allocation2 + $0x90] sm:$0xff] %vm624, %v1273
      %1306 = vst.msk [vmem:[#allocation2 + $0x98] sm:$0xff] %vm624, %v1274
      %1307 = vst.msk [vmem:[#allocation2 + $0xa0] sm:$0xff] %vm624, %v1275
      %1308 = vst.msk [vmem:[#allocation2 + $0xa8] sm:$0xff] %vm624, %v1276
      %1309 = vst.msk [vmem:[#allocation2 + $0xb0] sm:$0xff] %vm624, %v1277
      %1310 = vst.msk [vmem:[#allocation2 + $0xb8] sm:$0xff] %vm624, %v1278
      %1311 = vst.msk [vmem:[#allocation2 + $0xc0] sm:$0xff] %vm624, %v1279
      %1312 = vst.msk [vmem:[#allocation2 + $0xc8] sm:$0xff] %vm624, %v1280
      %1313 = vst.msk [vmem:[#allocation2 + $0xd0] sm:$0xff] %vm624, %v1281
      %1314 = vst.msk [vmem:[#allocation2 + $0xd8] sm:$0xff] %vm624, %v1282
      %1315 = vst.msk [vmem:[#allocation2 + $0xe0] sm:$0xff] %vm624, %v1283
      %1316 = vst.msk [vmem:[#allocation2 + $0xe8] sm:$0xff] %vm624, %v1284
      %1317 = vst.msk [vmem:[#allocation2 + $0xf0] sm:$0xff] %vm624, %v1285
      %1318 = vst.msk [vmem:[#allocation2 + $0xf8] sm:$0xff] %vm624, %v1286
      %s1319 = sadd.s32 %s282, 1
      %s1320 = smul.u32 %s1319, 32
      %s1321 = sshra.s32 %s1320, 3
      %s1322 = sand.u32 %s1320, 7
      %s1323 = smul.addr %s1321, 4
      %s1324 = scalar_lea.vmem %s269, %s1323
      %v1325 = vld [vmem:[%s1324] sm:$0xf]
      %v1326 = vld [vmem:[%s1324 + $0x4] sm:$0xf]
      %v1327 = vld [vmem:[%s1324 + $0x8] sm:$0xf]
      %v1328 = vld [vmem:[%s1324 + $0xc] sm:$0xf]
      %v1329 = vld [vmem:[%s1324 + $0x10] sm:$0xf]
      %v1330 = vld [vmem:[%s1324 + $0x14] sm:$0xf]
      %v1331 = vld [vmem:[%s1324 + $0x18] sm:$0xf]
      %v1332 = vld [vmem:[%s1324 + $0x1c] sm:$0xf]
      %v1333 = vld [vmem:[%s1324 + $0x20] sm:$0xf]
      %v1334 = vld [vmem:[%s1324 + $0x24] sm:$0xf]
      %v1335 = vld [vmem:[%s1324 + $0x28] sm:$0xf]
      %v1336 = vld [vmem:[%s1324 + $0x2c] sm:$0xf]
      %v1337 = vld [vmem:[%s1324 + $0x30] sm:$0xf]
      %v1338 = vld [vmem:[%s1324 + $0x34] sm:$0xf]
      %v1339 = vld [vmem:[%s1324 + $0x38] sm:$0xf]
      %v1340 = vld [vmem:[%s1324 + $0x3c] sm:$0xf]
      %v1341 = vld [vmem:[%s1324 + $0x40] sm:$0xf]
      %v1342 = vld [vmem:[%s1324 + $0x44] sm:$0xf]
      %v1343 = vld [vmem:[%s1324 + $0x48] sm:$0xf]
      %v1344 = vld [vmem:[%s1324 + $0x4c] sm:$0xf]
      %v1345 = vld [vmem:[%s1324 + $0x50] sm:$0xf]
      %v1346 = vld [vmem:[%s1324 + $0x54] sm:$0xf]
      %v1347 = vld [vmem:[%s1324 + $0x58] sm:$0xf]
      %v1348 = vld [vmem:[%s1324 + $0x5c] sm:$0xf]
      %v1349 = vld [vmem:[%s1324 + $0x60] sm:$0xf]
      %v1350 = vld [vmem:[%s1324 + $0x64] sm:$0xf]
      %v1351 = vld [vmem:[%s1324 + $0x68] sm:$0xf]
      %v1352 = vld [vmem:[%s1324 + $0x6c] sm:$0xf]
      %v1353 = vld [vmem:[%s1324 + $0x70] sm:$0xf]
      %v1354 = vld [vmem:[%s1324 + $0x74] sm:$0xf]
      %v1355 = vld [vmem:[%s1324 + $0x78] sm:$0xf]
      %v1356 = vld [vmem:[%s1324 + $0x7c] sm:$0xf]
      %s1357 = scalar_lea.vmem %s3, 6
      %v1358 = vld [vmem:[%s1357] sm:$0x3]
      %v1359 = vunpack.c.l.bf16 %v1358
      %v1360 = vmul.f32 %v1359, %v326
      %v1361 = vpack.c.bf16 %v1360, %v1360
      %v1394 = vunpack.c.l.b16 %v1325
      %v1395 = vunpack.c.l.b16 %v1326
      %v1396 = vunpack.c.l.b16 %v1327
      %v1397 = vunpack.c.l.b16 %v1328
      %v1398 = vunpack.c.l.b16 %v1329
      %v1399 = vunpack.c.l.b16 %v1330
      %v1400 = vunpack.c.l.b16 %v1331
      %v1401 = vunpack.c.l.b16 %v1332
      %v1402 = vunpack.c.l.b16 %v1333
      %v1403 = vunpack.c.l.b16 %v1334
      %v1404 = vunpack.c.l.b16 %v1335
      %v1405 = vunpack.c.l.b16 %v1336
      %v1406 = vunpack.c.l.b16 %v1337
      %v1407 = vunpack.c.l.b16 %v1338
      %v1408 = vunpack.c.l.b16 %v1339
      %v1409 = vunpack.c.l.b16 %v1340
      %v1410 = vunpack.c.l.b16 %v1341
      %v1411 = vunpack.c.l.b16 %v1342
      %v1412 = vunpack.c.l.b16 %v1343
      %v1413 = vunpack.c.l.b16 %v1344
      %v1414 = vunpack.c.l.b16 %v1345
      %v1415 = vunpack.c.l.b16 %v1346
      %v1416 = vunpack.c.l.b16 %v1347
      %v1417 = vunpack.c.l.b16 %v1348
      %v1418 = vunpack.c.l.b16 %v1349
      %v1419 = vunpack.c.l.b16 %v1350
      %v1420 = vunpack.c.l.b16 %v1351
      %v1421 = vunpack.c.l.b16 %v1352
      %v1422 = vunpack.c.l.b16 %v1353
      %v1423 = vunpack.c.l.b16 %v1354
      %v1424 = vunpack.c.l.b16 %v1355
      %v1425 = vunpack.c.l.b16 %v1356
      %v1426 = vpack.c.b16 %v1395, %v1394
      %v1427 = vpack.c.b16 %v1397, %v1396
      %v1428 = vpack.c.b16 %v1399, %v1398
      %v1429 = vpack.c.b16 %v1401, %v1400
      %v1430 = vpack.c.b16 %v1403, %v1402
      %v1431 = vpack.c.b16 %v1405, %v1404
      %v1432 = vpack.c.b16 %v1407, %v1406
      %v1433 = vpack.c.b16 %v1409, %v1408
      %v1434 = vpack.c.b16 %v1411, %v1410
      %v1435 = vpack.c.b16 %v1413, %v1412
      %v1436 = vpack.c.b16 %v1415, %v1414
      %v1437 = vpack.c.b16 %v1417, %v1416
      %v1438 = vpack.c.b16 %v1419, %v1418
      %v1439 = vpack.c.b16 %v1421, %v1420
      %v1440 = vpack.c.b16 %v1423, %v1422
      %v1441 = vpack.c.b16 %v1425, %v1424
      %v1443 = vsel %vm410, %v1426, 0
      %v1446 = vsel %vm410, %v1427, 0
      %v1449 = vsel %vm410, %v1428, 0
      %v1452 = vsel %vm410, %v1429, 0
      %v1455 = vsel %vm410, %v1430, 0
      %v1458 = vsel %vm410, %v1431, 0
      %v1461 = vsel %vm410, %v1432, 0
      %v1464 = vsel %vm410, %v1433, 0
      %v1467 = vsel %vm410, %v1434, 0
      %v1470 = vsel %vm410, %v1435, 0
      %v1473 = vsel %vm410, %v1436, 0
      %v1476 = vsel %vm410, %v1437, 0
      %v1479 = vsel %vm410, %v1438, 0
      %v1482 = vsel %vm410, %v1439, 0
      %v1485 = vsel %vm410, %v1440, 0
      %v1488 = vsel %vm410, %v1441, 0
      %v1491 = vsel %vm459, %v1361, 0
      %1493 = vmatprep.subr.bf16.mxu0 0
      %1494 = vmatpush1.bf16.msra.mxu0 0
      %1495 = vmatprep.subr.bf16.mxu0 0
      %1496 = vmatpush1.bf16.msra.mxu0 0
      %1497 = vmatprep.subr.bf16.mxu0 0
      %1498 = vmatpush1.bf16.msra.mxu0 0
      %1499 = vmatprep.subr.bf16.mxu0 0
      %1500 = vmatpush1.bf16.msra.mxu0 0
      %1501 = vmatprep.subr.bf16.mxu0 0
      %1502 = vmatpush1.bf16.msra.mxu0 0
      %1503 = vmatprep.subr.bf16.mxu0 0
      %1504 = vmatpush1.bf16.msra.mxu0 0
      %1505 = vmatprep.subr.bf16.mxu0 0
      %1506 = vmatpush1.bf16.msra.mxu0 0
      %1507 = vmatprep.subr.bf16.mxu0 0
      %1508 = vmatpush1.bf16.msra.mxu0 %v1491
      %1509 = vmatprep.subr.bf16.mxu0 0
      %1510 = vmatpush2.bf16.msra.mxu0 0
      %1511 = vmatprep.subr.bf16.mxu0 0
      %1512 = vmatpush2.bf16.msra.mxu0 0
      %1513 = vmatprep.subr.bf16.mxu0 0
      %1514 = vmatpush2.bf16.msra.mxu0 0
      %1515 = vmatprep.subr.bf16.mxu0 0
      %1516 = vmatpush2.bf16.msra.mxu0 0
      %1517 = vmatprep.subr.bf16.mxu0 0
      %1518 = vmatpush2.bf16.msra.mxu0 0
      %1519 = vmatprep.subr.bf16.mxu0 0
      %1520 = vmatpush2.bf16.msra.mxu0 0
      %1521 = vmatprep.subr.bf16.mxu0 0
      %1522 = vmatpush2.bf16.msra.mxu0 0
      %1523 = vmatprep.subr.bf16.mxu0 0
      %1524 = vmatpush2.bf16.msra.mxu0 0
      %1525 = vmatprep.mubr.bf16.mxu0 0
      %1526 = vmatmul.mubr.bf16.gmra.mxu0 %v1443
      %v1527 = vpop.f32.mrf.mxu0
      %v1528 = vadd.f32 0.0, %v1527
      %v1529 = vpop.f32.mrf.mxu0
      %v1530 = vpop.f32.mrf.mxu0
      %v1531 = vadd.f32 0.0, %v1530
      %v1532 = vpop.f32.mrf.mxu0
      %1533 = vmatprep.mubr.bf16.mxu0 0
      %1534 = vmatmul.mubr.bf16.gmra.mxu0 %v1446
      %v1535 = vpop.f32.mrf.mxu0
      %v1536 = vadd.f32 0.0, %v1535
      %v1537 = vpop.f32.mrf.mxu0
      %v1538 = vpop.f32.mrf.mxu0
      %v1539 = vadd.f32 0.0, %v1538
      %v1540 = vpop.f32.mrf.mxu0
      %1541 = vmatprep.mubr.bf16.mxu0 0
      %1542 = vmatmul.mubr.bf16.gmra.mxu0 %v1449
      %v1543 = vpop.f32.mrf.mxu0
      %v1544 = vadd.f32 0.0, %v1543
      %v1545 = vpop.f32.mrf.mxu0
      %v1546 = vpop.f32.mrf.mxu0
      %v1547 = vadd.f32 0.0, %v1546
      %v1548 = vpop.f32.mrf.mxu0
      %1549 = vmatprep.mubr.bf16.mxu0 0
      %1550 = vmatmul.mubr.bf16.gmra.mxu0 %v1452
      %v1551 = vpop.f32.mrf.mxu0
      %v1552 = vadd.f32 0.0, %v1551
      %v1553 = vpop.f32.mrf.mxu0
      %v1554 = vpop.f32.mrf.mxu0
      %v1555 = vadd.f32 0.0, %v1554
      %v1556 = vpop.f32.mrf.mxu0
      %1557 = vmatprep.mubr.bf16.mxu0 0
      %1558 = vmatmul.mubr.bf16.gmra.mxu0 %v1455
      %v1559 = vpop.f32.mrf.mxu0
      %v1560 = vadd.f32 0.0, %v1559
      %v1561 = vpop.f32.mrf.mxu0
      %v1562 = vpop.f32.mrf.mxu0
      %v1563 = vadd.f32 0.0, %v1562
      %v1564 = vpop.f32.mrf.mxu0
      %1565 = vmatprep.mubr.bf16.mxu0 0
      %1566 = vmatmul.mubr.bf16.gmra.mxu0 %v1458
      %v1567 = vpop.f32.mrf.mxu0
      %v1568 = vadd.f32 0.0, %v1567
      %v1569 = vpop.f32.mrf.mxu0
      %v1570 = vpop.f32.mrf.mxu0
      %v1571 = vadd.f32 0.0, %v1570
      %v1572 = vpop.f32.mrf.mxu0
      %1573 = vmatprep.mubr.bf16.mxu0 0
      %1574 = vmatmul.mubr.bf16.gmra.mxu0 %v1461
      %v1575 = vpop.f32.mrf.mxu0
      %v1576 = vadd.f32 0.0, %v1575
      %v1577 = vpop.f32.mrf.mxu0
      %v1578 = vpop.f32.mrf.mxu0
      %v1579 = vadd.f32 0.0, %v1578
      %v1580 = vpop.f32.mrf.mxu0
      %1581 = vmatprep.mubr.bf16.mxu0 0
      %1582 = vmatmul.mubr.bf16.gmra.mxu0 %v1464
      %v1583 = vpop.f32.mrf.mxu0
      %v1584 = vadd.f32 0.0, %v1583
      %v1585 = vpop.f32.mrf.mxu0
      %v1586 = vpop.f32.mrf.mxu0
      %v1587 = vadd.f32 0.0, %v1586
      %v1588 = vpop.f32.mrf.mxu0
      %1589 = vmatprep.mubr.bf16.mxu0 0
      %1590 = vmatmul.mubr.bf16.gmra.mxu0 %v1467
      %v1591 = vpop.f32.mrf.mxu0
      %v1592 = vadd.f32 0.0, %v1591
      %v1593 = vpop.f32.mrf.mxu0
      %v1594 = vpop.f32.mrf.mxu0
      %v1595 = vadd.f32 0.0, %v1594
      %v1596 = vpop.f32.mrf.mxu0
      %1597 = vmatprep.mubr.bf16.mxu0 0
      %1598 = vmatmul.mubr.bf16.gmra.mxu0 %v1470
      %v1599 = vpop.f32.mrf.mxu0
      %v1600 = vadd.f32 0.0, %v1599
      %v1601 = vpop.f32.mrf.mxu0
      %v1602 = vpop.f32.mrf.mxu0
      %v1603 = vadd.f32 0.0, %v1602
      %v1604 = vpop.f32.mrf.mxu0
      %1605 = vmatprep.mubr.bf16.mxu0 0
      %1606 = vmatmul.mubr.bf16.gmra.mxu0 %v1473
      %v1607 = vpop.f32.mrf.mxu0
      %v1608 = vadd.f32 0.0, %v1607
      %v1609 = vpop.f32.mrf.mxu0
      %v1610 = vpop.f32.mrf.mxu0
      %v1611 = vadd.f32 0.0, %v1610
      %v1612 = vpop.f32.mrf.mxu0
      %1613 = vmatprep.mubr.bf16.mxu0 0
      %1614 = vmatmul.mubr.bf16.gmra.mxu0 %v1476
      %v1615 = vpop.f32.mrf.mxu0
      %v1616 = vadd.f32 0.0, %v1615
      %v1617 = vpop.f32.mrf.mxu0
      %v1618 = vpop.f32.mrf.mxu0
      %v1619 = vadd.f32 0.0, %v1618
      %v1620 = vpop.f32.mrf.mxu0
      %1621 = vmatprep.mubr.bf16.mxu0 0
      %1622 = vmatmul.mubr.bf16.gmra.mxu0 %v1479
      %v1623 = vpop.f32.mrf.mxu0
      %v1624 = vadd.f32 0.0, %v1623
      %v1625 = vpop.f32.mrf.mxu0
      %v1626 = vpop.f32.mrf.mxu0
      %v1627 = vadd.f32 0.0, %v1626
      %v1628 = vpop.f32.mrf.mxu0
      %1629 = vmatprep.mubr.bf16.mxu0 0
      %1630 = vmatmul.mubr.bf16.gmra.mxu0 %v1482
      %v1631 = vpop.f32.mrf.mxu0
      %v1632 = vadd.f32 0.0, %v1631
      %v1633 = vpop.f32.mrf.mxu0
      %v1634 = vpop.f32.mrf.mxu0
      %v1635 = vadd.f32 0.0, %v1634
      %v1636 = vpop.f32.mrf.mxu0
      %1637 = vmatprep.mubr.bf16.mxu0 0
      %1638 = vmatmul.mubr.bf16.gmra.mxu0 %v1485
      %v1639 = vpop.f32.mrf.mxu0
      %v1640 = vadd.f32 0.0, %v1639
      %v1641 = vpop.f32.mrf.mxu0
      %v1642 = vpop.f32.mrf.mxu0
      %v1643 = vadd.f32 0.0, %v1642
      %v1644 = vpop.f32.mrf.mxu0
      %1645 = vmatprep.mubr.bf16.mxu0 0
      %1646 = vmatmul.mubr.bf16.gmra.mxu0 %v1488
      %v1647 = vpop.f32.mrf.mxu0
      %v1648 = vadd.f32 0.0, %v1647
      %v1649 = vpop.f32.mrf.mxu0
      %v1650 = vpop.f32.mrf.mxu0
      %v1651 = vadd.f32 0.0, %v1650
      %v1652 = vpop.f32.mrf.mxu0
      %1653 = vdwg.mxu0
      %v1654 = vld [vmem:[#allocation2] sm:$0xff]
      %v1655 = vld [vmem:[#allocation2 + $0x8] sm:$0xff]
      %v1656 = vld [vmem:[#allocation2 + $0x10] sm:$0xff]
      %v1657 = vld [vmem:[#allocation2 + $0x18] sm:$0xff]
      %v1658 = vld [vmem:[#allocation2 + $0x20] sm:$0xff]
      %v1659 = vld [vmem:[#allocation2 + $0x28] sm:$0xff]
      %v1660 = vld [vmem:[#allocation2 + $0x30] sm:$0xff]
      %v1661 = vld [vmem:[#allocation2 + $0x38] sm:$0xff]
      %v1662 = vld [vmem:[#allocation2 + $0x40] sm:$0xff]
      %v1663 = vld [vmem:[#allocation2 + $0x48] sm:$0xff]
      %v1664 = vld [vmem:[#allocation2 + $0x50] sm:$0xff]
      %v1665 = vld [vmem:[#allocation2 + $0x58] sm:$0xff]
      %v1666 = vld [vmem:[#allocation2 + $0x60] sm:$0xff]
      %v1667 = vld [vmem:[#allocation2 + $0x68] sm:$0xff]
      %v1668 = vld [vmem:[#allocation2 + $0x70] sm:$0xff]
      %v1669 = vld [vmem:[#allocation2 + $0x78] sm:$0xff]
      %v1670 = vld [vmem:[#allocation2 + $0x80] sm:$0xff]
      %v1671 = vld [vmem:[#allocation2 + $0x88] sm:$0xff]
      %v1672 = vld [vmem:[#allocation2 + $0x90] sm:$0xff]
      %v1673 = vld [vmem:[#allocation2 + $0x98] sm:$0xff]
      %v1674 = vld [vmem:[#allocation2 + $0xa0] sm:$0xff]
      %v1675 = vld [vmem:[#allocation2 + $0xa8] sm:$0xff]
      %v1676 = vld [vmem:[#allocation2 + $0xb0] sm:$0xff]
      %v1677 = vld [vmem:[#allocation2 + $0xb8] sm:$0xff]
      %v1678 = vld [vmem:[#allocation2 + $0xc0] sm:$0xff]
      %v1679 = vld [vmem:[#allocation2 + $0xc8] sm:$0xff]
      %v1680 = vld [vmem:[#allocation2 + $0xd0] sm:$0xff]
      %v1681 = vld [vmem:[#allocation2 + $0xd8] sm:$0xff]
      %v1682 = vld [vmem:[#allocation2 + $0xe0] sm:$0xff]
      %v1683 = vld [vmem:[#allocation2 + $0xe8] sm:$0xff]
      %v1684 = vld [vmem:[#allocation2 + $0xf0] sm:$0xff]
      %v1685 = vld [vmem:[#allocation2 + $0xf8] sm:$0xff]
      %v1686 = vadd.f32 %v1654, %v1528
      %v1687 = vadd.f32 %v1655, %v1531
      %v1688 = vadd.f32 %v1656, %v1536
      %v1689 = vadd.f32 %v1657, %v1539
      %v1690 = vadd.f32 %v1658, %v1544
      %v1691 = vadd.f32 %v1659, %v1547
      %v1692 = vadd.f32 %v1660, %v1552
      %v1693 = vadd.f32 %v1661, %v1555
      %v1694 = vadd.f32 %v1662, %v1560
      %v1695 = vadd.f32 %v1663, %v1563
      %v1696 = vadd.f32 %v1664, %v1568
      %v1697 = vadd.f32 %v1665, %v1571
      %v1698 = vadd.f32 %v1666, %v1576
      %v1699 = vadd.f32 %v1667, %v1579
      %v1700 = vadd.f32 %v1668, %v1584
      %v1701 = vadd.f32 %v1669, %v1587
      %v1702 = vadd.f32 %v1670, %v1592
      %v1703 = vadd.f32 %v1671, %v1595
      %v1704 = vadd.f32 %v1672, %v1600
      %v1705 = vadd.f32 %v1673, %v1603
      %v1706 = vadd.f32 %v1674, %v1608
      %v1707 = vadd.f32 %v1675, %v1611
      %v1708 = vadd.f32 %v1676, %v1616
      %v1709 = vadd.f32 %v1677, %v1619
      %v1710 = vadd.f32 %v1678, %v1624
      %v1711 = vadd.f32 %v1679, %v1627
      %v1712 = vadd.f32 %v1680, %v1632
      %v1713 = vadd.f32 %v1681, %v1635
      %v1714 = vadd.f32 %v1682, %v1640
      %v1715 = vadd.f32 %v1683, %v1643
      %v1716 = vadd.f32 %v1684, %v1648
      %v1717 = vadd.f32 %v1685, %v1651
      %1718 = vst.msk [vmem:[#allocation2] sm:$0xff] %vm624, %v1686
      %1719 = vst.msk [vmem:[#allocation2 + $0x8] sm:$0xff] %vm624, %v1687
      %1720 = vst.msk [vmem:[#allocation2 + $0x10] sm:$0xff] %vm624, %v1688
      %1721 = vst.msk [vmem:[#allocation2 + $0x18] sm:$0xff] %vm624, %v1689
      %1722 = vst.msk [vmem:[#allocation2 + $0x20] sm:$0xff] %vm624, %v1690
      %1723 = vst.msk [vmem:[#allocation2 + $0x28] sm:$0xff] %vm624, %v1691
      %1724 = vst.msk [vmem:[#allocation2 + $0x30] sm:$0xff] %vm624, %v1692
      %1725 = vst.msk [vmem:[#allocation2 + $0x38] sm:$0xff] %vm624, %v1693
      %1726 = vst.msk [vmem:[#allocation2 + $0x40] sm:$0xff] %vm624, %v1694
      %1727 = vst.msk [vmem:[#allocation2 + $0x48] sm:$0xff] %vm624, %v1695
      %1728 = vst.msk [vmem:[#allocation2 + $0x50] sm:$0xff] %vm624, %v1696
      %1729 = vst.msk [vmem:[#allocation2 + $0x58] sm:$0xff] %vm624, %v1697
      %1730 = vst.msk [vmem:[#allocation2 + $0x60] sm:$0xff] %vm624, %v1698
      %1731 = vst.msk [vmem:[#allocation2 + $0x68] sm:$0xff] %vm624, %v1699
      %1732 = vst.msk [vmem:[#allocation2 + $0x70] sm:$0xff] %vm624, %v1700
      %1733 = vst.msk [vmem:[#allocation2 + $0x78] sm:$0xff] %vm624, %v1701
      %1734 = vst.msk [vmem:[#allocation2 + $0x80] sm:$0xff] %vm624, %v1702
      %1735 = vst.msk [vmem:[#allocation2 + $0x88] sm:$0xff] %vm624, %v1703
      %1736 = vst.msk [vmem:[#allocation2 + $0x90] sm:$0xff] %vm624, %v1704
      %1737 = vst.msk [vmem:[#allocation2 + $0x98] sm:$0xff] %vm624, %v1705
      %1738 = vst.msk [vmem:[#allocation2 + $0xa0] sm:$0xff] %vm624, %v1706
      %1739 = vst.msk [vmem:[#allocation2 + $0xa8] sm:$0xff] %vm624, %v1707
      %1740 = vst.msk [vmem:[#allocation2 + $0xb0] sm:$0xff] %vm624, %v1708
      %1741 = vst.msk [vmem:[#allocation2 + $0xb8] sm:$0xff] %vm624, %v1709
      %1742 = vst.msk [vmem:[#allocation2 + $0xc0] sm:$0xff] %vm624, %v1710
      %1743 = vst.msk [vmem:[#allocation2 + $0xc8] sm:$0xff] %vm624, %v1711
      %1744 = vst.msk [vmem:[#allocation2 + $0xd0] sm:$0xff] %vm624, %v1712
      %1745 = vst.msk [vmem:[#allocation2 + $0xd8] sm:$0xff] %vm624, %v1713
      %1746 = vst.msk [vmem:[#allocation2 + $0xe0] sm:$0xff] %vm624, %v1714
      %1747 = vst.msk [vmem:[#allocation2 + $0xe8] sm:$0xff] %vm624, %v1715
      %1748 = vst.msk [vmem:[#allocation2 + $0xf0] sm:$0xff] %vm624, %v1716
      %1749 = vst.msk [vmem:[#allocation2 + $0xf8] sm:$0xff] %vm624, %v1717
      %s1750 = scalar_lea.vmem %s3, 8
      %v1751 = vld [vmem:[%s1750] sm:$0x3]
      %v1752 = vunpack.c.l.bf16 %v1751
      %v1753 = vmul.f32 %v1752, %v326
      %v1754 = vpack.c.bf16 %v1753, %v1753
      %v1756 = vsel %vm459, %v1754, 0
      %1758 = vmatprep.subr.bf16.mxu0 0
      %1759 = vmatpush1.bf16.msra.mxu0 0
      %1760 = vmatprep.subr.bf16.mxu0 0
      %1761 = vmatpush1.bf16.msra.mxu0 0
      %1762 = vmatprep.subr.bf16.mxu0 0
      %1763 = vmatpush1.bf16.msra.mxu0 0
      %1764 = vmatprep.subr.bf16.mxu0 0
      %1765 = vmatpush1.bf16.msra.mxu0 0
      %1766 = vmatprep.subr.bf16.mxu0 0
      %1767 = vmatpush1.bf16.msra.mxu0 0
      %1768 = vmatprep.subr.bf16.mxu0 0
      %1769 = vmatpush1.bf16.msra.mxu0 0
      %1770 = vmatprep.subr.bf16.mxu0 0
      %1771 = vmatpush1.bf16.msra.mxu0 0
      %1772 = vmatprep.subr.bf16.mxu0 0
      %1773 = vmatpush1.bf16.msra.mxu0 %v1756
      %1774 = vmatprep.subr.bf16.mxu0 0
      %1775 = vmatpush2.bf16.msra.mxu0 0
      %1776 = vmatprep.subr.bf16.mxu0 0
      %1777 = vmatpush2.bf16.msra.mxu0 0
      %1778 = vmatprep.subr.bf16.mxu0 0
      %1779 = vmatpush2.bf16.msra.mxu0 0
      %1780 = vmatprep.subr.bf16.mxu0 0
      %1781 = vmatpush2.bf16.msra.mxu0 0
      %1782 = vmatprep.subr.bf16.mxu0 0
      %1783 = vmatpush2.bf16.msra.mxu0 0
      %1784 = vmatprep.subr.bf16.mxu0 0
      %1785 = vmatpush2.bf16.msra.mxu0 0
      %1786 = vmatprep.subr.bf16.mxu0 0
      %1787 = vmatpush2.bf16.msra.mxu0 0
      %1788 = vmatprep.subr.bf16.mxu0 0
      %1789 = vmatpush2.bf16.msra.mxu0 0
      %1790 = vmatprep.mubr.bf16.mxu0 0
      %1791 = vmatmul.mubr.bf16.gmra.mxu0 %v1443
      %v1792 = vpop.f32.mrf.mxu0
      %v1793 = vadd.f32 0.0, %v1792
      %v1794 = vpop.f32.mrf.mxu0
      %v1795 = vpop.f32.mrf.mxu0
      %v1796 = vadd.f32 0.0, %v1795
      %v1797 = vpop.f32.mrf.mxu0
      %1798 = vmatprep.mubr.bf16.mxu0 0
      %1799 = vmatmul.mubr.bf16.gmra.mxu0 %v1446
      %v1800 = vpop.f32.mrf.mxu0
      %v1801 = vadd.f32 0.0, %v1800
      %v1802 = vpop.f32.mrf.mxu0
      %v1803 = vpop.f32.mrf.mxu0
      %v1804 = vadd.f32 0.0, %v1803
      %v1805 = vpop.f32.mrf.mxu0
      %1806 = vmatprep.mubr.bf16.mxu0 0
      %1807 = vmatmul.mubr.bf16.gmra.mxu0 %v1449
      %v1808 = vpop.f32.mrf.mxu0
      %v1809 = vadd.f32 0.0, %v1808
      %v1810 = vpop.f32.mrf.mxu0
      %v1811 = vpop.f32.mrf.mxu0
      %v1812 = vadd.f32 0.0, %v1811
      %v1813 = vpop.f32.mrf.mxu0
      %1814 = vmatprep.mubr.bf16.mxu0 0
      %1815 = vmatmul.mubr.bf16.gmra.mxu0 %v1452
      %v1816 = vpop.f32.mrf.mxu0
      %v1817 = vadd.f32 0.0, %v1816
      %v1818 = vpop.f32.mrf.mxu0
      %v1819 = vpop.f32.mrf.mxu0
      %v1820 = vadd.f32 0.0, %v1819
      %v1821 = vpop.f32.mrf.mxu0
      %1822 = vmatprep.mubr.bf16.mxu0 0
      %1823 = vmatmul.mubr.bf16.gmra.mxu0 %v1455
      %v1824 = vpop.f32.mrf.mxu0
      %v1825 = vadd.f32 0.0, %v1824
      %v1826 = vpop.f32.mrf.mxu0
      %v1827 = vpop.f32.mrf.mxu0
      %v1828 = vadd.f32 0.0, %v1827
      %v1829 = vpop.f32.mrf.mxu0
      %1830 = vmatprep.mubr.bf16.mxu0 0
      %1831 = vmatmul.mubr.bf16.gmra.mxu0 %v1458
      %v1832 = vpop.f32.mrf.mxu0
      %v1833 = vadd.f32 0.0, %v1832
      %v1834 = vpop.f32.mrf.mxu0
      %v1835 = vpop.f32.mrf.mxu0
      %v1836 = vadd.f32 0.0, %v1835
      %v1837 = vpop.f32.mrf.mxu0
      %1838 = vmatprep.mubr.bf16.mxu0 0
      %1839 = vmatmul.mubr.bf16.gmra.mxu0 %v1461
      %v1840 = vpop.f32.mrf.mxu0
      %v1841 = vadd.f32 0.0, %v1840
      %v1842 = vpop.f32.mrf.mxu0
      %v1843 = vpop.f32.mrf.mxu0
      %v1844 = vadd.f32 0.0, %v1843
      %v1845 = vpop.f32.mrf.mxu0
      %1846 = vmatprep.mubr.bf16.mxu0 0
      %1847 = vmatmul.mubr.bf16.gmra.mxu0 %v1464
      %v1848 = vpop.f32.mrf.mxu0
      %v1849 = vadd.f32 0.0, %v1848
      %v1850 = vpop.f32.mrf.mxu0
      %v1851 = vpop.f32.mrf.mxu0
      %v1852 = vadd.f32 0.0, %v1851
      %v1853 = vpop.f32.mrf.mxu0
      %1854 = vmatprep.mubr.bf16.mxu0 0
      %1855 = vmatmul.mubr.bf16.gmra.mxu0 %v1467
      %v1856 = vpop.f32.mrf.mxu0
      %v1857 = vadd.f32 0.0, %v1856
      %v1858 = vpop.f32.mrf.mxu0
      %v1859 = vpop.f32.mrf.mxu0
      %v1860 = vadd.f32 0.0, %v1859
      %v1861 = vpop.f32.mrf.mxu0
      %1862 = vmatprep.mubr.bf16.mxu0 0
      %1863 = vmatmul.mubr.bf16.gmra.mxu0 %v1470
      %v1864 = vpop.f32.mrf.mxu0
      %v1865 = vadd.f32 0.0, %v1864
      %v1866 = vpop.f32.mrf.mxu0
      %v1867 = vpop.f32.mrf.mxu0
      %v1868 = vadd.f32 0.0, %v1867
      %v1869 = vpop.f32.mrf.mxu0
      %1870 = vmatprep.mubr.bf16.mxu0 0
      %1871 = vmatmul.mubr.bf16.gmra.mxu0 %v1473
      %v1872 = vpop.f32.mrf.mxu0
      %v1873 = vadd.f32 0.0, %v1872
      %v1874 = vpop.f32.mrf.mxu0
      %v1875 = vpop.f32.mrf.mxu0
      %v1876 = vadd.f32 0.0, %v1875
      %v1877 = vpop.f32.mrf.mxu0
      %1878 = vmatprep.mubr.bf16.mxu0 0
      %1879 = vmatmul.mubr.bf16.gmra.mxu0 %v1476
      %v1880 = vpop.f32.mrf.mxu0
      %v1881 = vadd.f32 0.0, %v1880
      %v1882 = vpop.f32.mrf.mxu0
      %v1883 = vpop.f32.mrf.mxu0
      %v1884 = vadd.f32 0.0, %v1883
      %v1885 = vpop.f32.mrf.mxu0
      %1886 = vmatprep.mubr.bf16.mxu0 0
      %1887 = vmatmul.mubr.bf16.gmra.mxu0 %v1479
      %v1888 = vpop.f32.mrf.mxu0
      %v1889 = vadd.f32 0.0, %v1888
      %v1890 = vpop.f32.mrf.mxu0
      %v1891 = vpop.f32.mrf.mxu0
      %v1892 = vadd.f32 0.0, %v1891
      %v1893 = vpop.f32.mrf.mxu0
      %1894 = vmatprep.mubr.bf16.mxu0 0
      %1895 = vmatmul.mubr.bf16.gmra.mxu0 %v1482
      %v1896 = vpop.f32.mrf.mxu0
      %v1897 = vadd.f32 0.0, %v1896
      %v1898 = vpop.f32.mrf.mxu0
      %v1899 = vpop.f32.mrf.mxu0
      %v1900 = vadd.f32 0.0, %v1899
      %v1901 = vpop.f32.mrf.mxu0
      %1902 = vmatprep.mubr.bf16.mxu0 0
      %1903 = vmatmul.mubr.bf16.gmra.mxu0 %v1485
      %v1904 = vpop.f32.mrf.mxu0
      %v1905 = vadd.f32 0.0, %v1904
      %v1906 = vpop.f32.mrf.mxu0
      %v1907 = vpop.f32.mrf.mxu0
      %v1908 = vadd.f32 0.0, %v1907
      %v1909 = vpop.f32.mrf.mxu0
      %1910 = vmatprep.mubr.bf16.mxu0 0
      %1911 = vmatmul.mubr.bf16.gmra.mxu0 %v1488
      %v1912 = vpop.f32.mrf.mxu0
      %v1913 = vadd.f32 0.0, %v1912
      %v1914 = vpop.f32.mrf.mxu0
      %v1915 = vpop.f32.mrf.mxu0
      %v1916 = vadd.f32 0.0, %v1915
      %v1917 = vpop.f32.mrf.mxu0
      %1918 = vdwg.mxu0
      %v1919 = vrot.slane %v1793, 1
      %v1920 = vrot.slane %v1796, 1
      %v1921 = vrot.slane %v1801, 1
      %v1922 = vrot.slane %v1804, 1
      %v1923 = vrot.slane %v1809, 1
      %v1924 = vrot.slane %v1812, 1
      %v1925 = vrot.slane %v1817, 1
      %v1926 = vrot.slane %v1820, 1
      %v1927 = vrot.slane %v1825, 1
      %v1928 = vrot.slane %v1828, 1
      %v1929 = vrot.slane %v1833, 1
      %v1930 = vrot.slane %v1836, 1
      %v1931 = vrot.slane %v1841, 1
      %v1932 = vrot.slane %v1844, 1
      %v1933 = vrot.slane %v1849, 1
      %v1934 = vrot.slane %v1852, 1
      %v1935 = vrot.slane %v1857, 1
      %v1936 = vrot.slane %v1860, 1
      %v1937 = vrot.slane %v1865, 1
      %v1938 = vrot.slane %v1868, 1
      %v1939 = vrot.slane %v1873, 1
      %v1940 = vrot.slane %v1876, 1
      %v1941 = vrot.slane %v1881, 1
      %v1942 = vrot.slane %v1884, 1
      %v1943 = vrot.slane %v1889, 1
      %v1944 = vrot.slane %v1892, 1
      %v1945 = vrot.slane %v1897, 1
      %v1946 = vrot.slane %v1900, 1
      %v1947 = vrot.slane %v1905, 1
      %v1948 = vrot.slane %v1908, 1
      %v1949 = vrot.slane %v1913, 1
      %v1950 = vrot.slane %v1916, 1
      %v1951 = vsel %vm860, %v1949, %v1950
      %v1952 = vsel %vm860, %v1948, %v1949
      %v1953 = vsel %vm860, %v1947, %v1948
      %v1954 = vsel %vm860, %v1946, %v1947
      %v1955 = vsel %vm860, %v1945, %v1946
      %v1956 = vsel %vm860, %v1944, %v1945
      %v1957 = vsel %vm860, %v1943, %v1944
      %v1958 = vsel %vm860, %v1942, %v1943
      %v1959 = vsel %vm860, %v1941, %v1942
      %v1960 = vsel %vm860, %v1940, %v1941
      %v1961 = vsel %vm860, %v1939, %v1940
      %v1962 = vsel %vm860, %v1938, %v1939
      %v1963 = vsel %vm860, %v1937, %v1938
      %v1964 = vsel %vm860, %v1936, %v1937
      %v1965 = vsel %vm860, %v1935, %v1936
      %v1966 = vsel %vm860, %v1934, %v1935
      %v1967 = vsel %vm860, %v1933, %v1934
      %v1968 = vsel %vm860, %v1932, %v1933
      %v1969 = vsel %vm860, %v1931, %v1932
      %v1970 = vsel %vm860, %v1930, %v1931
      %v1971 = vsel %vm860, %v1929, %v1930
      %v1972 = vsel %vm860, %v1928, %v1929
      %v1973 = vsel %vm860, %v1927, %v1928
      %v1974 = vsel %vm860, %v1926, %v1927
      %v1975 = vsel %vm860, %v1925, %v1926
      %v1976 = vsel %vm860, %v1924, %v1925
      %v1977 = vsel %vm860, %v1923, %v1924
      %v1978 = vsel %vm860, %v1922, %v1923
      %v1979 = vsel %vm860, %v1921, %v1922
      %v1980 = vsel %vm860, %v1920, %v1921
      %v1981 = vsel %vm860, %v1919, %v1920
      %v1982 = vsel %vm860, %v1950, %v1919
      %v1983 = vld [vmem:[#allocation2] sm:$0xff]
      %v1984 = vld [vmem:[#allocation2 + $0x8] sm:$0xff]
      %v1985 = vld [vmem:[#allocation2 + $0x10] sm:$0xff]
      %v1986 = vld [vmem:[#allocation2 + $0x18] sm:$0xff]
      %v1987 = vld [vmem:[#allocation2 + $0x20] sm:$0xff]
      %v1988 = vld [vmem:[#allocation2 + $0x28] sm:$0xff]
      %v1989 = vld [vmem:[#allocation2 + $0x30] sm:$0xff]
      %v1990 = vld [vmem:[#allocation2 + $0x38] sm:$0xff]
      %v1991 = vld [vmem:[#allocation2 + $0x40] sm:$0xff]
      %v1992 = vld [vmem:[#allocation2 + $0x48] sm:$0xff]
      %v1993 = vld [vmem:[#allocation2 + $0x50] sm:$0xff]
      %v1994 = vld [vmem:[#allocation2 + $0x58] sm:$0xff]
      %v1995 = vld [vmem:[#allocation2 + $0x60] sm:$0xff]
      %v1996 = vld [vmem:[#allocation2 + $0x68] sm:$0xff]
      %v1997 = vld [vmem:[#allocation2 + $0x70] sm:$0xff]
      %v1998 = vld [vmem:[#allocation2 + $0x78] sm:$0xff]
      %v1999 = vld [vmem:[#allocation2 + $0x80] sm:$0xff]
      %v2000 = vld [vmem:[#allocation2 + $0x88] sm:$0xff]
      %v2001 = vld [vmem:[#allocation2 + $0x90] sm:$0xff]
      %v2002 = vld [vmem:[#allocation2 + $0x98] sm:$0xff]
      %v2003 = vld [vmem:[#allocation2 + $0xa0] sm:$0xff]
      %v2004 = vld [vmem:[#allocation2 + $0xa8] sm:$0xff]
      %v2005 = vld [vmem:[#allocation2 + $0xb0] sm:$0xff]
      %v2006 = vld [vmem:[#allocation2 + $0xb8] sm:$0xff]
      %v2007 = vld [vmem:[#allocation2 + $0xc0] sm:$0xff]
      %v2008 = vld [vmem:[#allocation2 + $0xc8] sm:$0xff]
      %v2009 = vld [vmem:[#allocation2 + $0xd0] sm:$0xff]
      %v2010 = vld [vmem:[#allocation2 + $0xd8] sm:$0xff]
      %v2011 = vld [vmem:[#allocation2 + $0xe0] sm:$0xff]
      %v2012 = vld [vmem:[#allocation2 + $0xe8] sm:$0xff]
      %v2013 = vld [vmem:[#allocation2 + $0xf0] sm:$0xff]
      %v2014 = vld [vmem:[#allocation2 + $0xf8] sm:$0xff]
      %v2015 = vadd.f32 %v1983, %v1981
      %v2016 = vadd.f32 %v1984, %v1980
      %v2017 = vadd.f32 %v1985, %v1979
      %v2018 = vadd.f32 %v1986, %v1978
      %v2019 = vadd.f32 %v1987, %v1977
      %v2020 = vadd.f32 %v1988, %v1976
      %v2021 = vadd.f32 %v1989, %v1975
      %v2022 = vadd.f32 %v1990, %v1974
      %v2023 = vadd.f32 %v1991, %v1973
      %v2024 = vadd.f32 %v1992, %v1972
      %v2025 = vadd.f32 %v1993, %v1971
      %v2026 = vadd.f32 %v1994, %v1970
      %v2027 = vadd.f32 %v1995, %v1969
      %v2028 = vadd.f32 %v1996, %v1968
      %v2029 = vadd.f32 %v1997, %v1967
      %v2030 = vadd.f32 %v1998, %v1966
      %v2031 = vadd.f32 %v1999, %v1965
      %v2032 = vadd.f32 %v2000, %v1964
      %v2033 = vadd.f32 %v2001, %v1963
      %v2034 = vadd.f32 %v2002, %v1962
      %v2035 = vadd.f32 %v2003, %v1961
      %v2036 = vadd.f32 %v2004, %v1960
      %v2037 = vadd.f32 %v2005, %v1959
      %v2038 = vadd.f32 %v2006, %v1958
      %v2039 = vadd.f32 %v2007, %v1957
      %v2040 = vadd.f32 %v2008, %v1956
      %v2041 = vadd.f32 %v2009, %v1955
      %v2042 = vadd.f32 %v2010, %v1954
      %v2043 = vadd.f32 %v2011, %v1953
      %v2044 = vadd.f32 %v2012, %v1952
      %v2045 = vadd.f32 %v2013, %v1951
      %v2046 = vadd.f32 %v2014, %v1982
      %2047 = vst.msk [vmem:[#allocation2] sm:$0xff] %vm624, %v2015
      %2048 = vst.msk [vmem:[#allocation2 + $0x8] sm:$0xff] %vm624, %v2016
      %2049 = vst.msk [vmem:[#allocation2 + $0x10] sm:$0xff] %vm624, %v2017
      %2050 = vst.msk [vmem:[#allocation2 + $0x18] sm:$0xff] %vm624, %v2018
      %2051 = vst.msk [vmem:[#allocation2 + $0x20] sm:$0xff] %vm624, %v2019
      %2052 = vst.msk [vmem:[#allocation2 + $0x28] sm:$0xff] %vm624, %v2020
      %2053 = vst.msk [vmem:[#allocation2 + $0x30] sm:$0xff] %vm624, %v2021
      %2054 = vst.msk [vmem:[#allocation2 + $0x38] sm:$0xff] %vm624, %v2022
      %2055 = vst.msk [vmem:[#allocation2 + $0x40] sm:$0xff] %vm624, %v2023
      %2056 = vst.msk [vmem:[#allocation2 + $0x48] sm:$0xff] %vm624, %v2024
      %2057 = vst.msk [vmem:[#allocation2 + $0x50] sm:$0xff] %vm624, %v2025
      %2058 = vst.msk [vmem:[#allocation2 + $0x58] sm:$0xff] %vm624, %v2026
      %2059 = vst.msk [vmem:[#allocation2 + $0x60] sm:$0xff] %vm624, %v2027
      %2060 = vst.msk [vmem:[#allocation2 + $0x68] sm:$0xff] %vm624, %v2028
      %2061 = vst.msk [vmem:[#allocation2 + $0x70] sm:$0xff] %vm624, %v2029
      %2062 = vst.msk [vmem:[#allocation2 + $0x78] sm:$0xff] %vm624, %v2030
      %2063 = vst.msk [vmem:[#allocation2 + $0x80] sm:$0xff] %vm624, %v2031
      %2064 = vst.msk [vmem:[#allocation2 + $0x88] sm:$0xff] %vm624, %v2032
      %2065 = vst.msk [vmem:[#allocation2 + $0x90] sm:$0xff] %vm624, %v2033
      %2066 = vst.msk [vmem:[#allocation2 + $0x98] sm:$0xff] %vm624, %v2034
      %2067 = vst.msk [vmem:[#allocation2 + $0xa0] sm:$0xff] %vm624, %v2035
      %2068 = vst.msk [vmem:[#allocation2 + $0xa8] sm:$0xff] %vm624, %v2036
      %2069 = vst.msk [vmem:[#allocation2 + $0xb0] sm:$0xff] %vm624, %v2037
      %2070 = vst.msk [vmem:[#allocation2 + $0xb8] sm:$0xff] %vm624, %v2038
      %2071 = vst.msk [vmem:[#allocation2 + $0xc0] sm:$0xff] %vm624, %v2039
      %2072 = vst.msk [vmem:[#allocation2 + $0xc8] sm:$0xff] %vm624, %v2040
      %2073 = vst.msk [vmem:[#allocation2 + $0xd0] sm:$0xff] %vm624, %v2041
      %2074 = vst.msk [vmem:[#allocation2 + $0xd8] sm:$0xff] %vm624, %v2042
      %2075 = vst.msk [vmem:[#allocation2 + $0xe0] sm:$0xff] %vm624, %v2043
      %2076 = vst.msk [vmem:[#allocation2 + $0xe8] sm:$0xff] %vm624, %v2044
      %2077 = vst.msk [vmem:[#allocation2 + $0xf0] sm:$0xff] %vm624, %v2045
      %2078 = vst.msk [vmem:[#allocation2 + $0xf8] sm:$0xff] %vm624, %v2046
      %s2079 = scalar_lea.vmem %s3, 10
      %v2080 = vld [vmem:[%s2079] sm:$0x3]
      %v2081 = vunpack.c.l.bf16 %v2080
      %v2082 = vmul.f32 %v2081, %v326
      %v2083 = vpack.c.bf16 %v2082, %v2082
      %v2085 = vsel %vm459, %v2083, 0
      %2087 = vmatprep.subr.bf16.mxu0 0
      %2088 = vmatpush1.bf16.msra.mxu0 0
      %2089 = vmatprep.subr.bf16.mxu0 0
      %2090 = vmatpush1.bf16.msra.mxu0 0
      %2091 = vmatprep.subr.bf16.mxu0 0
      %2092 = vmatpush1.bf16.msra.mxu0 0
      %2093 = vmatprep.subr.bf16.mxu0 0
      %2094 = vmatpush1.bf16.msra.mxu0 0
      %2095 = vmatprep.subr.bf16.mxu0 0
      %2096 = vmatpush1.bf16.msra.mxu0 0
      %2097 = vmatprep.subr.bf16.mxu0 0
      %2098 = vmatpush1.bf16.msra.mxu0 0
      %2099 = vmatprep.subr.bf16.mxu0 0
      %2100 = vmatpush1.bf16.msra.mxu0 0
      %2101 = vmatprep.subr.bf16.mxu0 0
      %2102 = vmatpush1.bf16.msra.mxu0 %v2085
      %2103 = vmatprep.subr.bf16.mxu0 0
      %2104 = vmatpush2.bf16.msra.mxu0 0
      %2105 = vmatprep.subr.bf16.mxu0 0
      %2106 = vmatpush2.bf16.msra.mxu0 0
      %2107 = vmatprep.subr.bf16.mxu0 0
      %2108 = vmatpush2.bf16.msra.mxu0 0
      %2109 = vmatprep.subr.bf16.mxu0 0
      %2110 = vmatpush2.bf16.msra.mxu0 0
      %2111 = vmatprep.subr.bf16.mxu0 0
      %2112 = vmatpush2.bf16.msra.mxu0 0
      %2113 = vmatprep.subr.bf16.mxu0 0
      %2114 = vmatpush2.bf16.msra.mxu0 0
      %2115 = vmatprep.subr.bf16.mxu0 0
      %2116 = vmatpush2.bf16.msra.mxu0 0
      %2117 = vmatprep.subr.bf16.mxu0 0
      %2118 = vmatpush2.bf16.msra.mxu0 0
      %2119 = vmatprep.mubr.bf16.mxu0 0
      %2120 = vmatmul.mubr.bf16.gmra.mxu0 %v1443
      %v2121 = vpop.f32.mrf.mxu0
      %v2122 = vadd.f32 0.0, %v2121
      %v2123 = vpop.f32.mrf.mxu0
      %v2124 = vpop.f32.mrf.mxu0
      %v2125 = vadd.f32 0.0, %v2124
      %v2126 = vpop.f32.mrf.mxu0
      %2127 = vmatprep.mubr.bf16.mxu0 0
      %2128 = vmatmul.mubr.bf16.gmra.mxu0 %v1446
      %v2129 = vpop.f32.mrf.mxu0
      %v2130 = vadd.f32 0.0, %v2129
      %v2131 = vpop.f32.mrf.mxu0
      %v2132 = vpop.f32.mrf.mxu0
      %v2133 = vadd.f32 0.0, %v2132
      %v2134 = vpop.f32.mrf.mxu0
      %2135 = vmatprep.mubr.bf16.mxu0 0
      %2136 = vmatmul.mubr.bf16.gmra.mxu0 %v1449
      %v2137 = vpop.f32.mrf.mxu0
      %v2138 = vadd.f32 0.0, %v2137
      %v2139 = vpop.f32.mrf.mxu0
      %v2140 = vpop.f32.mrf.mxu0
      %v2141 = vadd.f32 0.0, %v2140
      %v2142 = vpop.f32.mrf.mxu0
      %2143 = vmatprep.mubr.bf16.mxu0 0
      %2144 = vmatmul.mubr.bf16.gmra.mxu0 %v1452
      %v2145 = vpop.f32.mrf.mxu0
      %v2146 = vadd.f32 0.0, %v2145
      %v2147 = vpop.f32.mrf.mxu0
      %v2148 = vpop.f32.mrf.mxu0
      %v2149 = vadd.f32 0.0, %v2148
      %v2150 = vpop.f32.mrf.mxu0
      %2151 = vmatprep.mubr.bf16.mxu0 0
      %2152 = vmatmul.mubr.bf16.gmra.mxu0 %v1455
      %v2153 = vpop.f32.mrf.mxu0
      %v2154 = vadd.f32 0.0, %v2153
      %v2155 = vpop.f32.mrf.mxu0
      %v2156 = vpop.f32.mrf.mxu0
      %v2157 = vadd.f32 0.0, %v2156
      %v2158 = vpop.f32.mrf.mxu0
      %2159 = vmatprep.mubr.bf16.mxu0 0
      %2160 = vmatmul.mubr.bf16.gmra.mxu0 %v1458
      %v2161 = vpop.f32.mrf.mxu0
      %v2162 = vadd.f32 0.0, %v2161
      %v2163 = vpop.f32.mrf.mxu0
      %v2164 = vpop.f32.mrf.mxu0
      %v2165 = vadd.f32 0.0, %v2164
      %v2166 = vpop.f32.mrf.mxu0
      %2167 = vmatprep.mubr.bf16.mxu0 0
      %2168 = vmatmul.mubr.bf16.gmra.mxu0 %v1461
      %v2169 = vpop.f32.mrf.mxu0
      %v2170 = vadd.f32 0.0, %v2169
      %v2171 = vpop.f32.mrf.mxu0
      %v2172 = vpop.f32.mrf.mxu0
      %v2173 = vadd.f32 0.0, %v2172
      %v2174 = vpop.f32.mrf.mxu0
      %2175 = vmatprep.mubr.bf16.mxu0 0
      %2176 = vmatmul.mubr.bf16.gmra.mxu0 %v1464
      %v2177 = vpop.f32.mrf.mxu0
      %v2178 = vadd.f32 0.0, %v2177
      %v2179 = vpop.f32.mrf.mxu0
      %v2180 = vpop.f32.mrf.mxu0
      %v2181 = vadd.f32 0.0, %v2180
      %v2182 = vpop.f32.mrf.mxu0
      %2183 = vmatprep.mubr.bf16.mxu0 0
      %2184 = vmatmul.mubr.bf16.gmra.mxu0 %v1467
      %v2185 = vpop.f32.mrf.mxu0
      %v2186 = vadd.f32 0.0, %v2185
      %v2187 = vpop.f32.mrf.mxu0
      %v2188 = vpop.f32.mrf.mxu0
      %v2189 = vadd.f32 0.0, %v2188
      %v2190 = vpop.f32.mrf.mxu0
      %2191 = vmatprep.mubr.bf16.mxu0 0
      %2192 = vmatmul.mubr.bf16.gmra.mxu0 %v1470
      %v2193 = vpop.f32.mrf.mxu0
      %v2194 = vadd.f32 0.0, %v2193
      %v2195 = vpop.f32.mrf.mxu0
      %v2196 = vpop.f32.mrf.mxu0
      %v2197 = vadd.f32 0.0, %v2196
      %v2198 = vpop.f32.mrf.mxu0
      %2199 = vmatprep.mubr.bf16.mxu0 0
      %2200 = vmatmul.mubr.bf16.gmra.mxu0 %v1473
      %v2201 = vpop.f32.mrf.mxu0
      %v2202 = vadd.f32 0.0, %v2201
      %v2203 = vpop.f32.mrf.mxu0
      %v2204 = vpop.f32.mrf.mxu0
      %v2205 = vadd.f32 0.0, %v2204
      %v2206 = vpop.f32.mrf.mxu0
      %2207 = vmatprep.mubr.bf16.mxu0 0
      %2208 = vmatmul.mubr.bf16.gmra.mxu0 %v1476
      %v2209 = vpop.f32.mrf.mxu0
      %v2210 = vadd.f32 0.0, %v2209
      %v2211 = vpop.f32.mrf.mxu0
      %v2212 = vpop.f32.mrf.mxu0
      %v2213 = vadd.f32 0.0, %v2212
      %v2214 = vpop.f32.mrf.mxu0
      %2215 = vmatprep.mubr.bf16.mxu0 0
      %2216 = vmatmul.mubr.bf16.gmra.mxu0 %v1479
      %v2217 = vpop.f32.mrf.mxu0
      %v2218 = vadd.f32 0.0, %v2217
      %v2219 = vpop.f32.mrf.mxu0
      %v2220 = vpop.f32.mrf.mxu0
      %v2221 = vadd.f32 0.0, %v2220
      %v2222 = vpop.f32.mrf.mxu0
      %2223 = vmatprep.mubr.bf16.mxu0 0
      %2224 = vmatmul.mubr.bf16.gmra.mxu0 %v1482
      %v2225 = vpop.f32.mrf.mxu0
      %v2226 = vadd.f32 0.0, %v2225
      %v2227 = vpop.f32.mrf.mxu0
      %v2228 = vpop.f32.mrf.mxu0
      %v2229 = vadd.f32 0.0, %v2228
      %v2230 = vpop.f32.mrf.mxu0
      %2231 = vmatprep.mubr.bf16.mxu0 0
      %2232 = vmatmul.mubr.bf16.gmra.mxu0 %v1485
      %v2233 = vpop.f32.mrf.mxu0
      %v2234 = vadd.f32 0.0, %v2233
      %v2235 = vpop.f32.mrf.mxu0
      %v2236 = vpop.f32.mrf.mxu0
      %v2237 = vadd.f32 0.0, %v2236
      %v2238 = vpop.f32.mrf.mxu0
      %2239 = vmatprep.mubr.bf16.mxu0 0
      %2240 = vmatmul.mubr.bf16.gmra.mxu0 %v1488
      %v2241 = vpop.f32.mrf.mxu0
      %v2242 = vadd.f32 0.0, %v2241
      %v2243 = vpop.f32.mrf.mxu0
      %v2244 = vpop.f32.mrf.mxu0
      %v2245 = vadd.f32 0.0, %v2244
      %v2246 = vpop.f32.mrf.mxu0
      %2247 = vdwg.mxu0
      %v2248 = vrot.slane %v2122, 2
      %v2249 = vrot.slane %v2125, 2
      %v2250 = vrot.slane %v2130, 2
      %v2251 = vrot.slane %v2133, 2
      %v2252 = vrot.slane %v2138, 2
      %v2253 = vrot.slane %v2141, 2
      %v2254 = vrot.slane %v2146, 2
      %v2255 = vrot.slane %v2149, 2
      %v2256 = vrot.slane %v2154, 2
      %v2257 = vrot.slane %v2157, 2
      %v2258 = vrot.slane %v2162, 2
      %v2259 = vrot.slane %v2165, 2
      %v2260 = vrot.slane %v2170, 2
      %v2261 = vrot.slane %v2173, 2
      %v2262 = vrot.slane %v2178, 2
      %v2263 = vrot.slane %v2181, 2
      %v2264 = vrot.slane %v2186, 2
      %v2265 = vrot.slane %v2189, 2
      %v2266 = vrot.slane %v2194, 2
      %v2267 = vrot.slane %v2197, 2
      %v2268 = vrot.slane %v2202, 2
      %v2269 = vrot.slane %v2205, 2
      %v2270 = vrot.slane %v2210, 2
      %v2271 = vrot.slane %v2213, 2
      %v2272 = vrot.slane %v2218, 2
      %v2273 = vrot.slane %v2221, 2
      %v2274 = vrot.slane %v2226, 2
      %v2275 = vrot.slane %v2229, 2
      %v2276 = vrot.slane %v2234, 2
      %v2277 = vrot.slane %v2237, 2
      %v2278 = vrot.slane %v2242, 2
      %v2279 = vrot.slane %v2245, 2
      %v2280 = vsel %vm1190, %v2278, %v2279
      %v2281 = vsel %vm1190, %v2277, %v2278
      %v2282 = vsel %vm1190, %v2276, %v2277
      %v2283 = vsel %vm1190, %v2275, %v2276
      %v2284 = vsel %vm1190, %v2274, %v2275
      %v2285 = vsel %vm1190, %v2273, %v2274
      %v2286 = vsel %vm1190, %v2272, %v2273
      %v2287 = vsel %vm1190, %v2271, %v2272
      %v2288 = vsel %vm1190, %v2270, %v2271
      %v2289 = vsel %vm1190, %v2269, %v2270
      %v2290 = vsel %vm1190, %v2268, %v2269
      %v2291 = vsel %vm1190, %v2267, %v2268
      %v2292 = vsel %vm1190, %v2266, %v2267
      %v2293 = vsel %vm1190, %v2265, %v2266
      %v2294 = vsel %vm1190, %v2264, %v2265
      %v2295 = vsel %vm1190, %v2263, %v2264
      %v2296 = vsel %vm1190, %v2262, %v2263
      %v2297 = vsel %vm1190, %v2261, %v2262
      %v2298 = vsel %vm1190, %v2260, %v2261
      %v2299 = vsel %vm1190, %v2259, %v2260
      %v2300 = vsel %vm1190, %v2258, %v2259
      %v2301 = vsel %vm1190, %v2257, %v2258
      %v2302 = vsel %vm1190, %v2256, %v2257
      %v2303 = vsel %vm1190, %v2255, %v2256
      %v2304 = vsel %vm1190, %v2254, %v2255
      %v2305 = vsel %vm1190, %v2253, %v2254
      %v2306 = vsel %vm1190, %v2252, %v2253
      %v2307 = vsel %vm1190, %v2251, %v2252
      %v2308 = vsel %vm1190, %v2250, %v2251
      %v2309 = vsel %vm1190, %v2249, %v2250
      %v2310 = vsel %vm1190, %v2248, %v2249
      %v2311 = vsel %vm1190, %v2279, %v2248
      %v2312 = vld [vmem:[#allocation2] sm:$0xff]
      %v2313 = vld [vmem:[#allocation2 + $0x8] sm:$0xff]
      %v2314 = vld [vmem:[#allocation2 + $0x10] sm:$0xff]
      %v2315 = vld [vmem:[#allocation2 + $0x18] sm:$0xff]
      %v2316 = vld [vmem:[#allocation2 + $0x20] sm:$0xff]
      %v2317 = vld [vmem:[#allocation2 + $0x28] sm:$0xff]
      %v2318 = vld [vmem:[#allocation2 + $0x30] sm:$0xff]
      %v2319 = vld [vmem:[#allocation2 + $0x38] sm:$0xff]
      %v2320 = vld [vmem:[#allocation2 + $0x40] sm:$0xff]
      %v2321 = vld [vmem:[#allocation2 + $0x48] sm:$0xff]
      %v2322 = vld [vmem:[#allocation2 + $0x50] sm:$0xff]
      %v2323 = vld [vmem:[#allocation2 + $0x58] sm:$0xff]
      %v2324 = vld [vmem:[#allocation2 + $0x60] sm:$0xff]
      %v2325 = vld [vmem:[#allocation2 + $0x68] sm:$0xff]
      %v2326 = vld [vmem:[#allocation2 + $0x70] sm:$0xff]
      %v2327 = vld [vmem:[#allocation2 + $0x78] sm:$0xff]
      %v2328 = vld [vmem:[#allocation2 + $0x80] sm:$0xff]
      %v2329 = vld [vmem:[#allocation2 + $0x88] sm:$0xff]
      %v2330 = vld [vmem:[#allocation2 + $0x90] sm:$0xff]
      %v2331 = vld [vmem:[#allocation2 + $0x98] sm:$0xff]
      %v2332 = vld [vmem:[#allocation2 + $0xa0] sm:$0xff]
      %v2333 = vld [vmem:[#allocation2 + $0xa8] sm:$0xff]
      %v2334 = vld [vmem:[#allocation2 + $0xb0] sm:$0xff]
      %v2335 = vld [vmem:[#allocation2 + $0xb8] sm:$0xff]
      %v2336 = vld [vmem:[#allocation2 + $0xc0] sm:$0xff]
      %v2337 = vld [vmem:[#allocation2 + $0xc8] sm:$0xff]
      %v2338 = vld [vmem:[#allocation2 + $0xd0] sm:$0xff]
      %v2339 = vld [vmem:[#allocation2 + $0xd8] sm:$0xff]
      %v2340 = vld [vmem:[#allocation2 + $0xe0] sm:$0xff]
      %v2341 = vld [vmem:[#allocation2 + $0xe8] sm:$0xff]
      %v2342 = vld [vmem:[#allocation2 + $0xf0] sm:$0xff]
      %v2343 = vld [vmem:[#allocation2 + $0xf8] sm:$0xff]
      %v2344 = vadd.f32 %v2312, %v2310
      %v2345 = vadd.f32 %v2313, %v2309
      %v2346 = vadd.f32 %v2314, %v2308
      %v2347 = vadd.f32 %v2315, %v2307
      %v2348 = vadd.f32 %v2316, %v2306
      %v2349 = vadd.f32 %v2317, %v2305
      %v2350 = vadd.f32 %v2318, %v2304
      %v2351 = vadd.f32 %v2319, %v2303
      %v2352 = vadd.f32 %v2320, %v2302
      %v2353 = vadd.f32 %v2321, %v2301
      %v2354 = vadd.f32 %v2322, %v2300
      %v2355 = vadd.f32 %v2323, %v2299
      %v2356 = vadd.f32 %v2324, %v2298
      %v2357 = vadd.f32 %v2325, %v2297
      %v2358 = vadd.f32 %v2326, %v2296
      %v2359 = vadd.f32 %v2327, %v2295
      %v2360 = vadd.f32 %v2328, %v2294
      %v2361 = vadd.f32 %v2329, %v2293
      %v2362 = vadd.f32 %v2330, %v2292
      %v2363 = vadd.f32 %v2331, %v2291
      %v2364 = vadd.f32 %v2332, %v2290
      %v2365 = vadd.f32 %v2333, %v2289
      %v2366 = vadd.f32 %v2334, %v2288
      %v2367 = vadd.f32 %v2335, %v2287
      %v2368 = vadd.f32 %v2336, %v2286
      %v2369 = vadd.f32 %v2337, %v2285
      %v2370 = vadd.f32 %v2338, %v2284
      %v2371 = vadd.f32 %v2339, %v2283
      %v2372 = vadd.f32 %v2340, %v2282
      %v2373 = vadd.f32 %v2341, %v2281
      %v2374 = vadd.f32 %v2342, %v2280
      %v2375 = vadd.f32 %v2343, %v2311
      %2376 = vst.msk [vmem:[#allocation2] sm:$0xff] %vm624, %v2344
      %2377 = vst.msk [vmem:[#allocation2 + $0x8] sm:$0xff] %vm624, %v2345
      %2378 = vst.msk [vmem:[#allocation2 + $0x10] sm:$0xff] %vm624, %v2346
      %2379 = vst.msk [vmem:[#allocation2 + $0x18] sm:$0xff] %vm624, %v2347
      %2380 = vst.msk [vmem:[#allocation2 + $0x20] sm:$0xff] %vm624, %v2348
      %2381 = vst.msk [vmem:[#allocation2 + $0x28] sm:$0xff] %vm624, %v2349
      %2382 = vst.msk [vmem:[#allocation2 + $0x30] sm:$0xff] %vm624, %v2350
      %2383 = vst.msk [vmem:[#allocation2 + $0x38] sm:$0xff] %vm624, %v2351
      %2384 = vst.msk [vmem:[#allocation2 + $0x40] sm:$0xff] %vm624, %v2352
      %2385 = vst.msk [vmem:[#allocation2 + $0x48] sm:$0xff] %vm624, %v2353
      %2386 = vst.msk [vmem:[#allocation2 + $0x50] sm:$0xff] %vm624, %v2354
      %2387 = vst.msk [vmem:[#allocation2 + $0x58] sm:$0xff] %vm624, %v2355
      %2388 = vst.msk [vmem:[#allocation2 + $0x60] sm:$0xff] %vm624, %v2356
      %2389 = vst.msk [vmem:[#allocation2 + $0x68] sm:$0xff] %vm624, %v2357
      %2390 = vst.msk [vmem:[#allocation2 + $0x70] sm:$0xff] %vm624, %v2358
      %2391 = vst.msk [vmem:[#allocation2 + $0x78] sm:$0xff] %vm624, %v2359
      %2392 = vst.msk [vmem:[#allocation2 + $0x80] sm:$0xff] %vm624, %v2360
      %2393 = vst.msk [vmem:[#allocation2 + $0x88] sm:$0xff] %vm624, %v2361
      %2394 = vst.msk [vmem:[#allocation2 + $0x90] sm:$0xff] %vm624, %v2362
      %2395 = vst.msk [vmem:[#allocation2 + $0x98] sm:$0xff] %vm624, %v2363
      %2396 = vst.msk [vmem:[#allocation2 + $0xa0] sm:$0xff] %vm624, %v2364
      %2397 = vst.msk [vmem:[#allocation2 + $0xa8] sm:$0xff] %vm624, %v2365
      %2398 = vst.msk [vmem:[#allocation2 + $0xb0] sm:$0xff] %vm624, %v2366
      %2399 = vst.msk [vmem:[#allocation2 + $0xb8] sm:$0xff] %vm624, %v2367
      %2400 = vst.msk [vmem:[#allocation2 + $0xc0] sm:$0xff] %vm624, %v2368
      %2401 = vst.msk [vmem:[#allocation2 + $0xc8] sm:$0xff] %vm624, %v2369
      %2402 = vst.msk [vmem:[#allocation2 + $0xd0] sm:$0xff] %vm624, %v2370
      %2403 = vst.msk [vmem:[#allocation2 + $0xd8] sm:$0xff] %vm624, %v2371
      %2404 = vst.msk [vmem:[#allocation2 + $0xe0] sm:$0xff] %vm624, %v2372
      %2405 = vst.msk [vmem:[#allocation2 + $0xe8] sm:$0xff] %vm624, %v2373
      %2406 = vst.msk [vmem:[#allocation2 + $0xf0] sm:$0xff] %vm624, %v2374
      %2407 = vst.msk [vmem:[#allocation2 + $0xf8] sm:$0xff] %vm624, %v2375
      %s2408 = sadd.s32 %s282, 2
      %s2409 = smul.u32 %s2408, 32
      %s2410 = sshra.s32 %s2409, 3
      %s2411 = sand.u32 %s2409, 7
      %s2412 = smul.addr %s2410, 4
      %s2413 = scalar_lea.vmem %s269, %s2412
      %v2414 = vld [vmem:[%s2413] sm:$0xf]
      %v2415 = vld [vmem:[%s2413 + $0x4] sm:$0xf]
      %v2416 = vld [vmem:[%s2413 + $0x8] sm:$0xf]
      %v2417 = vld [vmem:[%s2413 + $0xc] sm:$0xf]
      %v2418 = vld [vmem:[%s2413 + $0x10] sm:$0xf]
      %v2419 = vld [vmem:[%s2413 + $0x14] sm:$0xf]
      %v2420 = vld [vmem:[%s2413 + $0x18] sm:$0xf]
      %v2421 = vld [vmem:[%s2413 + $0x1c] sm:$0xf]
      %v2422 = vld [vmem:[%s2413 + $0x20] sm:$0xf]
      %v2423 = vld [vmem:[%s2413 + $0x24] sm:$0xf]
      %v2424 = vld [vmem:[%s2413 + $0x28] sm:$0xf]
      %v2425 = vld [vmem:[%s2413 + $0x2c] sm:$0xf]
      %v2426 = vld [vmem:[%s2413 + $0x30] sm:$0xf]
      %v2427 = vld [vmem:[%s2413 + $0x34] sm:$0xf]
      %v2428 = vld [vmem:[%s2413 + $0x38] sm:$0xf]
      %v2429 = vld [vmem:[%s2413 + $0x3c] sm:$0xf]
      %v2430 = vld [vmem:[%s2413 + $0x40] sm:$0xf]
      %v2431 = vld [vmem:[%s2413 + $0x44] sm:$0xf]
      %v2432 = vld [vmem:[%s2413 + $0x48] sm:$0xf]
      %v2433 = vld [vmem:[%s2413 + $0x4c] sm:$0xf]
      %v2434 = vld [vmem:[%s2413 + $0x50] sm:$0xf]
      %v2435 = vld [vmem:[%s2413 + $0x54] sm:$0xf]
      %v2436 = vld [vmem:[%s2413 + $0x58] sm:$0xf]
      %v2437 = vld [vmem:[%s2413 + $0x5c] sm:$0xf]
      %v2438 = vld [vmem:[%s2413 + $0x60] sm:$0xf]
      %v2439 = vld [vmem:[%s2413 + $0x64] sm:$0xf]
      %v2440 = vld [vmem:[%s2413 + $0x68] sm:$0xf]
      %v2441 = vld [vmem:[%s2413 + $0x6c] sm:$0xf]
      %v2442 = vld [vmem:[%s2413 + $0x70] sm:$0xf]
      %v2443 = vld [vmem:[%s2413 + $0x74] sm:$0xf]
      %v2444 = vld [vmem:[%s2413 + $0x78] sm:$0xf]
      %v2445 = vld [vmem:[%s2413 + $0x7c] sm:$0xf]
      %s2446 = scalar_lea.vmem %s3, 12
      %v2447 = vld [vmem:[%s2446] sm:$0x3]
      %v2448 = vunpack.c.l.bf16 %v2447
      %v2449 = vmul.f32 %v2448, %v326
      %v2450 = vpack.c.bf16 %v2449, %v2449
      %v2483 = vunpack.c.l.b16 %v2414
      %v2484 = vunpack.c.l.b16 %v2415
      %v2485 = vunpack.c.l.b16 %v2416
      %v2486 = vunpack.c.l.b16 %v2417
      %v2487 = vunpack.c.l.b16 %v2418
      %v2488 = vunpack.c.l.b16 %v2419
      %v2489 = vunpack.c.l.b16 %v2420
      %v2490 = vunpack.c.l.b16 %v2421
      %v2491 = vunpack.c.l.b16 %v2422
      %v2492 = vunpack.c.l.b16 %v2423
      %v2493 = vunpack.c.l.b16 %v2424
      %v2494 = vunpack.c.l.b16 %v2425
      %v2495 = vunpack.c.l.b16 %v2426
      %v2496 = vunpack.c.l.b16 %v2427
      %v2497 = vunpack.c.l.b16 %v2428
      %v2498 = vunpack.c.l.b16 %v2429
      %v2499 = vunpack.c.l.b16 %v2430
      %v2500 = vunpack.c.l.b16 %v2431
      %v2501 = vunpack.c.l.b16 %v2432
      %v2502 = vunpack.c.l.b16 %v2433
      %v2503 = vunpack.c.l.b16 %v2434
      %v2504 = vunpack.c.l.b16 %v2435
      %v2505 = vunpack.c.l.b16 %v2436
      %v2506 = vunpack.c.l.b16 %v2437
      %v2507 = vunpack.c.l.b16 %v2438
      %v2508 = vunpack.c.l.b16 %v2439
      %v2509 = vunpack.c.l.b16 %v2440
      %v2510 = vunpack.c.l.b16 %v2441
      %v2511 = vunpack.c.l.b16 %v2442
      %v2512 = vunpack.c.l.b16 %v2443
      %v2513 = vunpack.c.l.b16 %v2444
      %v2514 = vunpack.c.l.b16 %v2445
      %v2515 = vpack.c.b16 %v2484, %v2483
      %v2516 = vpack.c.b16 %v2486, %v2485
      %v2517 = vpack.c.b16 %v2488, %v2487
      %v2518 = vpack.c.b16 %v2490, %v2489
      %v2519 = vpack.c.b16 %v2492, %v2491
      %v2520 = vpack.c.b16 %v2494, %v2493
      %v2521 = vpack.c.b16 %v2496, %v2495
      %v2522 = vpack.c.b16 %v2498, %v2497
      %v2523 = vpack.c.b16 %v2500, %v2499
      %v2524 = vpack.c.b16 %v2502, %v2501
      %v2525 = vpack.c.b16 %v2504, %v2503
      %v2526 = vpack.c.b16 %v2506, %v2505
      %v2527 = vpack.c.b16 %v2508, %v2507
      %v2528 = vpack.c.b16 %v2510, %v2509
      %v2529 = vpack.c.b16 %v2512, %v2511
      %v2530 = vpack.c.b16 %v2514, %v2513
      %v2532 = vsel %vm410, %v2515, 0
      %v2535 = vsel %vm410, %v2516, 0
      %v2538 = vsel %vm410, %v2517, 0
      %v2541 = vsel %vm410, %v2518, 0
      %v2544 = vsel %vm410, %v2519, 0
      %v2547 = vsel %vm410, %v2520, 0
      %v2550 = vsel %vm410, %v2521, 0
      %v2553 = vsel %vm410, %v2522, 0
      %v2556 = vsel %vm410, %v2523, 0
      %v2559 = vsel %vm410, %v2524, 0
      %v2562 = vsel %vm410, %v2525, 0
      %v2565 = vsel %vm410, %v2526, 0
      %v2568 = vsel %vm410, %v2527, 0
      %v2571 = vsel %vm410, %v2528, 0
      %v2574 = vsel %vm410, %v2529, 0
      %v2577 = vsel %vm410, %v2530, 0
      %v2580 = vsel %vm459, %v2450, 0
      %2582 = vmatprep.subr.bf16.mxu0 0
      %2583 = vmatpush1.bf16.msra.mxu0 0
      %2584 = vmatprep.subr.bf16.mxu0 0
      %2585 = vmatpush1.bf16.msra.mxu0 0
      %2586 = vmatprep.subr.bf16.mxu0 0
      %2587 = vmatpush1.bf16.msra.mxu0 0
      %2588 = vmatprep.subr.bf16.mxu0 0
      %2589 = vmatpush1.bf16.msra.mxu0 0
      %2590 = vmatprep.subr.bf16.mxu0 0
      %2591 = vmatpush1.bf16.msra.mxu0 0
      %2592 = vmatprep.subr.bf16.mxu0 0
      %2593 = vmatpush1.bf16.msra.mxu0 0
      %2594 = vmatprep.subr.bf16.mxu0 0
      %2595 = vmatpush1.bf16.msra.mxu0 0
      %2596 = vmatprep.subr.bf16.mxu0 0
      %2597 = vmatpush1.bf16.msra.mxu0 %v2580
      %2598 = vmatprep.subr.bf16.mxu0 0
      %2599 = vmatpush2.bf16.msra.mxu0 0
      %2600 = vmatprep.subr.bf16.mxu0 0
      %2601 = vmatpush2.bf16.msra.mxu0 0
      %2602 = vmatprep.subr.bf16.mxu0 0
      %2603 = vmatpush2.bf16.msra.mxu0 0
      %2604 = vmatprep.subr.bf16.mxu0 0
      %2605 = vmatpush2.bf16.msra.mxu0 0
      %2606 = vmatprep.subr.bf16.mxu0 0
      %2607 = vmatpush2.bf16.msra.mxu0 0
      %2608 = vmatprep.subr.bf16.mxu0 0
      %2609 = vmatpush2.bf16.msra.mxu0 0
      %2610 = vmatprep.subr.bf16.mxu0 0
      %2611 = vmatpush2.bf16.msra.mxu0 0
      %2612 = vmatprep.subr.bf16.mxu0 0
      %2613 = vmatpush2.bf16.msra.mxu0 0
      %2614 = vmatprep.mubr.bf16.mxu0 0
      %2615 = vmatmul.mubr.bf16.gmra.mxu0 %v2532
      %v2616 = vpop.f32.mrf.mxu0
      %v2617 = vadd.f32 0.0, %v2616
      %v2618 = vpop.f32.mrf.mxu0
      %v2619 = vpop.f32.mrf.mxu0
      %v2620 = vadd.f32 0.0, %v2619
      %v2621 = vpop.f32.mrf.mxu0
      %2622 = vmatprep.mubr.bf16.mxu0 0
      %2623 = vmatmul.mubr.bf16.gmra.mxu0 %v2535
      %v2624 = vpop.f32.mrf.mxu0
      %v2625 = vadd.f32 0.0, %v2624
      %v2626 = vpop.f32.mrf.mxu0
      %v2627 = vpop.f32.mrf.mxu0
      %v2628 = vadd.f32 0.0, %v2627
      %v2629 = vpop.f32.mrf.mxu0
      %2630 = vmatprep.mubr.bf16.mxu0 0
      %2631 = vmatmul.mubr.bf16.gmra.mxu0 %v2538
      %v2632 = vpop.f32.mrf.mxu0
      %v2633 = vadd.f32 0.0, %v2632
      %v2634 = vpop.f32.mrf.mxu0
      %v2635 = vpop.f32.mrf.mxu0
      %v2636 = vadd.f32 0.0, %v2635
      %v2637 = vpop.f32.mrf.mxu0
      %2638 = vmatprep.mubr.bf16.mxu0 0
      %2639 = vmatmul.mubr.bf16.gmra.mxu0 %v2541
      %v2640 = vpop.f32.mrf.mxu0
      %v2641 = vadd.f32 0.0, %v2640
      %v2642 = vpop.f32.mrf.mxu0
      %v2643 = vpop.f32.mrf.mxu0
      %v2644 = vadd.f32 0.0, %v2643
      %v2645 = vpop.f32.mrf.mxu0
      %2646 = vmatprep.mubr.bf16.mxu0 0
      %2647 = vmatmul.mubr.bf16.gmra.mxu0 %v2544
      %v2648 = vpop.f32.mrf.mxu0
      %v2649 = vadd.f32 0.0, %v2648
      %v2650 = vpop.f32.mrf.mxu0
      %v2651 = vpop.f32.mrf.mxu0
      %v2652 = vadd.f32 0.0, %v2651
      %v2653 = vpop.f32.mrf.mxu0
      %2654 = vmatprep.mubr.bf16.mxu0 0
      %2655 = vmatmul.mubr.bf16.gmra.mxu0 %v2547
      %v2656 = vpop.f32.mrf.mxu0
      %v2657 = vadd.f32 0.0, %v2656
      %v2658 = vpop.f32.mrf.mxu0
      %v2659 = vpop.f32.mrf.mxu0
      %v2660 = vadd.f32 0.0, %v2659
      %v2661 = vpop.f32.mrf.mxu0
      %2662 = vmatprep.mubr.bf16.mxu0 0
      %2663 = vmatmul.mubr.bf16.gmra.mxu0 %v2550
      %v2664 = vpop.f32.mrf.mxu0
      %v2665 = vadd.f32 0.0, %v2664
      %v2666 = vpop.f32.mrf.mxu0
      %v2667 = vpop.f32.mrf.mxu0
      %v2668 = vadd.f32 0.0, %v2667
      %v2669 = vpop.f32.mrf.mxu0
      %2670 = vmatprep.mubr.bf16.mxu0 0
      %2671 = vmatmul.mubr.bf16.gmra.mxu0 %v2553
      %v2672 = vpop.f32.mrf.mxu0
      %v2673 = vadd.f32 0.0, %v2672
      %v2674 = vpop.f32.mrf.mxu0
      %v2675 = vpop.f32.mrf.mxu0
      %v2676 = vadd.f32 0.0, %v2675
      %v2677 = vpop.f32.mrf.mxu0
      %2678 = vmatprep.mubr.bf16.mxu0 0
      %2679 = vmatmul.mubr.bf16.gmra.mxu0 %v2556
      %v2680 = vpop.f32.mrf.mxu0
      %v2681 = vadd.f32 0.0, %v2680
      %v2682 = vpop.f32.mrf.mxu0
      %v2683 = vpop.f32.mrf.mxu0
      %v2684 = vadd.f32 0.0, %v2683
      %v2685 = vpop.f32.mrf.mxu0
      %2686 = vmatprep.mubr.bf16.mxu0 0
      %2687 = vmatmul.mubr.bf16.gmra.mxu0 %v2559
      %v2688 = vpop.f32.mrf.mxu0
      %v2689 = vadd.f32 0.0, %v2688
      %v2690 = vpop.f32.mrf.mxu0
      %v2691 = vpop.f32.mrf.mxu0
      %v2692 = vadd.f32 0.0, %v2691
      %v2693 = vpop.f32.mrf.mxu0
      %2694 = vmatprep.mubr.bf16.mxu0 0
      %2695 = vmatmul.mubr.bf16.gmra.mxu0 %v2562
      %v2696 = vpop.f32.mrf.mxu0
      %v2697 = vadd.f32 0.0, %v2696
      %v2698 = vpop.f32.mrf.mxu0
      %v2699 = vpop.f32.mrf.mxu0
      %v2700 = vadd.f32 0.0, %v2699
      %v2701 = vpop.f32.mrf.mxu0
      %2702 = vmatprep.mubr.bf16.mxu0 0
      %2703 = vmatmul.mubr.bf16.gmra.mxu0 %v2565
      %v2704 = vpop.f32.mrf.mxu0
      %v2705 = vadd.f32 0.0, %v2704
      %v2706 = vpop.f32.mrf.mxu0
      %v2707 = vpop.f32.mrf.mxu0
      %v2708 = vadd.f32 0.0, %v2707
      %v2709 = vpop.f32.mrf.mxu0
      %2710 = vmatprep.mubr.bf16.mxu0 0
      %2711 = vmatmul.mubr.bf16.gmra.mxu0 %v2568
      %v2712 = vpop.f32.mrf.mxu0
      %v2713 = vadd.f32 0.0, %v2712
      %v2714 = vpop.f32.mrf.mxu0
      %v2715 = vpop.f32.mrf.mxu0
      %v2716 = vadd.f32 0.0, %v2715
      %v2717 = vpop.f32.mrf.mxu0
      %2718 = vmatprep.mubr.bf16.mxu0 0
      %2719 = vmatmul.mubr.bf16.gmra.mxu0 %v2571
      %v2720 = vpop.f32.mrf.mxu0
      %v2721 = vadd.f32 0.0, %v2720
      %v2722 = vpop.f32.mrf.mxu0
      %v2723 = vpop.f32.mrf.mxu0
      %v2724 = vadd.f32 0.0, %v2723
      %v2725 = vpop.f32.mrf.mxu0
      %2726 = vmatprep.mubr.bf16.mxu0 0
      %2727 = vmatmul.mubr.bf16.gmra.mxu0 %v2574
      %v2728 = vpop.f32.mrf.mxu0
      %v2729 = vadd.f32 0.0, %v2728
      %v2730 = vpop.f32.mrf.mxu0
      %v2731 = vpop.f32.mrf.mxu0
      %v2732 = vadd.f32 0.0, %v2731
      %v2733 = vpop.f32.mrf.mxu0
      %2734 = vmatprep.mubr.bf16.mxu0 0
      %2735 = vmatmul.mubr.bf16.gmra.mxu0 %v2577
      %v2736 = vpop.f32.mrf.mxu0
      %v2737 = vadd.f32 0.0, %v2736
      %v2738 = vpop.f32.mrf.mxu0
      %v2739 = vpop.f32.mrf.mxu0
      %v2740 = vadd.f32 0.0, %v2739
      %v2741 = vpop.f32.mrf.mxu0
      %2742 = vdwg.mxu0
      %v2743 = vld [vmem:[#allocation2] sm:$0xff]
      %v2744 = vld [vmem:[#allocation2 + $0x8] sm:$0xff]
      %v2745 = vld [vmem:[#allocation2 + $0x10] sm:$0xff]
      %v2746 = vld [vmem:[#allocation2 + $0x18] sm:$0xff]
      %v2747 = vld [vmem:[#allocation2 + $0x20] sm:$0xff]
      %v2748 = vld [vmem:[#allocation2 + $0x28] sm:$0xff]
      %v2749 = vld [vmem:[#allocation2 + $0x30] sm:$0xff]
      %v2750 = vld [vmem:[#allocation2 + $0x38] sm:$0xff]
      %v2751 = vld [vmem:[#allocation2 + $0x40] sm:$0xff]
      %v2752 = vld [vmem:[#allocation2 + $0x48] sm:$0xff]
      %v2753 = vld [vmem:[#allocation2 + $0x50] sm:$0xff]
      %v2754 = vld [vmem:[#allocation2 + $0x58] sm:$0xff]
      %v2755 = vld [vmem:[#allocation2 + $0x60] sm:$0xff]
      %v2756 = vld [vmem:[#allocation2 + $0x68] sm:$0xff]
      %v2757 = vld [vmem:[#allocation2 + $0x70] sm:$0xff]
      %v2758 = vld [vmem:[#allocation2 + $0x78] sm:$0xff]
      %v2759 = vld [vmem:[#allocation2 + $0x80] sm:$0xff]
      %v2760 = vld [vmem:[#allocation2 + $0x88] sm:$0xff]
      %v2761 = vld [vmem:[#allocation2 + $0x90] sm:$0xff]
      %v2762 = vld [vmem:[#allocation2 + $0x98] sm:$0xff]
      %v2763 = vld [vmem:[#allocation2 + $0xa0] sm:$0xff]
      %v2764 = vld [vmem:[#allocation2 + $0xa8] sm:$0xff]
      %v2765 = vld [vmem:[#allocation2 + $0xb0] sm:$0xff]
      %v2766 = vld [vmem:[#allocation2 + $0xb8] sm:$0xff]
      %v2767 = vld [vmem:[#allocation2 + $0xc0] sm:$0xff]
      %v2768 = vld [vmem:[#allocation2 + $0xc8] sm:$0xff]
      %v2769 = vld [vmem:[#allocation2 + $0xd0] sm:$0xff]
      %v2770 = vld [vmem:[#allocation2 + $0xd8] sm:$0xff]
      %v2771 = vld [vmem:[#allocation2 + $0xe0] sm:$0xff]
      %v2772 = vld [vmem:[#allocation2 + $0xe8] sm:$0xff]
      %v2773 = vld [vmem:[#allocation2 + $0xf0] sm:$0xff]
      %v2774 = vld [vmem:[#allocation2 + $0xf8] sm:$0xff]
      %v2775 = vadd.f32 %v2743, %v2617
      %v2776 = vadd.f32 %v2744, %v2620
      %v2777 = vadd.f32 %v2745, %v2625
      %v2778 = vadd.f32 %v2746, %v2628
      %v2779 = vadd.f32 %v2747, %v2633
      %v2780 = vadd.f32 %v2748, %v2636
      %v2781 = vadd.f32 %v2749, %v2641
      %v2782 = vadd.f32 %v2750, %v2644
      %v2783 = vadd.f32 %v2751, %v2649
      %v2784 = vadd.f32 %v2752, %v2652
      %v2785 = vadd.f32 %v2753, %v2657
      %v2786 = vadd.f32 %v2754, %v2660
      %v2787 = vadd.f32 %v2755, %v2665
      %v2788 = vadd.f32 %v2756, %v2668
      %v2789 = vadd.f32 %v2757, %v2673
      %v2790 = vadd.f32 %v2758, %v2676
      %v2791 = vadd.f32 %v2759, %v2681
      %v2792 = vadd.f32 %v2760, %v2684
      %v2793 = vadd.f32 %v2761, %v2689
      %v2794 = vadd.f32 %v2762, %v2692
      %v2795 = vadd.f32 %v2763, %v2697
      %v2796 = vadd.f32 %v2764, %v2700
      %v2797 = vadd.f32 %v2765, %v2705
      %v2798 = vadd.f32 %v2766, %v2708
      %v2799 = vadd.f32 %v2767, %v2713
      %v2800 = vadd.f32 %v2768, %v2716
      %v2801 = vadd.f32 %v2769, %v2721
      %v2802 = vadd.f32 %v2770, %v2724
      %v2803 = vadd.f32 %v2771, %v2729
      %v2804 = vadd.f32 %v2772, %v2732
      %v2805 = vadd.f32 %v2773, %v2737
      %v2806 = vadd.f32 %v2774, %v2740
      %2807 = vst.msk [vmem:[#allocation2] sm:$0xff] %vm624, %v2775
      %2808 = vst.msk [vmem:[#allocation2 + $0x8] sm:$0xff] %vm624, %v2776
      %2809 = vst.msk [vmem:[#allocation2 + $0x10] sm:$0xff] %vm624, %v2777
      %2810 = vst.msk [vmem:[#allocation2 + $0x18] sm:$0xff] %vm624, %v2778
      %2811 = vst.msk [vmem:[#allocation2 + $0x20] sm:$0xff] %vm624, %v2779
      %2812 = vst.msk [vmem:[#allocation2 + $0x28] sm:$0xff] %vm624, %v2780
      %2813 = vst.msk [vmem:[#allocation2 + $0x30] sm:$0xff] %vm624, %v2781
      %2814 = vst.msk [vmem:[#allocation2 + $0x38] sm:$0xff] %vm624, %v2782
      %2815 = vst.msk [vmem:[#allocation2 + $0x40] sm:$0xff] %vm624, %v2783
      %2816 = vst.msk [vmem:[#allocation2 + $0x48] sm:$0xff] %vm624, %v2784
      %2817 = vst.msk [vmem:[#allocation2 + $0x50] sm:$0xff] %vm624, %v2785
      %2818 = vst.msk [vmem:[#allocation2 + $0x58] sm:$0xff] %vm624, %v2786
      %2819 = vst.msk [vmem:[#allocation2 + $0x60] sm:$0xff] %vm624, %v2787
      %2820 = vst.msk [vmem:[#allocation2 + $0x68] sm:$0xff] %vm624, %v2788
      %2821 = vst.msk [vmem:[#allocation2 + $0x70] sm:$0xff] %vm624, %v2789
      %2822 = vst.msk [vmem:[#allocation2 + $0x78] sm:$0xff] %vm624, %v2790
      %2823 = vst.msk [vmem:[#allocation2 + $0x80] sm:$0xff] %vm624, %v2791
      %2824 = vst.msk [vmem:[#allocation2 + $0x88] sm:$0xff] %vm624, %v2792
      %2825 = vst.msk [vmem:[#allocation2 + $0x90] sm:$0xff] %vm624, %v2793
      %2826 = vst.msk [vmem:[#allocation2 + $0x98] sm:$0xff] %vm624, %v2794
      %2827 = vst.msk [vmem:[#allocation2 + $0xa0] sm:$0xff] %vm624, %v2795
      %2828 = vst.msk [vmem:[#allocation2 + $0xa8] sm:$0xff] %vm624, %v2796
      %2829 = vst.msk [vmem:[#allocation2 + $0xb0] sm:$0xff] %vm624, %v2797
      %2830 = vst.msk [vmem:[#allocation2 + $0xb8] sm:$0xff] %vm624, %v2798
      %2831 = vst.msk [vmem:[#allocation2 + $0xc0] sm:$0xff] %vm624, %v2799
      %2832 = vst.msk [vmem:[#allocation2 + $0xc8] sm:$0xff] %vm624, %v2800
      %2833 = vst.msk [vmem:[#allocation2 + $0xd0] sm:$0xff] %vm624, %v2801
      %2834 = vst.msk [vmem:[#allocation2 + $0xd8] sm:$0xff] %vm624, %v2802
      %2835 = vst.msk [vmem:[#allocation2 + $0xe0] sm:$0xff] %vm624, %v2803
      %2836 = vst.msk [vmem:[#allocation2 + $0xe8] sm:$0xff] %vm624, %v2804
      %2837 = vst.msk [vmem:[#allocation2 + $0xf0] sm:$0xff] %vm624, %v2805
      %2838 = vst.msk [vmem:[#allocation2 + $0xf8] sm:$0xff] %vm624, %v2806
      %s2839 = scalar_lea.vmem %s3, 14
      %v2840 = vld [vmem:[%s2839] sm:$0x3]
      %v2841 = vunpack.c.l.bf16 %v2840
      %v2842 = vmul.f32 %v2841, %v326
      %v2843 = vpack.c.bf16 %v2842, %v2842
      %v2845 = vsel %vm459, %v2843, 0
      %2847 = vmatprep.subr.bf16.mxu0 0
      %2848 = vmatpush1.bf16.msra.mxu0 0
      %2849 = vmatprep.subr.bf16.mxu0 0
      %2850 = vmatpush1.bf16.msra.mxu0 0
      %2851 = vmatprep.subr.bf16.mxu0 0
      %2852 = vmatpush1.bf16.msra.mxu0 0
      %2853 = vmatprep.subr.bf16.mxu0 0
      %2854 = vmatpush1.bf16.msra.mxu0 0
      %2855 = vmatprep.subr.bf16.mxu0 0
      %2856 = vmatpush1.bf16.msra.mxu0 0
      %2857 = vmatprep.subr.bf16.mxu0 0
      %2858 = vmatpush1.bf16.msra.mxu0 0
      %2859 = vmatprep.subr.bf16.mxu0 0
      %2860 = vmatpush1.bf16.msra.mxu0 0
      %2861 = vmatprep.subr.bf16.mxu0 0
      %2862 = vmatpush1.bf16.msra.mxu0 %v2845
      %2863 = vmatprep.subr.bf16.mxu0 0
      %2864 = vmatpush2.bf16.msra.mxu0 0
      %2865 = vmatprep.subr.bf16.mxu0 0
      %2866 = vmatpush2.bf16.msra.mxu0 0
      %2867 = vmatprep.subr.bf16.mxu0 0
      %2868 = vmatpush2.bf16.msra.mxu0 0
      %2869 = vmatprep.subr.bf16.mxu0 0
      %2870 = vmatpush2.bf16.msra.mxu0 0
      %2871 = vmatprep.subr.bf16.mxu0 0
      %2872 = vmatpush2.bf16.msra.mxu0 0
      %2873 = vmatprep.subr.bf16.mxu0 0
      %2874 = vmatpush2.bf16.msra.mxu0 0
      %2875 = vmatprep.subr.bf16.mxu0 0
      %2876 = vmatpush2.bf16.msra.mxu0 0
      %2877 = vmatprep.subr.bf16.mxu0 0
      %2878 = vmatpush2.bf16.msra.mxu0 0
      %2879 = vmatprep.mubr.bf16.mxu0 0
      %2880 = vmatmul.mubr.bf16.gmra.mxu0 %v2532
      %v2881 = vpop.f32.mrf.mxu0
      %v2882 = vadd.f32 0.0, %v2881
      %v2883 = vpop.f32.mrf.mxu0
      %v2884 = vpop.f32.mrf.mxu0
      %v2885 = vadd.f32 0.0, %v2884
      %v2886 = vpop.f32.mrf.mxu0
      %2887 = vmatprep.mubr.bf16.mxu0 0
      %2888 = vmatmul.mubr.bf16.gmra.mxu0 %v2535
      %v2889 = vpop.f32.mrf.mxu0
      %v2890 = vadd.f32 0.0, %v2889
      %v2891 = vpop.f32.mrf.mxu0
      %v2892 = vpop.f32.mrf.mxu0
      %v2893 = vadd.f32 0.0, %v2892
      %v2894 = vpop.f32.mrf.mxu0
      %2895 = vmatprep.mubr.bf16.mxu0 0
      %2896 = vmatmul.mubr.bf16.gmra.mxu0 %v2538
      %v2897 = vpop.f32.mrf.mxu0
      %v2898 = vadd.f32 0.0, %v2897
      %v2899 = vpop.f32.mrf.mxu0
      %v2900 = vpop.f32.mrf.mxu0
      %v2901 = vadd.f32 0.0, %v2900
      %v2902 = vpop.f32.mrf.mxu0
      %2903 = vmatprep.mubr.bf16.mxu0 0
      %2904 = vmatmul.mubr.bf16.gmra.mxu0 %v2541
      %v2905 = vpop.f32.mrf.mxu0
      %v2906 = vadd.f32 0.0, %v2905
      %v2907 = vpop.f32.mrf.mxu0
      %v2908 = vpop.f32.mrf.mxu0
      %v2909 = vadd.f32 0.0, %v2908
      %v2910 = vpop.f32.mrf.mxu0
      %2911 = vmatprep.mubr.bf16.mxu0 0
      %2912 = vmatmul.mubr.bf16.gmra.mxu0 %v2544
      %v2913 = vpop.f32.mrf.mxu0
      %v2914 = vadd.f32 0.0, %v2913
      %v2915 = vpop.f32.mrf.mxu0
      %v2916 = vpop.f32.mrf.mxu0
      %v2917 = vadd.f32 0.0, %v2916
      %v2918 = vpop.f32.mrf.mxu0
      %2919 = vmatprep.mubr.bf16.mxu0 0
      %2920 = vmatmul.mubr.bf16.gmra.mxu0 %v2547
      %v2921 = vpop.f32.mrf.mxu0
      %v2922 = vadd.f32 0.0, %v2921
      %v2923 = vpop.f32.mrf.mxu0
      %v2924 = vpop.f32.mrf.mxu0
      %v2925 = vadd.f32 0.0, %v2924
      %v2926 = vpop.f32.mrf.mxu0
      %2927 = vmatprep.mubr.bf16.mxu0 0
      %2928 = vmatmul.mubr.bf16.gmra.mxu0 %v2550
      %v2929 = vpop.f32.mrf.mxu0
      %v2930 = vadd.f32 0.0, %v2929
      %v2931 = vpop.f32.mrf.mxu0
      %v2932 = vpop.f32.mrf.mxu0
      %v2933 = vadd.f32 0.0, %v2932
      %v2934 = vpop.f32.mrf.mxu0
      %2935 = vmatprep.mubr.bf16.mxu0 0
      %2936 = vmatmul.mubr.bf16.gmra.mxu0 %v2553
      %v2937 = vpop.f32.mrf.mxu0
      %v2938 = vadd.f32 0.0, %v2937
      %v2939 = vpop.f32.mrf.mxu0
      %v2940 = vpop.f32.mrf.mxu0
      %v2941 = vadd.f32 0.0, %v2940
      %v2942 = vpop.f32.mrf.mxu0
      %2943 = vmatprep.mubr.bf16.mxu0 0
      %2944 = vmatmul.mubr.bf16.gmra.mxu0 %v2556
      %v2945 = vpop.f32.mrf.mxu0
      %v2946 = vadd.f32 0.0, %v2945
      %v2947 = vpop.f32.mrf.mxu0
      %v2948 = vpop.f32.mrf.mxu0
      %v2949 = vadd.f32 0.0, %v2948
      %v2950 = vpop.f32.mrf.mxu0
      %2951 = vmatprep.mubr.bf16.mxu0 0
      %2952 = vmatmul.mubr.bf16.gmra.mxu0 %v2559
      %v2953 = vpop.f32.mrf.mxu0
      %v2954 = vadd.f32 0.0, %v2953
      %v2955 = vpop.f32.mrf.mxu0
      %v2956 = vpop.f32.mrf.mxu0
      %v2957 = vadd.f32 0.0, %v2956
      %v2958 = vpop.f32.mrf.mxu0
      %2959 = vmatprep.mubr.bf16.mxu0 0
      %2960 = vmatmul.mubr.bf16.gmra.mxu0 %v2562
      %v2961 = vpop.f32.mrf.mxu0
      %v2962 = vadd.f32 0.0, %v2961
      %v2963 = vpop.f32.mrf.mxu0
      %v2964 = vpop.f32.mrf.mxu0
      %v2965 = vadd.f32 0.0, %v2964
      %v2966 = vpop.f32.mrf.mxu0
      %2967 = vmatprep.mubr.bf16.mxu0 0
      %2968 = vmatmul.mubr.bf16.gmra.mxu0 %v2565
      %v2969 = vpop.f32.mrf.mxu0
      %v2970 = vadd.f32 0.0, %v2969
      %v2971 = vpop.f32.mrf.mxu0
      %v2972 = vpop.f32.mrf.mxu0
      %v2973 = vadd.f32 0.0, %v2972
      %v2974 = vpop.f32.mrf.mxu0
      %2975 = vmatprep.mubr.bf16.mxu0 0
      %2976 = vmatmul.mubr.bf16.gmra.mxu0 %v2568
      %v2977 = vpop.f32.mrf.mxu0
      %v2978 = vadd.f32 0.0, %v2977
      %v2979 = vpop.f32.mrf.mxu0
      %v2980 = vpop.f32.mrf.mxu0
      %v2981 = vadd.f32 0.0, %v2980
      %v2982 = vpop.f32.mrf.mxu0
      %2983 = vmatprep.mubr.bf16.mxu0 0
      %2984 = vmatmul.mubr.bf16.gmra.mxu0 %v2571
      %v2985 = vpop.f32.mrf.mxu0
      %v2986 = vadd.f32 0.0, %v2985
      %v2987 = vpop.f32.mrf.mxu0
      %v2988 = vpop.f32.mrf.mxu0
      %v2989 = vadd.f32 0.0, %v2988
      %v2990 = vpop.f32.mrf.mxu0
      %2991 = vmatprep.mubr.bf16.mxu0 0
      %2992 = vmatmul.mubr.bf16.gmra.mxu0 %v2574
      %v2993 = vpop.f32.mrf.mxu0
      %v2994 = vadd.f32 0.0, %v2993
      %v2995 = vpop.f32.mrf.mxu0
      %v2996 = vpop.f32.mrf.mxu0
      %v2997 = vadd.f32 0.0, %v2996
      %v2998 = vpop.f32.mrf.mxu0
      %2999 = vmatprep.mubr.bf16.mxu0 0
      %3000 = vmatmul.mubr.bf16.gmra.mxu0 %v2577
      %v3001 = vpop.f32.mrf.mxu0
      %v3002 = vadd.f32 0.0, %v3001
      %v3003 = vpop.f32.mrf.mxu0
      %v3004 = vpop.f32.mrf.mxu0
      %v3005 = vadd.f32 0.0, %v3004
      %v3006 = vpop.f32.mrf.mxu0
      %3007 = vdwg.mxu0
      %v3008 = vrot.slane %v2882, 1
      %v3009 = vrot.slane %v2885, 1
      %v3010 = vrot.slane %v2890, 1
      %v3011 = vrot.slane %v2893, 1
      %v3012 = vrot.slane %v2898, 1
      %v3013 = vrot.slane %v2901, 1
      %v3014 = vrot.slane %v2906, 1
      %v3015 = vrot.slane %v2909, 1
      %v3016 = vrot.slane %v2914, 1
      %v3017 = vrot.slane %v2917, 1
      %v3018 = vrot.slane %v2922, 1
      %v3019 = vrot.slane %v2925, 1
      %v3020 = vrot.slane %v2930, 1
      %v3021 = vrot.slane %v2933, 1
      %v3022 = vrot.slane %v2938, 1
      %v3023 = vrot.slane %v2941, 1
      %v3024 = vrot.slane %v2946, 1
      %v3025 = vrot.slane %v2949, 1
      %v3026 = vrot.slane %v2954, 1
      %v3027 = vrot.slane %v2957, 1
      %v3028 = vrot.slane %v2962, 1
      %v3029 = vrot.slane %v2965, 1
      %v3030 = vrot.slane %v2970, 1
      %v3031 = vrot.slane %v2973, 1
      %v3032 = vrot.slane %v2978, 1
      %v3033 = vrot.slane %v2981, 1
      %v3034 = vrot.slane %v2986, 1
      %v3035 = vrot.slane %v2989, 1
      %v3036 = vrot.slane %v2994, 1
      %v3037 = vrot.slane %v2997, 1
      %v3038 = vrot.slane %v3002, 1
      %v3039 = vrot.slane %v3005, 1
      %v3040 = vsel %vm860, %v3038, %v3039
      %v3041 = vsel %vm860, %v3037, %v3038
      %v3042 = vsel %vm860, %v3036, %v3037
      %v3043 = vsel %vm860, %v3035, %v3036
      %v3044 = vsel %vm860, %v3034, %v3035
      %v3045 = vsel %vm860, %v3033, %v3034
      %v3046 = vsel %vm860, %v3032, %v3033
      %v3047 = vsel %vm860, %v3031, %v3032
      %v3048 = vsel %vm860, %v3030, %v3031
      %v3049 = vsel %vm860, %v3029, %v3030
      %v3050 = vsel %vm860, %v3028, %v3029
      %v3051 = vsel %vm860, %v3027, %v3028
      %v3052 = vsel %vm860, %v3026, %v3027
      %v3053 = vsel %vm860, %v3025, %v3026
      %v3054 = vsel %vm860, %v3024, %v3025
      %v3055 = vsel %vm860, %v3023, %v3024
      %v3056 = vsel %vm860, %v3022, %v3023
      %v3057 = vsel %vm860, %v3021, %v3022
      %v3058 = vsel %vm860, %v3020, %v3021
      %v3059 = vsel %vm860, %v3019, %v3020
      %v3060 = vsel %vm860, %v3018, %v3019
      %v3061 = vsel %vm860, %v3017, %v3018
      %v3062 = vsel %vm860, %v3016, %v3017
      %v3063 = vsel %vm860, %v3015, %v3016
      %v3064 = vsel %vm860, %v3014, %v3015
      %v3065 = vsel %vm860, %v3013, %v3014
      %v3066 = vsel %vm860, %v3012, %v3013
      %v3067 = vsel %vm860, %v3011, %v3012
      %v3068 = vsel %vm860, %v3010, %v3011
      %v3069 = vsel %vm860, %v3009, %v3010
      %v3070 = vsel %vm860, %v3008, %v3009
      %v3071 = vsel %vm860, %v3039, %v3008
      %v3072 = vld [vmem:[#allocation2] sm:$0xff]
      %v3073 = vld [vmem:[#allocation2 + $0x8] sm:$0xff]
      %v3074 = vld [vmem:[#allocation2 + $0x10] sm:$0xff]
      %v3075 = vld [vmem:[#allocation2 + $0x18] sm:$0xff]
      %v3076 = vld [vmem:[#allocation2 + $0x20] sm:$0xff]
      %v3077 = vld [vmem:[#allocation2 + $0x28] sm:$0xff]
      %v3078 = vld [vmem:[#allocation2 + $0x30] sm:$0xff]
      %v3079 = vld [vmem:[#allocation2 + $0x38] sm:$0xff]
      %v3080 = vld [vmem:[#allocation2 + $0x40] sm:$0xff]
      %v3081 = vld [vmem:[#allocation2 + $0x48] sm:$0xff]
      %v3082 = vld [vmem:[#allocation2 + $0x50] sm:$0xff]
      %v3083 = vld [vmem:[#allocation2 + $0x58] sm:$0xff]
      %v3084 = vld [vmem:[#allocation2 + $0x60] sm:$0xff]
      %v3085 = vld [vmem:[#allocation2 + $0x68] sm:$0xff]
      %v3086 = vld [vmem:[#allocation2 + $0x70] sm:$0xff]
      %v3087 = vld [vmem:[#allocation2 + $0x78] sm:$0xff]
      %v3088 = vld [vmem:[#allocation2 + $0x80] sm:$0xff]
      %v3089 = vld [vmem:[#allocation2 + $0x88] sm:$0xff]
      %v3090 = vld [vmem:[#allocation2 + $0x90] sm:$0xff]
      %v3091 = vld [vmem:[#allocation2 + $0x98] sm:$0xff]
      %v3092 = vld [vmem:[#allocation2 + $0xa0] sm:$0xff]
      %v3093 = vld [vmem:[#allocation2 + $0xa8] sm:$0xff]
      %v3094 = vld [vmem:[#allocation2 + $0xb0] sm:$0xff]
      %v3095 = vld [vmem:[#allocation2 + $0xb8] sm:$0xff]
      %v3096 = vld [vmem:[#allocation2 + $0xc0] sm:$0xff]
      %v3097 = vld [vmem:[#allocation2 + $0xc8] sm:$0xff]
      %v3098 = vld [vmem:[#allocation2 + $0xd0] sm:$0xff]
      %v3099 = vld [vmem:[#allocation2 + $0xd8] sm:$0xff]
      %v3100 = vld [vmem:[#allocation2 + $0xe0] sm:$0xff]
      %v3101 = vld [vmem:[#allocation2 + $0xe8] sm:$0xff]
      %v3102 = vld [vmem:[#allocation2 + $0xf0] sm:$0xff]
      %v3103 = vld [vmem:[#allocation2 + $0xf8] sm:$0xff]
      %v3104 = vadd.f32 %v3072, %v3070
      %v3105 = vadd.f32 %v3073, %v3069
      %v3106 = vadd.f32 %v3074, %v3068
      %v3107 = vadd.f32 %v3075, %v3067
      %v3108 = vadd.f32 %v3076, %v3066
      %v3109 = vadd.f32 %v3077, %v3065
      %v3110 = vadd.f32 %v3078, %v3064
      %v3111 = vadd.f32 %v3079, %v3063
      %v3112 = vadd.f32 %v3080, %v3062
      %v3113 = vadd.f32 %v3081, %v3061
      %v3114 = vadd.f32 %v3082, %v3060
      %v3115 = vadd.f32 %v3083, %v3059
      %v3116 = vadd.f32 %v3084, %v3058
      %v3117 = vadd.f32 %v3085, %v3057
      %v3118 = vadd.f32 %v3086, %v3056
      %v3119 = vadd.f32 %v3087, %v3055
      %v3120 = vadd.f32 %v3088, %v3054
      %v3121 = vadd.f32 %v3089, %v3053
      %v3122 = vadd.f32 %v3090, %v3052
      %v3123 = vadd.f32 %v3091, %v3051
      %v3124 = vadd.f32 %v3092, %v3050
      %v3125 = vadd.f32 %v3093, %v3049
      %v3126 = vadd.f32 %v3094, %v3048
      %v3127 = vadd.f32 %v3095, %v3047
      %v3128 = vadd.f32 %v3096, %v3046
      %v3129 = vadd.f32 %v3097, %v3045
      %v3130 = vadd.f32 %v3098, %v3044
      %v3131 = vadd.f32 %v3099, %v3043
      %v3132 = vadd.f32 %v3100, %v3042
      %v3133 = vadd.f32 %v3101, %v3041
      %v3134 = vadd.f32 %v3102, %v3040
      %v3135 = vadd.f32 %v3103, %v3071
      %3136 = vst.msk [vmem:[#allocation2] sm:$0xff] %vm624, %v3104
      %3137 = vst.msk [vmem:[#allocation2 + $0x8] sm:$0xff] %vm624, %v3105
      %3138 = vst.msk [vmem:[#allocation2 + $0x10] sm:$0xff] %vm624, %v3106
      %3139 = vst.msk [vmem:[#allocation2 + $0x18] sm:$0xff] %vm624, %v3107
      %3140 = vst.msk [vmem:[#allocation2 + $0x20] sm:$0xff] %vm624, %v3108
      %3141 = vst.msk [vmem:[#allocation2 + $0x28] sm:$0xff] %vm624, %v3109
      %3142 = vst.msk [vmem:[#allocation2 + $0x30] sm:$0xff] %vm624, %v3110
      %3143 = vst.msk [vmem:[#allocation2 + $0x38] sm:$0xff] %vm624, %v3111
      %3144 = vst.msk [vmem:[#allocation2 + $0x40] sm:$0xff] %vm624, %v3112
      %3145 = vst.msk [vmem:[#allocation2 + $0x48] sm:$0xff] %vm624, %v3113
      %3146 = vst.msk [vmem:[#allocation2 + $0x50] sm:$0xff] %vm624, %v3114
      %3147 = vst.msk [vmem:[#allocation2 + $0x58] sm:$0xff] %vm624, %v3115
      %3148 = vst.msk [vmem:[#allocation2 + $0x60] sm:$0xff] %vm624, %v3116
      %3149 = vst.msk [vmem:[#allocation2 + $0x68] sm:$0xff] %vm624, %v3117
      %3150 = vst.msk [vmem:[#allocation2 + $0x70] sm:$0xff] %vm624, %v3118
      %3151 = vst.msk [vmem:[#allocation2 + $0x78] sm:$0xff] %vm624, %v3119
      %3152 = vst.msk [vmem:[#allocation2 + $0x80] sm:$0xff] %vm624, %v3120
      %3153 = vst.msk [vmem:[#allocation2 + $0x88] sm:$0xff] %vm624, %v3121
      %3154 = vst.msk [vmem:[#allocation2 + $0x90] sm:$0xff] %vm624, %v3122
      %3155 = vst.msk [vmem:[#allocation2 + $0x98] sm:$0xff] %vm624, %v3123
      %3156 = vst.msk [vmem:[#allocation2 + $0xa0] sm:$0xff] %vm624, %v3124
      %3157 = vst.msk [vmem:[#allocation2 + $0xa8] sm:$0xff] %vm624, %v3125
      %3158 = vst.msk [vmem:[#allocation2 + $0xb0] sm:$0xff] %vm624, %v3126
      %3159 = vst.msk [vmem:[#allocation2 + $0xb8] sm:$0xff] %vm624, %v3127
      %3160 = vst.msk [vmem:[#allocation2 + $0xc0] sm:$0xff] %vm624, %v3128
      %3161 = vst.msk [vmem:[#allocation2 + $0xc8] sm:$0xff] %vm624, %v3129
      %3162 = vst.msk [vmem:[#allocation2 + $0xd0] sm:$0xff] %vm624, %v3130
      %3163 = vst.msk [vmem:[#allocation2 + $0xd8] sm:$0xff] %vm624, %v3131
      %3164 = vst.msk [vmem:[#allocation2 + $0xe0] sm:$0xff] %vm624, %v3132
      %3165 = vst.msk [vmem:[#allocation2 + $0xe8] sm:$0xff] %vm624, %v3133
      %3166 = vst.msk [vmem:[#allocation2 + $0xf0] sm:$0xff] %vm624, %v3134
      %3167 = vst.msk [vmem:[#allocation2 + $0xf8] sm:$0xff] %vm624, %v3135
      %s3168 = scalar_lea.vmem %s3, 16
      %v3169 = vld [vmem:[%s3168] sm:$0x3]
      %v3170 = vunpack.c.l.bf16 %v3169
      %v3171 = vmul.f32 %v3170, %v326
      %v3172 = vpack.c.bf16 %v3171, %v3171
      %v3174 = vsel %vm459, %v3172, 0
      %3176 = vmatprep.subr.bf16.mxu0 0
      %3177 = vmatpush1.bf16.msra.mxu0 0
      %3178 = vmatprep.subr.bf16.mxu0 0
      %3179 = vmatpush1.bf16.msra.mxu0 0
      %3180 = vmatprep.subr.bf16.mxu0 0
      %3181 = vmatpush1.bf16.msra.mxu0 0
      %3182 = vmatprep.subr.bf16.mxu0 0
      %3183 = vmatpush1.bf16.msra.mxu0 0
      %3184 = vmatprep.subr.bf16.mxu0 0
      %3185 = vmatpush1.bf16.msra.mxu0 0
      %3186 = vmatprep.subr.bf16.mxu0 0
      %3187 = vmatpush1.bf16.msra.mxu0 0
      %3188 = vmatprep.subr.bf16.mxu0 0
      %3189 = vmatpush1.bf16.msra.mxu0 0
      %3190 = vmatprep.subr.bf16.mxu0 0
      %3191 = vmatpush1.bf16.msra.mxu0 %v3174
      %3192 = vmatprep.subr.bf16.mxu0 0
      %3193 = vmatpush2.bf16.msra.mxu0 0
      %3194 = vmatprep.subr.bf16.mxu0 0
      %3195 = vmatpush2.bf16.msra.mxu0 0
      %3196 = vmatprep.subr.bf16.mxu0 0
      %3197 = vmatpush2.bf16.msra.mxu0 0
      %3198 = vmatprep.subr.bf16.mxu0 0
      %3199 = vmatpush2.bf16.msra.mxu0 0
      %3200 = vmatprep.subr.bf16.mxu0 0
      %3201 = vmatpush2.bf16.msra.mxu0 0
      %3202 = vmatprep.subr.bf16.mxu0 0
      %3203 = vmatpush2.bf16.msra.mxu0 0
      %3204 = vmatprep.subr.bf16.mxu0 0
      %3205 = vmatpush2.bf16.msra.mxu0 0
      %3206 = vmatprep.subr.bf16.mxu0 0
      %3207 = vmatpush2.bf16.msra.mxu0 0
      %3208 = vmatprep.mubr.bf16.mxu0 0
      %3209 = vmatmul.mubr.bf16.gmra.mxu0 %v2532
      %v3210 = vpop.f32.mrf.mxu0
      %v3211 = vadd.f32 0.0, %v3210
      %v3212 = vpop.f32.mrf.mxu0
      %v3213 = vpop.f32.mrf.mxu0
      %v3214 = vadd.f32 0.0, %v3213
      %v3215 = vpop.f32.mrf.mxu0
      %3216 = vmatprep.mubr.bf16.mxu0 0
      %3217 = vmatmul.mubr.bf16.gmra.mxu0 %v2535
      %v3218 = vpop.f32.mrf.mxu0
      %v3219 = vadd.f32 0.0, %v3218
      %v3220 = vpop.f32.mrf.mxu0
      %v3221 = vpop.f32.mrf.mxu0
      %v3222 = vadd.f32 0.0, %v3221
      %v3223 = vpop.f32.mrf.mxu0
      %3224 = vmatprep.mubr.bf16.mxu0 0
      %3225 = vmatmul.mubr.bf16.gmra.mxu0 %v2538
      %v3226 = vpop.f32.mrf.mxu0
      %v3227 = vadd.f32 0.0, %v3226
      %v3228 = vpop.f32.mrf.mxu0
      %v3229 = vpop.f32.mrf.mxu0
      %v3230 = vadd.f32 0.0, %v3229
      %v3231 = vpop.f32.mrf.mxu0
      %3232 = vmatprep.mubr.bf16.mxu0 0
      %3233 = vmatmul.mubr.bf16.gmra.mxu0 %v2541
      %v3234 = vpop.f32.mrf.mxu0
      %v3235 = vadd.f32 0.0, %v3234
      %v3236 = vpop.f32.mrf.mxu0
      %v3237 = vpop.f32.mrf.mxu0
      %v3238 = vadd.f32 0.0, %v3237
      %v3239 = vpop.f32.mrf.mxu0
      %3240 = vmatprep.mubr.bf16.mxu0 0
      %3241 = vmatmul.mubr.bf16.gmra.mxu0 %v2544
      %v3242 = vpop.f32.mrf.mxu0
      %v3243 = vadd.f32 0.0, %v3242
      %v3244 = vpop.f32.mrf.mxu0
      %v3245 = vpop.f32.mrf.mxu0
      %v3246 = vadd.f32 0.0, %v3245
      %v3247 = vpop.f32.mrf.mxu0
      %3248 = vmatprep.mubr.bf16.mxu0 0
      %3249 = vmatmul.mubr.bf16.gmra.mxu0 %v2547
      %v3250 = vpop.f32.mrf.mxu0
      %v3251 = vadd.f32 0.0, %v3250
      %v3252 = vpop.f32.mrf.mxu0
      %v3253 = vpop.f32.mrf.mxu0
      %v3254 = vadd.f32 0.0, %v3253
      %v3255 = vpop.f32.mrf.mxu0
      %3256 = vmatprep.mubr.bf16.mxu0 0
      %3257 = vmatmul.mubr.bf16.gmra.mxu0 %v2550
      %v3258 = vpop.f32.mrf.mxu0
      %v3259 = vadd.f32 0.0, %v3258
      %v3260 = vpop.f32.mrf.mxu0
      %v3261 = vpop.f32.mrf.mxu0
      %v3262 = vadd.f32 0.0, %v3261
      %v3263 = vpop.f32.mrf.mxu0
      %3264 = vmatprep.mubr.bf16.mxu0 0
      %3265 = vmatmul.mubr.bf16.gmra.mxu0 %v2553
      %v3266 = vpop.f32.mrf.mxu0
      %v3267 = vadd.f32 0.0, %v3266
      %v3268 = vpop.f32.mrf.mxu0
      %v3269 = vpop.f32.mrf.mxu0
      %v3270 = vadd.f32 0.0, %v3269
      %v3271 = vpop.f32.mrf.mxu0
      %3272 = vmatprep.mubr.bf16.mxu0 0
      %3273 = vmatmul.mubr.bf16.gmra.mxu0 %v2556
      %v3274 = vpop.f32.mrf.mxu0
      %v3275 = vadd.f32 0.0, %v3274
      %v3276 = vpop.f32.mrf.mxu0
      %v3277 = vpop.f32.mrf.mxu0
      %v3278 = vadd.f32 0.0, %v3277
      %v3279 = vpop.f32.mrf.mxu0
      %3280 = vmatprep.mubr.bf16.mxu0 0
      %3281 = vmatmul.mubr.bf16.gmra.mxu0 %v2559
      %v3282 = vpop.f32.mrf.mxu0
      %v3283 = vadd.f32 0.0, %v3282
      %v3284 = vpop.f32.mrf.mxu0
      %v3285 = vpop.f32.mrf.mxu0
      %v3286 = vadd.f32 0.0, %v3285
      %v3287 = vpop.f32.mrf.mxu0
      %3288 = vmatprep.mubr.bf16.mxu0 0
      %3289 = vmatmul.mubr.bf16.gmra.mxu0 %v2562
      %v3290 = vpop.f32.mrf.mxu0
      %v3291 = vadd.f32 0.0, %v3290
      %v3292 = vpop.f32.mrf.mxu0
      %v3293 = vpop.f32.mrf.mxu0
      %v3294 = vadd.f32 0.0, %v3293
      %v3295 = vpop.f32.mrf.mxu0
      %3296 = vmatprep.mubr.bf16.mxu0 0
      %3297 = vmatmul.mubr.bf16.gmra.mxu0 %v2565
      %v3298 = vpop.f32.mrf.mxu0
      %v3299 = vadd.f32 0.0, %v3298
      %v3300 = vpop.f32.mrf.mxu0
      %v3301 = vpop.f32.mrf.mxu0
      %v3302 = vadd.f32 0.0, %v3301
      %v3303 = vpop.f32.mrf.mxu0
      %3304 = vmatprep.mubr.bf16.mxu0 0
      %3305 = vmatmul.mubr.bf16.gmra.mxu0 %v2568
      %v3306 = vpop.f32.mrf.mxu0
      %v3307 = vadd.f32 0.0, %v3306
      %v3308 = vpop.f32.mrf.mxu0
      %v3309 = vpop.f32.mrf.mxu0
      %v3310 = vadd.f32 0.0, %v3309
      %v3311 = vpop.f32.mrf.mxu0
      %3312 = vmatprep.mubr.bf16.mxu0 0
      %3313 = vmatmul.mubr.bf16.gmra.mxu0 %v2571
      %v3314 = vpop.f32.mrf.mxu0
      %v3315 = vadd.f32 0.0, %v3314
      %v3316 = vpop.f32.mrf.mxu0
      %v3317 = vpop.f32.mrf.mxu0
      %v3318 = vadd.f32 0.0, %v3317
      %v3319 = vpop.f32.mrf.mxu0
      %3320 = vmatprep.mubr.bf16.mxu0 0
      %3321 = vmatmul.mubr.bf16.gmra.mxu0 %v2574
      %v3322 = vpop.f32.mrf.mxu0
      %v3323 = vadd.f32 0.0, %v3322
      %v3324 = vpop.f32.mrf.mxu0
      %v3325 = vpop.f32.mrf.mxu0
      %v3326 = vadd.f32 0.0, %v3325
      %v3327 = vpop.f32.mrf.mxu0
      %3328 = vmatprep.mubr.bf16.mxu0 0
      %3329 = vmatmul.mubr.bf16.gmra.mxu0 %v2577
      %v3330 = vpop.f32.mrf.mxu0
      %v3331 = vadd.f32 0.0, %v3330
      %v3332 = vpop.f32.mrf.mxu0
      %v3333 = vpop.f32.mrf.mxu0
      %v3334 = vadd.f32 0.0, %v3333
      %v3335 = vpop.f32.mrf.mxu0
      %3336 = vdwg.mxu0
      %v3337 = vrot.slane %v3211, 2
      %v3338 = vrot.slane %v3214, 2
      %v3339 = vrot.slane %v3219, 2
      %v3340 = vrot.slane %v3222, 2
      %v3341 = vrot.slane %v3227, 2
      %v3342 = vrot.slane %v3230, 2
      %v3343 = vrot.slane %v3235, 2
      %v3344 = vrot.slane %v3238, 2
      %v3345 = vrot.slane %v3243, 2
      %v3346 = vrot.slane %v3246, 2
      %v3347 = vrot.slane %v3251, 2
      %v3348 = vrot.slane %v3254, 2
      %v3349 = vrot.slane %v3259, 2
      %v3350 = vrot.slane %v3262, 2
      %v3351 = vrot.slane %v3267, 2
      %v3352 = vrot.slane %v3270, 2
      %v3353 = vrot.slane %v3275, 2
      %v3354 = vrot.slane %v3278, 2
      %v3355 = vrot.slane %v3283, 2
      %v3356 = vrot.slane %v3286, 2
      %v3357 = vrot.slane %v3291, 2
      %v3358 = vrot.slane %v3294, 2
      %v3359 = vrot.slane %v3299, 2
      %v3360 = vrot.slane %v3302, 2
      %v3361 = vrot.slane %v3307, 2
      %v3362 = vrot.slane %v3310, 2
      %v3363 = vrot.slane %v3315, 2
      %v3364 = vrot.slane %v3318, 2
      %v3365 = vrot.slane %v3323, 2
      %v3366 = vrot.slane %v3326, 2
      %v3367 = vrot.slane %v3331, 2
      %v3368 = vrot.slane %v3334, 2
      %v3369 = vsel %vm1190, %v3367, %v3368
      %v3370 = vsel %vm1190, %v3366, %v3367
      %v3371 = vsel %vm1190, %v3365, %v3366
      %v3372 = vsel %vm1190, %v3364, %v3365
      %v3373 = vsel %vm1190, %v3363, %v3364
      %v3374 = vsel %vm1190, %v3362, %v3363
      %v3375 = vsel %vm1190, %v3361, %v3362
      %v3376 = vsel %vm1190, %v3360, %v3361
      %v3377 = vsel %vm1190, %v3359, %v3360
      %v3378 = vsel %vm1190, %v3358, %v3359
      %v3379 = vsel %vm1190, %v3357, %v3358
      %v3380 = vsel %vm1190, %v3356, %v3357
      %v3381 = vsel %vm1190, %v3355, %v3356
      %v3382 = vsel %vm1190, %v3354, %v3355
      %v3383 = vsel %vm1190, %v3353, %v3354
      %v3384 = vsel %vm1190, %v3352, %v3353
      %v3385 = vsel %vm1190, %v3351, %v3352
      %v3386 = vsel %vm1190, %v3350, %v3351
      %v3387 = vsel %vm1190, %v3349, %v3350
      %v3388 = vsel %vm1190, %v3348, %v3349
      %v3389 = vsel %vm1190, %v3347, %v3348
      %v3390 = vsel %vm1190, %v3346, %v3347
      %v3391 = vsel %vm1190, %v3345, %v3346
      %v3392 = vsel %vm1190, %v3344, %v3345
      %v3393 = vsel %vm1190, %v3343, %v3344
      %v3394 = vsel %vm1190, %v3342, %v3343
      %v3395 = vsel %vm1190, %v3341, %v3342
      %v3396 = vsel %vm1190, %v3340, %v3341
      %v3397 = vsel %vm1190, %v3339, %v3340
      %v3398 = vsel %vm1190, %v3338, %v3339
      %v3399 = vsel %vm1190, %v3337, %v3338
      %v3400 = vsel %vm1190, %v3368, %v3337
      %v3401 = vld [vmem:[#allocation2] sm:$0xff]
      %v3402 = vld [vmem:[#allocation2 + $0x8] sm:$0xff]
      %v3403 = vld [vmem:[#allocation2 + $0x10] sm:$0xff]
      %v3404 = vld [vmem:[#allocation2 + $0x18] sm:$0xff]
      %v3405 = vld [vmem:[#allocation2 + $0x20] sm:$0xff]
      %v3406 = vld [vmem:[#allocation2 + $0x28] sm:$0xff]
      %v3407 = vld [vmem:[#allocation2 + $0x30] sm:$0xff]
      %v3408 = vld [vmem:[#allocation2 + $0x38] sm:$0xff]
      %v3409 = vld [vmem:[#allocation2 + $0x40] sm:$0xff]
      %v3410 = vld [vmem:[#allocation2 + $0x48] sm:$0xff]
      %v3411 = vld [vmem:[#allocation2 + $0x50] sm:$0xff]
      %v3412 = vld [vmem:[#allocation2 + $0x58] sm:$0xff]
      %v3413 = vld [vmem:[#allocation2 + $0x60] sm:$0xff]
      %v3414 = vld [vmem:[#allocation2 + $0x68] sm:$0xff]
      %v3415 = vld [vmem:[#allocation2 + $0x70] sm:$0xff]
      %v3416 = vld [vmem:[#allocation2 + $0x78] sm:$0xff]
      %v3417 = vld [vmem:[#allocation2 + $0x80] sm:$0xff]
      %v3418 = vld [vmem:[#allocation2 + $0x88] sm:$0xff]
      %v3419 = vld [vmem:[#allocation2 + $0x90] sm:$0xff]
      %v3420 = vld [vmem:[#allocation2 + $0x98] sm:$0xff]
      %v3421 = vld [vmem:[#allocation2 + $0xa0] sm:$0xff]
      %v3422 = vld [vmem:[#allocation2 + $0xa8] sm:$0xff]
      %v3423 = vld [vmem:[#allocation2 + $0xb0] sm:$0xff]
      %v3424 = vld [vmem:[#allocation2 + $0xb8] sm:$0xff]
      %v3425 = vld [vmem:[#allocation2 + $0xc0] sm:$0xff]
      %v3426 = vld [vmem:[#allocation2 + $0xc8] sm:$0xff]
      %v3427 = vld [vmem:[#allocation2 + $0xd0] sm:$0xff]
      %v3428 = vld [vmem:[#allocation2 + $0xd8] sm:$0xff]
      %v3429 = vld [vmem:[#allocation2 + $0xe0] sm:$0xff]
      %v3430 = vld [vmem:[#allocation2 + $0xe8] sm:$0xff]
      %v3431 = vld [vmem:[#allocation2 + $0xf0] sm:$0xff]
      %v3432 = vld [vmem:[#allocation2 + $0xf8] sm:$0xff]
      %v3433 = vadd.f32 %v3401, %v3399
      %v3434 = vadd.f32 %v3402, %v3398
      %v3435 = vadd.f32 %v3403, %v3397
      %v3436 = vadd.f32 %v3404, %v3396
      %v3437 = vadd.f32 %v3405, %v3395
      %v3438 = vadd.f32 %v3406, %v3394
      %v3439 = vadd.f32 %v3407, %v3393
      %v3440 = vadd.f32 %v3408, %v3392
      %v3441 = vadd.f32 %v3409, %v3391
      %v3442 = vadd.f32 %v3410, %v3390
      %v3443 = vadd.f32 %v3411, %v3389
      %v3444 = vadd.f32 %v3412, %v3388
      %v3445 = vadd.f32 %v3413, %v3387
      %v3446 = vadd.f32 %v3414, %v3386
      %v3447 = vadd.f32 %v3415, %v3385
      %v3448 = vadd.f32 %v3416, %v3384
      %v3449 = vadd.f32 %v3417, %v3383
      %v3450 = vadd.f32 %v3418, %v3382
      %v3451 = vadd.f32 %v3419, %v3381
      %v3452 = vadd.f32 %v3420, %v3380
      %v3453 = vadd.f32 %v3421, %v3379
      %v3454 = vadd.f32 %v3422, %v3378
      %v3455 = vadd.f32 %v3423, %v3377
      %v3456 = vadd.f32 %v3424, %v3376
      %v3457 = vadd.f32 %v3425, %v3375
      %v3458 = vadd.f32 %v3426, %v3374
      %v3459 = vadd.f32 %v3427, %v3373
      %v3460 = vadd.f32 %v3428, %v3372
      %v3461 = vadd.f32 %v3429, %v3371
      %v3462 = vadd.f32 %v3430, %v3370
      %v3463 = vadd.f32 %v3431, %v3369
      %v3464 = vadd.f32 %v3432, %v3400
      %3465 = vst.msk [vmem:[#allocation2] sm:$0xff] %vm624, %v3433
      %3466 = vst.msk [vmem:[#allocation2 + $0x8] sm:$0xff] %vm624, %v3434
      %3467 = vst.msk [vmem:[#allocation2 + $0x10] sm:$0xff] %vm624, %v3435
      %3468 = vst.msk [vmem:[#allocation2 + $0x18] sm:$0xff] %vm624, %v3436
      %3469 = vst.msk [vmem:[#allocation2 + $0x20] sm:$0xff] %vm624, %v3437
      %3470 = vst.msk [vmem:[#allocation2 + $0x28] sm:$0xff] %vm624, %v3438
      %3471 = vst.msk [vmem:[#allocation2 + $0x30] sm:$0xff] %vm624, %v3439
      %3472 = vst.msk [vmem:[#allocation2 + $0x38] sm:$0xff] %vm624, %v3440
      %3473 = vst.msk [vmem:[#allocation2 + $0x40] sm:$0xff] %vm624, %v3441
      %3474 = vst.msk [vmem:[#allocation2 + $0x48] sm:$0xff] %vm624, %v3442
      %3475 = vst.msk [vmem:[#allocation2 + $0x50] sm:$0xff] %vm624, %v3443
      %3476 = vst.msk [vmem:[#allocation2 + $0x58] sm:$0xff] %vm624, %v3444
      %3477 = vst.msk [vmem:[#allocation2 + $0x60] sm:$0xff] %vm624, %v3445
      %3478 = vst.msk [vmem:[#allocation2 + $0x68] sm:$0xff] %vm624, %v3446
      %3479 = vst.msk [vmem:[#allocation2 + $0x70] sm:$0xff] %vm624, %v3447
      %3480 = vst.msk [vmem:[#allocation2 + $0x78] sm:$0xff] %vm624, %v3448
      %3481 = vst.msk [vmem:[#allocation2 + $0x80] sm:$0xff] %vm624, %v3449
      %3482 = vst.msk [vmem:[#allocation2 + $0x88] sm:$0xff] %vm624, %v3450
      %3483 = vst.msk [vmem:[#allocation2 + $0x90] sm:$0xff] %vm624, %v3451
      %3484 = vst.msk [vmem:[#allocation2 + $0x98] sm:$0xff] %vm624, %v3452
      %3485 = vst.msk [vmem:[#allocation2 + $0xa0] sm:$0xff] %vm624, %v3453
      %3486 = vst.msk [vmem:[#allocation2 + $0xa8] sm:$0xff] %vm624, %v3454
      %3487 = vst.msk [vmem:[#allocation2 + $0xb0] sm:$0xff] %vm624, %v3455
      %3488 = vst.msk [vmem:[#allocation2 + $0xb8] sm:$0xff] %vm624, %v3456
      %3489 = vst.msk [vmem:[#allocation2 + $0xc0] sm:$0xff] %vm624, %v3457
      %3490 = vst.msk [vmem:[#allocation2 + $0xc8] sm:$0xff] %vm624, %v3458
      %3491 = vst.msk [vmem:[#allocation2 + $0xd0] sm:$0xff] %vm624, %v3459
      %3492 = vst.msk [vmem:[#allocation2 + $0xd8] sm:$0xff] %vm624, %v3460
      %3493 = vst.msk [vmem:[#allocation2 + $0xe0] sm:$0xff] %vm624, %v3461
      %3494 = vst.msk [vmem:[#allocation2 + $0xe8] sm:$0xff] %vm624, %v3462
      %3495 = vst.msk [vmem:[#allocation2 + $0xf0] sm:$0xff] %vm624, %v3463
      %3496 = vst.msk [vmem:[#allocation2 + $0xf8] sm:$0xff] %vm624, %v3464
      %v3497 = vld [vmem:[#allocation2] sm:$0xff]
      %v3498 = vld [vmem:[#allocation2 + $0x8] sm:$0xff]
      %v3499 = vld [vmem:[#allocation2 + $0x20] sm:$0xff]
      %v3500 = vld [vmem:[#allocation2 + $0x28] sm:$0xff]
      %v3501 = vld [vmem:[#allocation2 + $0x40] sm:$0xff]
      %v3502 = vld [vmem:[#allocation2 + $0x48] sm:$0xff]
      %v3503 = vld [vmem:[#allocation2 + $0x60] sm:$0xff]
      %v3504 = vld [vmem:[#allocation2 + $0x68] sm:$0xff]
      %v3505 = vld [vmem:[#allocation2 + $0x80] sm:$0xff]
      %v3506 = vld [vmem:[#allocation2 + $0x88] sm:$0xff]
      %v3507 = vld [vmem:[#allocation2 + $0xa0] sm:$0xff]
      %v3508 = vld [vmem:[#allocation2 + $0xa8] sm:$0xff]
      %v3509 = vld [vmem:[#allocation2 + $0xc0] sm:$0xff]
      %v3510 = vld [vmem:[#allocation2 + $0xc8] sm:$0xff]
      %v3511 = vld [vmem:[#allocation2 + $0xe0] sm:$0xff]
      %v3512 = vld [vmem:[#allocation2 + $0xe8] sm:$0xff]
      %v3513 = vld [vmem:[%s264] sm:$0x1]
      %v3515 = vlaneseq
      %v3516 = vshrl.u32 %v3515, 7
      %v3517 = vsub.s32 0, %v3516
      %v3518 = vrot.slane %v3513, %v3517
      %v3520 = vmul.f32 %v3497, %v3518
      %v3521 = vmul.f32 %v3498, %v3518
      %v3522 = vmul.f32 %v3499, %v3518
      %v3523 = vmul.f32 %v3500, %v3518
      %v3524 = vmul.f32 %v3501, %v3518
      %v3525 = vmul.f32 %v3502, %v3518
      %v3526 = vmul.f32 %v3503, %v3518
      %v3527 = vmul.f32 %v3504, %v3518
      %v3528 = vmul.f32 %v3505, %v3518
      %v3529 = vmul.f32 %v3506, %v3518
      %v3530 = vmul.f32 %v3507, %v3518
      %v3531 = vmul.f32 %v3508, %v3518
      %v3532 = vmul.f32 %v3509, %v3518
      %v3533 = vmul.f32 %v3510, %v3518
      %v3534 = vmul.f32 %v3511, %v3518
      %v3535 = vmul.f32 %v3512, %v3518
      %v3536 = vld [vmem:[%s4] sm:$0x1]
      %v3538 = vlaneseq
      %v3539 = vshrl.u32 %v3538, 7
      %v3540 = vsub.s32 0, %v3539
      %v3541 = vrot.slane %v3536, %v3540
      %v3543 = vadd.f32 %v3520, %v3541
      %v3544 = vadd.f32 %v3521, %v3541
      %v3545 = vadd.f32 %v3522, %v3541
      %v3546 = vadd.f32 %v3523, %v3541
      %v3547 = vadd.f32 %v3524, %v3541
      %v3548 = vadd.f32 %v3525, %v3541
      %v3549 = vadd.f32 %v3526, %v3541
      %v3550 = vadd.f32 %v3527, %v3541
      %v3551 = vadd.f32 %v3528, %v3541
      %v3552 = vadd.f32 %v3529, %v3541
      %v3553 = vadd.f32 %v3530, %v3541
      %v3554 = vadd.f32 %v3531, %v3541
      %v3555 = vadd.f32 %v3532, %v3541
      %v3556 = vadd.f32 %v3533, %v3541
      %v3557 = vadd.f32 %v3534, %v3541
      %v3558 = vadd.f32 %v3535, %v3541
      %v3559 = vmul.f32 %v3543, 0.2
      %v3560 = vmul.f32 %v3544, 0.2
      %v3561 = vmul.f32 %v3545, 0.2
      %v3562 = vmul.f32 %v3546, 0.2
      %v3563 = vmul.f32 %v3547, 0.2
      %v3564 = vmul.f32 %v3548, 0.2
      %v3565 = vmul.f32 %v3549, 0.2
      %v3566 = vmul.f32 %v3550, 0.2
      %v3567 = vmul.f32 %v3551, 0.2
      %v3568 = vmul.f32 %v3552, 0.2
      %v3569 = vmul.f32 %v3553, 0.2
      %v3570 = vmul.f32 %v3554, 0.2
      %v3571 = vmul.f32 %v3555, 0.2
      %v3572 = vmul.f32 %v3556, 0.2
      %v3573 = vmul.f32 %v3557, 0.2
      %v3574 = vmul.f32 %v3558, 0.2
      %v3575 = vmax.f32 %v3543, %v3559
      %v3576 = vmax.f32 %v3544, %v3560
      %v3577 = vmax.f32 %v3545, %v3561
      %v3578 = vmax.f32 %v3546, %v3562
      %v3579 = vmax.f32 %v3547, %v3563
      %v3580 = vmax.f32 %v3548, %v3564
      %v3581 = vmax.f32 %v3549, %v3565
      %v3582 = vmax.f32 %v3550, %v3566
      %v3583 = vmax.f32 %v3551, %v3567
      %v3584 = vmax.f32 %v3552, %v3568
      %v3585 = vmax.f32 %v3553, %v3569
      %v3586 = vmax.f32 %v3554, %v3570
      %v3587 = vmax.f32 %v3555, %v3571
      %v3588 = vmax.f32 %v3556, %v3572
      %v3589 = vmax.f32 %v3557, %v3573
      %v3590 = vmax.f32 %v3558, %v3574
      %v3591 = vmul.f32 %v3575, 1.4142135
      %v3592 = vmul.f32 %v3576, 1.4142135
      %v3593 = vmul.f32 %v3577, 1.4142135
      %v3594 = vmul.f32 %v3578, 1.4142135
      %v3595 = vmul.f32 %v3579, 1.4142135
      %v3596 = vmul.f32 %v3580, 1.4142135
      %v3597 = vmul.f32 %v3581, 1.4142135
      %v3598 = vmul.f32 %v3582, 1.4142135
      %v3599 = vmul.f32 %v3583, 1.4142135
      %v3600 = vmul.f32 %v3584, 1.4142135
      %v3601 = vmul.f32 %v3585, 1.4142135
      %v3602 = vmul.f32 %v3586, 1.4142135
      %v3603 = vmul.f32 %v3587, 1.4142135
      %v3604 = vmul.f32 %v3588, 1.4142135
      %v3605 = vmul.f32 %v3589, 1.4142135
      %v3606 = vmul.f32 %v3590, 1.4142135
      %3607 = vst.msk [vmem:[%s279] sm:$0xff] %vm624, %v3591
      %3608 = vst.msk [vmem:[%s279 + $0x8] sm:$0xff] %vm624, %v3592
      %3609 = vst.msk [vmem:[%s279 + $0x10] sm:$0xff] %vm624, %v3593
      %3610 = vst.msk [vmem:[%s279 + $0x18] sm:$0xff] %vm624, %v3594
      %3611 = vst.msk [vmem:[%s279 + $0x20] sm:$0xff] %vm624, %v3595
      %3612 = vst.msk [vmem:[%s279 + $0x28] sm:$0xff] %vm624, %v3596
      %3613 = vst.msk [vmem:[%s279 + $0x30] sm:$0xff] %vm624, %v3597
      %3614 = vst.msk [vmem:[%s279 + $0x38] sm:$0xff] %vm624, %v3598
      %3615 = vst.msk [vmem:[%s279 + $0x40] sm:$0xff] %vm624, %v3599
      %3616 = vst.msk [vmem:[%s279 + $0x48] sm:$0xff] %vm624, %v3600
      %3617 = vst.msk [vmem:[%s279 + $0x50] sm:$0xff] %vm624, %v3601
      %3618 = vst.msk [vmem:[%s279 + $0x58] sm:$0xff] %vm624, %v3602
      %3619 = vst.msk [vmem:[%s279 + $0x60] sm:$0xff] %vm624, %v3603
      %3620 = vst.msk [vmem:[%s279 + $0x68] sm:$0xff] %vm624, %v3604
      %3621 = vst.msk [vmem:[%s279 + $0x70] sm:$0xff] %vm624, %v3605
      %3622 = vst.msk [vmem:[%s279 + $0x78] sm:$0xff] %vm624, %v3606
      %s3623 = smul.u32 8, %s21
      %p3624 = scmp.lt.s32.totalorder %s20, 1
      %s3625 = scalar_select %p3624, %s20, 1
      %p3626 = scmp.lt.s32.totalorder %s3623, 15
      %s3627 = scalar_select %p3626, %s3623, 15
      %s3628 = smul.addr %s3627, 2
      %s3629 = smul.addr %s3625, 32
      %s3630 = sadd.s32 %s3628, %s3629
      %s3631 = smul.addr %s3630, 8
      %s3632 = scalar_lea.vmem %s5, %s3631
      // Predicated region
      $region41: #{styled_conv_forward.1} parent=39 // pred_check
        %p3633 = pneg %p168
      $region42: #{styled_conv_forward.1} parent=39 // pred_check_branch
        %3635 = sbr.rel (%p3633) target = $region44
      $region43: #{styled_conv_forward.1} parent=39 // pred_region
        %s3636 = smul.u32 8, %s21
      $region44: #{styled_conv_forward.1} parent=39 // pred_fallthru
        _
    $region40: #{styled_conv_forward.1} parent=5 // pred_fallthru
      _
    %p3637 = scmp.le.s32.totalorder 2, %s11
    // Predicated region
    $region45: #{styled_conv_forward.1} parent=5 // pred_check
      %p3638 = pneg %p3637
    $region46: #{styled_conv_forward.1} parent=5 // pred_check_branch
      %3640 = sbr.rel (%p3638) target = $region48
    $region47: #{styled_conv_forward.1} parent=5 // pred_region
      %s3641 = ssub.s32 %s11, 2
      // Predicated region
      $region49: #{styled_conv_forward.1} parent=47 // pred_check
        %p3642 = pneg %p174
      $region50: #{styled_conv_forward.1} parent=47 // pred_check_branch
        %3644 = sbr.rel (%p3642) target = $region52
      $region51: #{styled_conv_forward.1} parent=47 // pred_region
        %s3645 = smul.u32 8, %s23
        %p3646 = scmp.lt.s32.totalorder %s22, 1
        %s3647 = scalar_select %p3646, %s22, 1
        %p3648 = scmp.lt.s32.totalorder %s3645, 15
        %s3649 = scalar_select %p3648, %s3645, 15
        %s3650 = smul.addr %s3649, 2
        %s3651 = smul.addr %s3647, 32
        %s3652 = sadd.s32 %s3650, %s3651
        %s3653 = smul.addr %s3652, 8
        %s3654 = scalar_lea.vmem %s5, %s3653
      $region52: #{styled_conv_forward.1} parent=47 // pred_fallthru
        _
    $region48: #{styled_conv_forward.1} parent=5 // pred_fallthru
      _
  $region6: #{styled_conv_forward.1} parent=0 // loop_footer
    %s15 = sadd.s32 1, %s11
  $region7: #{styled_conv_forward.1} parent=0 // loop_footer_branch
    %10 = sbr.rel target = $region3
  $region8: #{styled_conv_forward.1} parent=0 // loop_exit
    _

</llo_original>
